<compile_context>
chip_gen: v7x
topology: tpu7x:2x2x1
jax: 0.10.0
libtpu: 0.0.40
codegen_flags: <defaults>
</compile_context>

<pallas_src>
import math

import jax
import jax.numpy as jnp
from jax import lax
from jax.experimental import pallas as pl
from jax.experimental.pallas import tpu as pltpu

_BN_EPS = 1e-5
_VMEM = pl.BlockSpec(memory_space=pltpu.MemorySpace.VMEM)


# ---------------------------------------------------------------------------
# In-kernel helpers
# ---------------------------------------------------------------------------

def _bn_train(h, gamma, beta):
    """Training-mode BatchNorm over the row dim (rows = N*H*W), f32 math."""
    mean = jnp.mean(h, axis=0, keepdims=True)
    var = jnp.mean(jnp.square(h - mean), axis=0, keepdims=True)
    inv = lax.rsqrt(var + _BN_EPS)
    return (h - mean) * inv * gamma + beta


# ---------------------------------------------------------------------------
# Kernel 1: conv_reduce (1x1) + bn_reduce + ReLU, fully fused
# ---------------------------------------------------------------------------

def _reduce_kernel(x_ref, w_ref, g_ref, b_ref, o_ref):
    h = jnp.dot(x_ref[...], w_ref[...], preferred_element_type=jnp.float32)
    h = _bn_train(h, g_ref[...], b_ref[...])
    o_ref[...] = jnp.maximum(h, 0.0).astype(o_ref.dtype)


def conv_reduce_bn_relu(x_flat, w, gamma, beta):
    m = x_flat.shape[0]
    d = w.shape[1]
    return pl.pallas_call(
        _reduce_kernel,
        out_shape=jax.ShapeDtypeStruct((m, d), jnp.bfloat16),
        in_specs=[_VMEM, _VMEM, _VMEM, _VMEM],
        out_specs=_VMEM,
    )(x_flat, w, gamma, beta)


# ---------------------------------------------------------------------------
# Kernel 2: grouped 3x3 conv (block-diag dot) + bn + ReLU + conv_expand +
#           bn_expand + shortcut (conv+BN or identity) + add + ReLU
# ---------------------------------------------------------------------------

def _tail_kernel_proj(taps_ref, wbd_ref, g2_ref, b2_ref,
                      w3_ref, g3_ref, b3_ref,
                      xs_ref, ws_ref, gs_ref, bs_ref, o_ref):
    h2 = jnp.dot(taps_ref[...], wbd_ref[...], preferred_element_type=jnp.float32)
    h2 = jnp.maximum(_bn_train(h2, g2_ref[...], b2_ref[...]), 0.0)
    h3 = jnp.dot(h2.astype(jnp.bfloat16), w3_ref[...],
                 preferred_element_type=jnp.float32)
    h3 = _bn_train(h3, g3_ref[...], b3_ref[...])
    r = jnp.dot(xs_ref[...], ws_ref[...], preferred_element_type=jnp.float32)
    r = _bn_train(r, gs_ref[...], bs_ref[...])
    o_ref[...] = jnp.maximum(h3 + r, 0.0)


def _tail_kernel_identity(taps_ref, wbd_ref, g2_ref, b2_ref,
                          w3_ref, g3_ref, b3_ref, xs_ref, o_ref):
    h2 = jnp.dot(taps_ref[...], wbd_ref[...], preferred_element_type=jnp.float32)
    h2 = jnp.maximum(_bn_train(h2, g2_ref[...], b2_ref[...]), 0.0)
    h3 = jnp.dot(h2.astype(jnp.bfloat16), w3_ref[...],
                 preferred_element_type=jnp.float32)
    h3 = _bn_train(h3, g3_ref[...], b3_ref[...])
    r = xs_ref[...].astype(jnp.float32)
    o_ref[...] = jnp.maximum(h3 + r, 0.0)


# ---------------------------------------------------------------------------
# Parameters (deterministic; layouts chosen for the kernels above)
# ---------------------------------------------------------------------------

def init_params(key, in_channels, out_channels, cardinality, widen_factor):
    D = cardinality * out_channels // widen_factor
    Dg = D // cardinality
    k1, k2, k3, k4 = jax.random.split(key, 4)

    def he(k, shape, fan_in):
        return jax.random.normal(k, shape, jnp.float32) * math.sqrt(2.0 / fan_in)

    p = {}
    p["w_reduce"] = he(k1, (in_channels, D), in_channels).astype(jnp.bfloat16)
    p["bn_reduce_g"] = jnp.ones((1, D), jnp.float32)
    p["bn_reduce_b"] = jnp.zeros((1, D), jnp.float32)

    # Grouped 3x3 conv -> block-diagonal (9*D, D) weight (taps folded into K).
    # wg[g, t, ci, co] : per-group weight for tap t = dy*3 + dx.
    wg = he(k2, (cardinality, 9, Dg, Dg), 9 * Dg)
    blocks = jnp.zeros((9, D, D), jnp.float32)
    for g in range(cardinality):
        sl = slice(g * Dg, (g + 1) * Dg)
        blocks = blocks.at[:, sl, sl].set(wg[g])
    p["w_conv_bd"] = blocks.reshape(9 * D, D).astype(jnp.bfloat16)
    p["bn_g"] = jnp.ones((1, D), jnp.float32)
    p["bn_b"] = jnp.zeros((1, D), jnp.float32)

    p["w_expand"] = he(k3, (D, out_channels), D).astype(jnp.bfloat16)
    p["bn_expand_g"] = jnp.ones((1, out_channels), jnp.float32)
    p["bn_expand_b"] = jnp.zeros((1, out_channels), jnp.float32)

    if in_channels != out_channels:
        p["w_short"] = he(k4, (in_channels, out_channels), in_channels).astype(jnp.bfloat16)
        p["bn_short_g"] = jnp.ones((1, out_channels), jnp.float32)
        p["bn_short_b"] = jnp.zeros((1, out_channels), jnp.float32)
    return p


# ---------------------------------------------------------------------------
# Forward
# ---------------------------------------------------------------------------

def resnext_bottleneck_forward(params, x_nchw, *, stride):
    x = jnp.transpose(x_nchw, (0, 2, 3, 1)).astype(jnp.bfloat16)      # NCHW -> NHWC
    n, h, w, cin = x.shape
    D = params["w_reduce"].shape[1]
    cout = params["w_expand"].shape[1]
    s = stride
    ho = (h - 1) // s + 1
    wo = (w - 1) // s + 1

    # --- K1: conv_reduce + bn_reduce + ReLU (fused) ---
    h1 = conv_reduce_bn_relu(x.reshape(n * h * w, cin),
                             params["w_reduce"],
                             params["bn_reduce_g"], params["bn_reduce_b"])
    h1 = h1.reshape(n, h, w, D)

    # im2col of h1 on the *strided* output grid: 9 taps folded into K (XLA glue,
    # cheap data movement; the dot itself is a single lane-dense MXU matmul).
    hp = jnp.pad(h1, ((0, 0), (1, 1), (1, 1), (0, 0)))
    taps = [hp[:, dy::s, dx::s, :][:, :ho, :wo, :]
            for dy in range(3) for dx in range(3)]
    taps = jnp.stack(taps, axis=-2).reshape(n * ho * wo, 9 * D)        # (M2, 9*D) bf16

    has_proj = "w_short" in params
    if has_proj:
        xs = x[:, ::s, ::s, :].reshape(n * ho * wo, cin)
        out = pl.pallas_call(
            _tail_kernel_proj,
            out_shape=jax.ShapeDtypeStruct((n * ho * wo, cout), jnp.float32),
            in_specs=[_VMEM] * 11,
            out_specs=_VMEM,
        )(taps, params["w_conv_bd"], params["bn_g"], params["bn_b"],
          params["w_expand"], params["bn_expand_g"], params["bn_expand_b"],
          xs, params["w_short"], params["bn_short_g"], params["bn_short_b"])
    else:
        xs = x[:, ::s, ::s, :].reshape(n * ho * wo, cout)
        out = pl.pallas_call(
            _tail_kernel_identity,
            out_shape=jax.ShapeDtypeStruct((n * ho * wo, cout), jnp.float32),
            in_specs=[_VMEM] * 8,
            out_specs=_VMEM,
        )(taps, params["w_conv_bd"], params["bn_g"], params["bn_b"],
          params["w_expand"], params["bn_expand_g"], params["bn_expand_b"], xs)

    out = out.reshape(n, ho, wo, cout)
    return jnp.transpose(out, (0, 3, 1, 2))                           # NHWC -> NCHW


# ---------------------------------------------------------------------------

if __name__ == "__main__":
    key = jax.random.PRNGKey(0)
    pkey, xkey = jax.random.split(key)

    # Small ResNeXt-29-style config: exercises the full path (grouped stride-2
    # 3x3 conv + projection shortcut).  D = 8*128//4 = 256, Dg = 32.
    in_channels, out_channels = 64, 128
    stride, cardinality, widen_factor = 2, 8, 4

    params = init_params(pkey, in_channels, out_channels, cardinality, widen_factor)
    x = jax.random.normal(xkey, (2, in_channels, 16, 16), jnp.float32)   # NCHW

    fwd = jax.jit(lambda p, inp: resnext_bottleneck_forward(p, inp, stride=stride))
    y = fwd(params, x)
    jax.block_until_ready(y)

    assert y.shape == (2, out_channels, 16 // stride, 16 // stride), y.shape
    assert bool(jnp.all(jnp.isfinite(y)))
    assert bool(jnp.all(y >= 0.0))   # final ReLU
    print("KERNEL_OK")
</pallas_src>

<mosaic_0001>
module attributes {stable_mosaic.version = 11 : i64} {
  func.func @_reduce_kernel(%arg0: memref<512x64xbf16, #tpu.memory_space<vmem>>, %arg1: memref<64x256xbf16, #tpu.memory_space<vmem>>, %arg2: memref<1x256xf32, #tpu.memory_space<vmem>>, %arg3: memref<1x256xf32, #tpu.memory_space<vmem>>, %arg4: memref<512x256xbf16, #tpu.memory_space<vmem>>) attributes {dimension_semantics = [], scalar_prefetch = 0 : i64, scratch_operands = 0 : i64, tpu.core_type = #tpu.core_type<tc>} {
    %c0 = arith.constant 0 : index
    %c0_0 = arith.constant 0 : index
    %0 = vector.load %arg0[%c0, %c0_0] : memref<512x64xbf16, #tpu.memory_space<vmem>>, vector<512x64xbf16>
    %c0_1 = arith.constant 0 : index
    %c0_2 = arith.constant 0 : index
    %1 = vector.load %arg1[%c0_1, %c0_2] : memref<64x256xbf16, #tpu.memory_space<vmem>>, vector<64x256xbf16>
    %cst = arith.constant dense<0.000000e+00> : vector<512x256xf32>
    %2 = tpu.matmul %0, %1, %cst {dimension_numbers = #tpu.dot_dimension_numbers<[1], [0], [0], [1], [0, 0, 1, 1], [], []>} : vector<512x64xbf16>, vector<64x256xbf16>, vector<512x256xf32> -> vector<512x256xf32>
    %c0_3 = arith.constant 0 : index
    %c0_4 = arith.constant 0 : index
    %3 = vector.load %arg2[%c0_3, %c0_4] : memref<1x256xf32, #tpu.memory_space<vmem>>, vector<1x256xf32>
    %c0_5 = arith.constant 0 : index
    %c0_6 = arith.constant 0 : index
    %4 = vector.load %arg3[%c0_5, %c0_6] : memref<1x256xf32, #tpu.memory_space<vmem>>, vector<1x256xf32>
    %cst_7 = arith.constant dense<0.000000e+00> : vector<256xf32>
    %5 = vector.multi_reduction <add>, %2, %cst_7 [0] : vector<512x256xf32> to vector<256xf32>
    %6 = vector.shape_cast %5 : vector<256xf32> to vector<1x256xf32>
    %cst_8 = arith.constant 5.120000e+02 : f32
    %7 = vector.broadcast %cst_8 : f32 to vector<1x256xf32>
    %8 = arith.divf %6, %7 : vector<1x256xf32>
    %9 = vector.broadcast %8 : vector<1x256xf32> to vector<512x256xf32>
    %10 = arith.subf %2, %9 : vector<512x256xf32>
    %11 = arith.mulf %10, %10 : vector<512x256xf32>
    %cst_9 = arith.constant dense<0.000000e+00> : vector<256xf32>
    %12 = vector.multi_reduction <add>, %11, %cst_9 [0] : vector<512x256xf32> to vector<256xf32>
    %13 = vector.shape_cast %12 : vector<256xf32> to vector<1x256xf32>
    %cst_10 = arith.constant 5.120000e+02 : f32
    %14 = vector.broadcast %cst_10 : f32 to vector<1x256xf32>
    %15 = arith.divf %13, %14 : vector<1x256xf32>
    %cst_11 = arith.constant 9.99999974E-6 : f32
    %16 = vector.broadcast %cst_11 : f32 to vector<1x256xf32>
    %17 = arith.addf %15, %16 : vector<1x256xf32>
    %18 = math.rsqrt %17 : vector<1x256xf32>
    %19 = vector.broadcast %8 : vector<1x256xf32> to vector<512x256xf32>
    %20 = arith.subf %2, %19 : vector<512x256xf32>
    %21 = vector.broadcast %18 : vector<1x256xf32> to vector<512x256xf32>
    %22 = arith.mulf %20, %21 : vector<512x256xf32>
    %23 = vector.broadcast %3 : vector<1x256xf32> to vector<512x256xf32>
    %24 = arith.mulf %22, %23 : vector<512x256xf32>
    %25 = vector.broadcast %4 : vector<1x256xf32> to vector<512x256xf32>
    %26 = arith.addf %24, %25 : vector<512x256xf32>
    %cst_12 = arith.constant 0.000000e+00 : f32
    %27 = vector.broadcast %cst_12 : f32 to vector<512x256xf32>
    %28 = arith.maximumf %26, %27 : vector<512x256xf32>
    %29 = arith.truncf %28 : vector<512x256xf32> to vector<512x256xbf16>
    %c0_13 = arith.constant 0 : index
    %c0_14 = arith.constant 0 : index
    %30 = vector.load %arg4[%c0_13, %c0_14] : memref<512x256xbf16, #tpu.memory_space<vmem>>, vector<512x256xbf16>
    tpu.vector_store %arg4[%c0_13, %c0_14], %29 {strides = array<i32>} : memref<512x256xbf16, #tpu.memory_space<vmem>>, vector<512x256xbf16>,
    return
  }
}

module attributes {stable_mosaic.version = 11 : i64} {
  func.func @_tail_kernel_proj(%arg0: memref<128x2304xbf16, #tpu.memory_space<vmem>>, %arg1: memref<2304x256xbf16, #tpu.memory_space<vmem>>, %arg2: memref<1x256xf32, #tpu.memory_space<vmem>>, %arg3: memref<1x256xf32, #tpu.memory_space<vmem>>, %arg4: memref<256x128xbf16, #tpu.memory_space<vmem>>, %arg5: memref<1x128xf32, #tpu.memory_space<vmem>>, %arg6: memref<1x128xf32, #tpu.memory_space<vmem>>, %arg7: memref<128x64xbf16, #tpu.memory_space<vmem>>, %arg8: memref<64x128xbf16, #tpu.memory_space<vmem>>, %arg9: memref<1x128xf32, #tpu.memory_space<vmem>>, %arg10: memref<1x128xf32, #tpu.memory_space<vmem>>, %arg11: memref<128x128xf32, #tpu.memory_space<vmem>>) attributes {dimension_semantics = [], scalar_prefetch = 0 : i64, scratch_operands = 0 : i64, tpu.core_type = #tpu.core_type<tc>} {
    %c0 = arith.constant 0 : index
    %c0_0 = arith.constant 0 : index
    %0 = vector.load %arg0[%c0, %c0_0] : memref<128x2304xbf16, #tpu.memory_space<vmem>>, vector<128x2304xbf16>
    %c0_1 = arith.constant 0 : index
    %c0_2 = arith.constant 0 : index
    %1 = vector.load %arg1[%c0_1, %c0_2] : memref<2304x256xbf16, #tpu.memory_space<vmem>>, vector<2304x256xbf16>
    %cst = arith.constant dense<0.000000e+00> : vector<128x256xf32>
    %2 = tpu.matmul %0, %1, %cst {dimension_numbers = #tpu.dot_dimension_numbers<[1], [0], [0], [1], [0, 0, 1, 1], [], []>} : vector<128x2304xbf16>, vector<2304x256xbf16>, vector<128x256xf32> -> vector<128x256xf32>
    %c0_3 = arith.constant 0 : index
    %c0_4 = arith.constant 0 : index
    %3 = vector.load %arg2[%c0_3, %c0_4] : memref<1x256xf32, #tpu.memory_space<vmem>>, vector<1x256xf32>
    %c0_5 = arith.constant 0 : index
    %c0_6 = arith.constant 0 : index
    %4 = vector.load %arg3[%c0_5, %c0_6] : memref<1x256xf32, #tpu.memory_space<vmem>>, vector<1x256xf32>
    %cst_7 = arith.constant dense<0.000000e+00> : vector<256xf32>
    %5 = vector.multi_reduction <add>, %2, %cst_7 [0] : vector<128x256xf32> to vector<256xf32>
    %6 = vector.shape_cast %5 : vector<256xf32> to vector<1x256xf32>
    %cst_8 = arith.constant 1.280000e+02 : f32
    %7 = vector.broadcast %cst_8 : f32 to vector<1x256xf32>
    %8 = arith.divf %6, %7 : vector<1x256xf32>
    %9 = vector.broadcast %8 : vector<1x256xf32> to vector<128x256xf32>
    %10 = arith.subf %2, %9 : vector<128x256xf32>
    %11 = arith.mulf %10, %10 : vector<128x256xf32>
    %cst_9 = arith.constant dense<0.000000e+00> : vector<256xf32>
    %12 = vector.multi_reduction <add>, %11, %cst_9 [0] : vector<128x256xf32> to vector<256xf32>
    %13 = vector.shape_cast %12 : vector<256xf32> to vector<1x256xf32>
    %cst_10 = arith.constant 1.280000e+02 : f32
    %14 = vector.broadcast %cst_10 : f32 to vector<1x256xf32>
    %15 = arith.divf %13, %14 : vector<1x256xf32>
    %cst_11 = arith.constant 9.99999974E-6 : f32
    %16 = vector.broadcast %cst_11 : f32 to vector<1x256xf32>
    %17 = arith.addf %15, %16 : vector<1x256xf32>
    %18 = math.rsqrt %17 : vector<1x256xf32>
    %19 = vector.broadcast %8 : vector<1x256xf32> to vector<128x256xf32>
    %20 = arith.subf %2, %19 : vector<128x256xf32>
    %21 = vector.broadcast %18 : vector<1x256xf32> to vector<128x256xf32>
    %22 = arith.mulf %20, %21 : vector<128x256xf32>
    %23 = vector.broadcast %3 : vector<1x256xf32> to vector<128x256xf32>
    %24 = arith.mulf %22, %23 : vector<128x256xf32>
    %25 = vector.broadcast %4 : vector<1x256xf32> to vector<128x256xf32>
    %26 = arith.addf %24, %25 : vector<128x256xf32>
    %cst_12 = arith.constant 0.000000e+00 : f32
    %27 = vector.broadcast %cst_12 : f32 to vector<128x256xf32>
    %28 = arith.maximumf %26, %27 : vector<128x256xf32>
    %29 = arith.truncf %28 : vector<128x256xf32> to vector<128x256xbf16>
    %c0_13 = arith.constant 0 : index
    %c0_14 = arith.constant 0 : index
    %30 = vector.load %arg4[%c0_13, %c0_14] : memref<256x128xbf16, #tpu.memory_space<vmem>>, vector<256x128xbf16>
    %cst_15 = arith.constant dense<0.000000e+00> : vector<128x128xf32>
    %31 = tpu.matmul %29, %30, %cst_15 {dimension_numbers = #tpu.dot_dimension_numbers<[1], [0], [0], [1], [0, 0, 1, 1], [], []>} : vector<128x256xbf16>, vector<256x128xbf16>, vector<128x128xf32> -> vector<128x128xf32>
    %c0_16 = arith.constant 0 : index
    %c0_17 = arith.constant 0 : index
    %32 = vector.load %arg5[%c0_16, %c0_17] : memref<1x128xf32, #tpu.memory_space<vmem>>, vector<1x128xf32>
    %c0_18 = arith.constant 0 : index
    %c0_19 = arith.constant 0 : index
    %33 = vector.load %arg6[%c0_18, %c0_19] : memref<1x128xf32, #tpu.memory_space<vmem>>, vector<1x128xf32>
    %cst_20 = arith.constant dense<0.000000e+00> : vector<128xf32>
    %34 = vector.multi_reduction <add>, %31, %cst_20 [0] : vector<128x128xf32> to vector<128xf32>
    %35 = vector.shape_cast %34 : vector<128xf32> to vector<1x128xf32>
    %cst_21 = arith.constant 1.280000e+02 : f32
    %36 = vector.broadcast %cst_21 : f32 to vector<1x128xf32>
    %37 = arith.divf %35, %36 : vector<1x128xf32>
    %38 = vector.broadcast %37 : vector<1x128xf32> to vector<128x128xf32>
    %39 = arith.subf %31, %38 : vector<128x128xf32>
    %40 = arith.mulf %39, %39 : vector<128x128xf32>
    %cst_22 = arith.constant dense<0.000000e+00> : vector<128xf32>
    %41 = vector.multi_reduction <add>, %40, %cst_22 [0] : vector<128x128xf32> to vector<128xf32>
    %42 = vector.shape_cast %41 : vector<128xf32> to vector<1x128xf32>
    %cst_23 = arith.constant 1.280000e+02 : f32
    %43 = vector.broadcast %cst_23 : f32 to vector<1x128xf32>
    %44 = arith.divf %42, %43 : vector<1x128xf32>
    %cst_24 = arith.constant 9.99999974E-6 : f32
    %45 = vector.broadcast %cst_24 : f32 to vector<1x128xf32>
    %46 = arith.addf %44, %45 : vector<1x128xf32>
    %47 = math.rsqrt %46 : vector<1x128xf32>
    %48 = vector.broadcast %37 : vector<1x128xf32> to vector<128x128xf32>
    %49 = arith.subf %31, %48 : vector<128x128xf32>
    %50 = vector.broadcast %47 : vector<1x128xf32> to vector<128x128xf32>
    %51 = arith.mulf %49, %50 : vector<128x128xf32>
    %52 = vector.broadcast %32 : vector<1x128xf32> to vector<128x128xf32>
    %53 = arith.mulf %51, %52 : vector<128x128xf32>
    %54 = vector.broadcast %33 : vector<1x128xf32> to vector<128x128xf32>
    %55 = arith.addf %53, %54 : vector<128x128xf32>
    %c0_25 = arith.constant 0 : index
    %c0_26 = arith.constant 0 : index
    %56 = vector.load %arg7[%c0_25, %c0_26] : memref<128x64xbf16, #tpu.memory_space<vmem>>, vector<128x64xbf16>
    %c0_27 = arith.constant 0 : index
    %c0_28 = arith.constant 0 : index
    %57 = vector.load %arg8[%c0_27, %c0_28] : memref<64x128xbf16, #tpu.memory_space<vmem>>, vector<64x128xbf16>
    %cst_29 = arith.constant dense<0.000000e+00> : vector<128x128xf32>
    %58 = tpu.matmul %56, %57, %cst_29 {dimension_numbers = #tpu.dot_dimension_numbers<[1], [0], [0], [1], [0, 0, 1, 1], [], []>} : vector<128x64xbf16>, vector<64x128xbf16>, vector<128x128xf32> -> vector<128x128xf32>
    %c0_30 = arith.constant 0 : index
    %c0_31 = arith.constant 0 : index
    %59 = vector.load %arg9[%c0_30, %c0_31] : memref<1x128xf32, #tpu.memory_space<vmem>>, vector<1x128xf32>
    %c0_32 = arith.constant 0 : index
    %c0_33 = arith.constant 0 : index
    %60 = vector.load %arg10[%c0_32, %c0_33] : memref<1x128xf32, #tpu.memory_space<vmem>>, vector<1x128xf32>
    %cst_34 = arith.constant dense<0.000000e+00> : vector<128xf32>
    %61 = vector.multi_reduction <add>, %58, %cst_34 [0] : vector<128x128xf32> to vector<128xf32>
    %62 = vector.shape_cast %61 : vector<128xf32> to vector<1x128xf32>
    %cst_35 = arith.constant 1.280000e+02 : f32
    %63 = vector.broadcast %cst_35 : f32 to vector<1x128xf32>
    %64 = arith.divf %62, %63 : vector<1x128xf32>
    %65 = vector.broadcast %64 : vector<1x128xf32> to vector<128x128xf32>
    %66 = arith.subf %58, %65 : vector<128x128xf32>
    %67 = arith.mulf %66, %66 : vector<128x128xf32>
    %cst_36 = arith.constant dense<0.000000e+00> : vector<128xf32>
    %68 = vector.multi_reduction <add>, %67, %cst_36 [0] : vector<128x128xf32> to vector<128xf32>
    %69 = vector.shape_cast %68 : vector<128xf32> to vector<1x128xf32>
    %cst_37 = arith.constant 1.280000e+02 : f32
    %70 = vector.broadcast %cst_37 : f32 to vector<1x128xf32>
    %71 = arith.divf %69, %70 : vector<1x128xf32>
    %cst_38 = arith.constant 9.99999974E-6 : f32
    %72 = vector.broadcast %cst_38 : f32 to vector<1x128xf32>
    %73 = arith.addf %71, %72 : vector<1x128xf32>
    %74 = math.rsqrt %73 : vector<1x128xf32>
    %75 = vector.broadcast %64 : vector<1x128xf32> to vector<128x128xf32>
    %76 = arith.subf %58, %75 : vector<128x128xf32>
    %77 = vector.broadcast %74 : vector<1x128xf32> to vector<128x128xf32>
    %78 = arith.mulf %76, %77 : vector<128x128xf32>
    %79 = vector.broadcast %59 : vector<1x128xf32> to vector<128x128xf32>
    %80 = arith.mulf %78, %79 : vector<128x128xf32>
    %81 = vector.broadcast %60 : vector<1x128xf32> to vector<128x128xf32>
    %82 = arith.addf %80, %81 : vector<128x128xf32>
    %83 = arith.addf %55, %82 : vector<128x128xf32>
    %cst_39 = arith.constant 0.000000e+00 : f32
    %84 = vector.broadcast %cst_39 : f32 to vector<128x128xf32>
    %85 = arith.maximumf %83, %84 : vector<128x128xf32>
    %c0_40 = arith.constant 0 : index
    %c0_41 = arith.constant 0 : index
    %86 = vector.load %arg11[%c0_40, %c0_41] : memref<128x128xf32, #tpu.memory_space<vmem>>, vector<128x128xf32>
    tpu.vector_store %arg11[%c0_40, %c0_41], %85 {strides = array<i32>} : memref<128x128xf32, #tpu.memory_space<vmem>>, vector<128x128xf32>,
    return
  }
}

</mosaic_0001>

<llo_original>
// kernel: _lambda_.2
$region0: #{_lambda_.2}
  #allocation0 [shape = 'u32[]', space=smem, size = 0x4, offset = 0x4, fixed_abs, tag = 'smem constant byte address 0x4 - core index']
  #allocation1 [shape = 'u32[144,128]{1,0:T(1,128)}', space=vmem, size = 0x12000, scoped, tag = 'internal scratch']
  %s0 = inlined_call_operand.vmem [shape: bf16[512,64], index: 0, kind: input, shape index: {}]
  %s1 = inlined_call_operand.hbm [shape: bf16[64,256], index: 1, kind: input, shape index: {}]
  %s2 = inlined_call_operand.hbm [shape: f32[1,256], index: 2, kind: input, shape index: {}]
  %s3 = inlined_call_operand.hbm [shape: f32[1,256], index: 3, kind: input, shape index: {}]
  %s4 = inlined_call_operand.vmem [shape: bf16[512,256], index: 4, kind: output, shape index: {}]
  %s5 = sld [smem:[#allocation0]]
  $region38: #{_lambda_.2} parent=0
    _
  %s7 = ssub.s32 1, %s5
  %s8 = scalar_select 0, %s7, %s5
  $region1: #{_lambda_.2} parent=0
    #allocation2 [shape = 'u8[32768]{0}', space=vmem, size = 0x8000, scoped, tag = 'input window, operand 1, single buffered']
    #allocation3 [shape = 's32[1]{0}', space=sflag, size = 0x4, scoped, tag = 'scoped memory for _lambda_.2']
    #allocation4 [shape = 'u8[1024]{0}', space=vmem, size = 0x400, scoped, tag = 'input window, operand 2, single buffered']
    #allocation5 [shape = 's32[1]{0}', space=sflag, size = 0x4, scoped, tag = 'scoped memory for _lambda_.2']
    #allocation6 [shape = 'u8[1024]{0}', space=vmem, size = 0x400, scoped, tag = 'input window, operand 3, single buffered']
    %9 = vsyncpa [#allocation3], 0
    %10 = vsyncpa [#allocation5], 0
    // Predicated region
    $region2: #{_lambda_.2} parent=1 // pred_check
      _
    $region3: #{_lambda_.2} parent=1 // pred_check_branch
      %12 = sbr.rel (0) target = $region5
    $region4: #{_lambda_.2} parent=1 // pred_region
      _
    $region5: #{_lambda_.2} parent=1 // pred_fallthru
      _
    // Predicated region
    $region6: #{_lambda_.2} parent=1 // pred_check
      _
    $region7: #{_lambda_.2} parent=1 // pred_check_branch
      %14 = sbr.rel (0) target = $region9
    $region8: #{_lambda_.2} parent=1 // pred_region
      %s16 = ssub.s32 1024, 1024
      %17 = vsyncadd [#allocation3], %s16
      %s18 = sshll.u32 [#allocation2], 4
      %s19 = int_to_ptr.vmem [resolvable:$true] %s18
      %24 = dma.hbm_to_vmem [thread:$0]  %s1, 1024, %s19, [#allocation3], 128, 128, 8
    $region9: #{_lambda_.2} parent=1 // pred_fallthru
      _
    // Predicated region
    $region10: #{_lambda_.2} parent=1 // pred_check
      _
    $region11: #{_lambda_.2} parent=1 // pred_check_branch
      %26 = sbr.rel (0) target = $region13
    $region12: #{_lambda_.2} parent=1 // pred_region
      %s28 = ssub.s32 32, 32
      %29 = vsyncadd [#allocation5], %s28
      %s31 = sshll.u32 [#allocation4], 4
      %s32 = int_to_ptr.vmem [resolvable:$true] %s31
      %34 = dma.hbm_to_vmem [thread:$0]  %s2, 32, %s32, [#allocation5]
    $region13: #{_lambda_.2} parent=1 // pred_fallthru
      _
    // Predicated region
    $region14: #{_lambda_.2} parent=1 // pred_check
      _
    $region15: #{_lambda_.2} parent=1 // pred_check_branch
      %36 = sbr.rel (0) target = $region17
    $region16: #{_lambda_.2} parent=1 // pred_region
      %s38 = ssub.s32 32, 32
      %39 = vsyncadd [#allocation5], %s38
      %s41 = sshll.u32 [#allocation6], 4
      %s42 = int_to_ptr.vmem [resolvable:$true] %s41
      %44 = dma.hbm_to_vmem [thread:$0]  %s3, 32, %s42, [#allocation5]
    $region17: #{_lambda_.2} parent=1 // pred_fallthru
      _
    // Predicated region
    $region18: #{_lambda_.2} parent=1 // pred_check
      _
    $region19: #{_lambda_.2} parent=1 // pred_check_branch
      %46 = sbr.rel (0) target = $region21
    $region20: #{_lambda_.2} parent=1 // pred_region
      %47 = dma.done [#allocation3], 1024
    $region21: #{_lambda_.2} parent=1 // pred_fallthru
      _
    // Predicated region
    $region22: #{_lambda_.2} parent=1 // pred_check
      _
    $region23: #{_lambda_.2} parent=1 // pred_check_branch
      %49 = sbr.rel (0) target = $region25
    $region24: #{_lambda_.2} parent=1 // pred_region
      %50 = dma.done [#allocation5], 32
    $region25: #{_lambda_.2} parent=1 // pred_fallthru
      _
    // Predicated region
    $region26: #{_lambda_.2} parent=1 // pred_check
      _
    $region27: #{_lambda_.2} parent=1 // pred_check_branch
      %52 = sbr.rel (0) target = $region29
    $region28: #{_lambda_.2} parent=1 // pred_region
      %53 = dma.done [#allocation5], 32
    $region29: #{_lambda_.2} parent=1 // pred_fallthru
      _
    %v55 = vld [vmem:[%s0] sm:$0xf]
    %v56 = vld [vmem:[%s0 + $0x4] sm:$0xf]
    %v57 = vld [vmem:[%s0 + $0x8] sm:$0xf]
    %v58 = vld [vmem:[%s0 + $0xc] sm:$0xf]
    %v59 = vld [vmem:[%s0 + $0x10] sm:$0xf]
    %v60 = vld [vmem:[%s0 + $0x14] sm:$0xf]
    %v61 = vld [vmem:[%s0 + $0x18] sm:$0xf]
    %v62 = vld [vmem:[%s0 + $0x1c] sm:$0xf]
    %v63 = vld [vmem:[%s0 + $0x20] sm:$0xf]
    %v64 = vld [vmem:[%s0 + $0x24] sm:$0xf]
    %v65 = vld [vmem:[%s0 + $0x28] sm:$0xf]
    %v66 = vld [vmem:[%s0 + $0x2c] sm:$0xf]
    %v67 = vld [vmem:[%s0 + $0x30] sm:$0xf]
    %v68 = vld [vmem:[%s0 + $0x34] sm:$0xf]
    %v69 = vld [vmem:[%s0 + $0x38] sm:$0xf]
    %v70 = vld [vmem:[%s0 + $0x3c] sm:$0xf]
    %v71 = vld [vmem:[%s0 + $0x40] sm:$0xf]
    %v72 = vld [vmem:[%s0 + $0x44] sm:$0xf]
    %v73 = vld [vmem:[%s0 + $0x48] sm:$0xf]
    %v74 = vld [vmem:[%s0 + $0x4c] sm:$0xf]
    %v75 = vld [vmem:[%s0 + $0x50] sm:$0xf]
    %v76 = vld [vmem:[%s0 + $0x54] sm:$0xf]
    %v77 = vld [vmem:[%s0 + $0x58] sm:$0xf]
    %v78 = vld [vmem:[%s0 + $0x5c] sm:$0xf]
    %v79 = vld [vmem:[%s0 + $0x60] sm:$0xf]
    %v80 = vld [vmem:[%s0 + $0x64] sm:$0xf]
    %v81 = vld [vmem:[%s0 + $0x68] sm:$0xf]
    %v82 = vld [vmem:[%s0 + $0x6c] sm:$0xf]
    %v83 = vld [vmem:[%s0 + $0x70] sm:$0xf]
    %v84 = vld [vmem:[%s0 + $0x74] sm:$0xf]
    %v85 = vld [vmem:[%s0 + $0x78] sm:$0xf]
    %v86 = vld [vmem:[%s0 + $0x7c] sm:$0xf]
    %v87 = vld [vmem:[%s0 + $0x80] sm:$0xf]
    %v88 = vld [vmem:[%s0 + $0x84] sm:$0xf]
    %v89 = vld [vmem:[%s0 + $0x88] sm:$0xf]
    %v90 = vld [vmem:[%s0 + $0x8c] sm:$0xf]
    %v91 = vld [vmem:[%s0 + $0x90] sm:$0xf]
    %v92 = vld [vmem:[%s0 + $0x94] sm:$0xf]
    %v93 = vld [vmem:[%s0 + $0x98] sm:$0xf]
    %v94 = vld [vmem:[%s0 + $0x9c] sm:$0xf]
    %v95 = vld [vmem:[%s0 + $0xa0] sm:$0xf]
    %v96 = vld [vmem:[%s0 + $0xa4] sm:$0xf]
    %v97 = vld [vmem:[%s0 + $0xa8] sm:$0xf]
    %v98 = vld [vmem:[%s0 + $0xac] sm:$0xf]
    %v99 = vld [vmem:[%s0 + $0xb0] sm:$0xf]
    %v100 = vld [vmem:[%s0 + $0xb4] sm:$0xf]
    %v101 = vld [vmem:[%s0 + $0xb8] sm:$0xf]
    %v102 = vld [vmem:[%s0 + $0xbc] sm:$0xf]
    %v103 = vld [vmem:[%s0 + $0xc0] sm:$0xf]
    %v104 = vld [vmem:[%s0 + $0xc4] sm:$0xf]
    %v105 = vld [vmem:[%s0 + $0xc8] sm:$0xf]
    %v106 = vld [vmem:[%s0 + $0xcc] sm:$0xf]
    %v107 = vld [vmem:[%s0 + $0xd0] sm:$0xf]
    %v108 = vld [vmem:[%s0 + $0xd4] sm:$0xf]
    %v109 = vld [vmem:[%s0 + $0xd8] sm:$0xf]
    %v110 = vld [vmem:[%s0 + $0xdc] sm:$0xf]
    %v111 = vld [vmem:[%s0 + $0xe0] sm:$0xf]
    %v112 = vld [vmem:[%s0 + $0xe4] sm:$0xf]
    %v113 = vld [vmem:[%s0 + $0xe8] sm:$0xf]
    %v114 = vld [vmem:[%s0 + $0xec] sm:$0xf]
    %v115 = vld [vmem:[%s0 + $0xf0] sm:$0xf]
    %v116 = vld [vmem:[%s0 + $0xf4] sm:$0xf]
    %v117 = vld [vmem:[%s0 + $0xf8] sm:$0xf]
    %v118 = vld [vmem:[%s0 + $0xfc] sm:$0xf]
    %v119 = vld [vmem:[#allocation2] sm:$0xff]
    %v120 = vld [vmem:[#allocation2 + $0x8] sm:$0xff]
    %v121 = vld [vmem:[#allocation2 + $0x10] sm:$0xff]
    %v122 = vld [vmem:[#allocation2 + $0x18] sm:$0xff]
    %v123 = vld [vmem:[#allocation2 + $0x20] sm:$0xff]
    %v124 = vld [vmem:[#allocation2 + $0x28] sm:$0xff]
    %v125 = vld [vmem:[#allocation2 + $0x30] sm:$0xff]
    %v126 = vld [vmem:[#allocation2 + $0x38] sm:$0xff]
    %v191 = vunpack.c.l.b16 %v55
    %v192 = vunpack.c.l.b16 %v56
    %v193 = vunpack.c.l.b16 %v57
    %v194 = vunpack.c.l.b16 %v58
    %v195 = vunpack.c.l.b16 %v59
    %v196 = vunpack.c.l.b16 %v60
    %v197 = vunpack.c.l.b16 %v61
    %v198 = vunpack.c.l.b16 %v62
    %v199 = vunpack.c.l.b16 %v63
    %v200 = vunpack.c.l.b16 %v64
    %v201 = vunpack.c.l.b16 %v65
    %v202 = vunpack.c.l.b16 %v66
    %v203 = vunpack.c.l.b16 %v67
    %v204 = vunpack.c.l.b16 %v68
    %v205 = vunpack.c.l.b16 %v69
    %v206 = vunpack.c.l.b16 %v70
    %v207 = vunpack.c.l.b16 %v71
    %v208 = vunpack.c.l.b16 %v72
    %v209 = vunpack.c.l.b16 %v73
    %v210 = vunpack.c.l.b16 %v74
    %v211 = vunpack.c.l.b16 %v75
    %v212 = vunpack.c.l.b16 %v76
    %v213 = vunpack.c.l.b16 %v77
    %v214 = vunpack.c.l.b16 %v78
    %v215 = vunpack.c.l.b16 %v79
    %v216 = vunpack.c.l.b16 %v80
    %v217 = vunpack.c.l.b16 %v81
    %v218 = vunpack.c.l.b16 %v82
    %v219 = vunpack.c.l.b16 %v83
    %v220 = vunpack.c.l.b16 %v84
    %v221 = vunpack.c.l.b16 %v85
    %v222 = vunpack.c.l.b16 %v86
    %v223 = vunpack.c.l.b16 %v87
    %v224 = vunpack.c.l.b16 %v88
    %v225 = vunpack.c.l.b16 %v89
    %v226 = vunpack.c.l.b16 %v90
    %v227 = vunpack.c.l.b16 %v91
    %v228 = vunpack.c.l.b16 %v92
    %v229 = vunpack.c.l.b16 %v93
    %v230 = vunpack.c.l.b16 %v94
    %v231 = vunpack.c.l.b16 %v95
    %v232 = vunpack.c.l.b16 %v96
    %v233 = vunpack.c.l.b16 %v97
    %v234 = vunpack.c.l.b16 %v98
    %v235 = vunpack.c.l.b16 %v99
    %v236 = vunpack.c.l.b16 %v100
    %v237 = vunpack.c.l.b16 %v101
    %v238 = vunpack.c.l.b16 %v102
    %v239 = vunpack.c.l.b16 %v103
    %v240 = vunpack.c.l.b16 %v104
    %v241 = vunpack.c.l.b16 %v105
    %v242 = vunpack.c.l.b16 %v106
    %v243 = vunpack.c.l.b16 %v107
    %v244 = vunpack.c.l.b16 %v108
    %v245 = vunpack.c.l.b16 %v109
    %v246 = vunpack.c.l.b16 %v110
    %v247 = vunpack.c.l.b16 %v111
    %v248 = vunpack.c.l.b16 %v112
    %v249 = vunpack.c.l.b16 %v113
    %v250 = vunpack.c.l.b16 %v114
    %v251 = vunpack.c.l.b16 %v115
    %v252 = vunpack.c.l.b16 %v116
    %v253 = vunpack.c.l.b16 %v117
    %v254 = vunpack.c.l.b16 %v118
    %v255 = vpack.c.b16 %v192, %v191
    %v256 = vpack.c.b16 %v194, %v193
    %v257 = vpack.c.b16 %v196, %v195
    %v258 = vpack.c.b16 %v198, %v197
    %v259 = vpack.c.b16 %v200, %v199
    %v260 = vpack.c.b16 %v202, %v201
    %v261 = vpack.c.b16 %v204, %v203
    %v262 = vpack.c.b16 %v206, %v205
    %v263 = vpack.c.b16 %v208, %v207
    %v264 = vpack.c.b16 %v210, %v209
    %v265 = vpack.c.b16 %v212, %v211
    %v266 = vpack.c.b16 %v214, %v213
    %v267 = vpack.c.b16 %v216, %v215
    %v268 = vpack.c.b16 %v218, %v217
    %v269 = vpack.c.b16 %v220, %v219
    %v270 = vpack.c.b16 %v222, %v221
    %v271 = vpack.c.b16 %v224, %v223
    %v272 = vpack.c.b16 %v226, %v225
    %v273 = vpack.c.b16 %v228, %v227
    %v274 = vpack.c.b16 %v230, %v229
    %v275 = vpack.c.b16 %v232, %v231
    %v276 = vpack.c.b16 %v234, %v233
    %v277 = vpack.c.b16 %v236, %v235
    %v278 = vpack.c.b16 %v238, %v237
    %v279 = vpack.c.b16 %v240, %v239
    %v280 = vpack.c.b16 %v242, %v241
    %v281 = vpack.c.b16 %v244, %v243
    %v282 = vpack.c.b16 %v246, %v245
    %v283 = vpack.c.b16 %v248, %v247
    %v284 = vpack.c.b16 %v250, %v249
    %v285 = vpack.c.b16 %v252, %v251
    %v286 = vpack.c.b16 %v254, %v253
    %v295 = vunpack.c.l.b16 %v119
    %v296 = vunpack.c.h.b16 %v119
    %v297 = vunpack.c.l.b16 %v120
    %v298 = vunpack.c.h.b16 %v120
    %v299 = vunpack.c.l.b16 %v121
    %v300 = vunpack.c.h.b16 %v121
    %v301 = vunpack.c.l.b16 %v122
    %v302 = vunpack.c.h.b16 %v122
    %v303 = vunpack.c.l.b16 %v123
    %v304 = vunpack.c.h.b16 %v123
    %v305 = vunpack.c.l.b16 %v124
    %v306 = vunpack.c.h.b16 %v124
    %v307 = vunpack.c.l.b16 %v125
    %v308 = vunpack.c.h.b16 %v125
    %v309 = vunpack.c.l.b16 %v126
    %v310 = vunpack.c.h.b16 %v126
    %v311 = vpack.c.b16 %v297, %v295
    %v312 = vpack.c.b16 %v298, %v296
    %v313 = vpack.c.b16 %v301, %v299
    %v314 = vpack.c.b16 %v302, %v300
    %v315 = vpack.c.b16 %v305, %v303
    %v316 = vpack.c.b16 %v306, %v304
    %v317 = vpack.c.b16 %v309, %v307
    %v318 = vpack.c.b16 %v310, %v308
    %vm327 = vcmask 523264
    %v329 = vsel %vm327, %v255, 0
    %v332 = vsel %vm327, %v256, 0
    %v335 = vsel %vm327, %v257, 0
    %v338 = vsel %vm327, %v258, 0
    %v341 = vsel %vm327, %v259, 0
    %v344 = vsel %vm327, %v260, 0
    %v347 = vsel %vm327, %v261, 0
    %v350 = vsel %vm327, %v262, 0
    %v353 = vsel %vm327, %v263, 0
    %v356 = vsel %vm327, %v264, 0
    %v359 = vsel %vm327, %v265, 0
    %v362 = vsel %vm327, %v266, 0
    %v365 = vsel %vm327, %v267, 0
    %v368 = vsel %vm327, %v268, 0
    %v371 = vsel %vm327, %v269, 0
    %v374 = vsel %vm327, %v270, 0
    %v377 = vsel %vm327, %v271, 0
    %v380 = vsel %vm327, %v272, 0
    %v383 = vsel %vm327, %v273, 0
    %v386 = vsel %vm327, %v274, 0
    %v389 = vsel %vm327, %v275, 0
    %v392 = vsel %vm327, %v276, 0
    %v395 = vsel %vm327, %v277, 0
    %v398 = vsel %vm327, %v278, 0
    %v401 = vsel %vm327, %v279, 0
    %v404 = vsel %vm327, %v280, 0
    %v407 = vsel %vm327, %v281, 0
    %v410 = vsel %vm327, %v282, 0
    %v413 = vsel %vm327, %v283, 0
    %v416 = vsel %vm327, %v284, 0
    %v419 = vsel %vm327, %v285, 0
    %v422 = vsel %vm327, %v286, 0
    %424 = vmatprep.subr.bf16.mxu0 %v312
    %425 = vmatpush1.bf16.msra.mxu0 %v311
    %426 = vmatprep.subr.bf16.mxu0 %v314
    %427 = vmatpush1.bf16.msra.mxu0 %v313
    %428 = vmatprep.subr.bf16.mxu0 %v316
    %429 = vmatpush1.bf16.msra.mxu0 %v315
    %430 = vmatprep.subr.bf16.mxu0 %v318
    %431 = vmatpush1.bf16.msra.mxu0 %v317
    %432 = vmatprep.subr.bf16.mxu0 0
    %433 = vmatpush1.bf16.msra.mxu0 0
    %434 = vmatprep.subr.bf16.mxu0 0
    %435 = vmatpush1.bf16.msra.mxu0 0
    %436 = vmatprep.subr.bf16.mxu0 0
    %437 = vmatpush1.bf16.msra.mxu0 0
    %438 = vmatprep.subr.bf16.mxu0 0
    %439 = vmatpush1.bf16.msra.mxu0 0
    %440 = vmatprep.subr.bf16.mxu0 0
    %441 = vmatpush1.bf16.msra.mxu0 0
    %442 = vmatprep.subr.bf16.mxu0 0
    %443 = vmatpush1.bf16.msra.mxu0 0
    %444 = vmatprep.subr.bf16.mxu0 0
    %445 = vmatpush1.bf16.msra.mxu0 0
    %446 = vmatprep.subr.bf16.mxu0 0
    %447 = vmatpush1.bf16.msra.mxu0 0
    %448 = vmatprep.subr.bf16.mxu0 0
    %449 = vmatpush1.bf16.msra.mxu0 0
    %450 = vmatprep.subr.bf16.mxu0 0
    %451 = vmatpush1.bf16.msra.mxu0 0
    %452 = vmatprep.subr.bf16.mxu0 0
    %453 = vmatpush1.bf16.msra.mxu0 0
    %454 = vmatprep.subr.bf16.mxu0 0
    %455 = vmatpush1.bf16.msra.mxu0 0
    %456 = vmatprep.mubr.bf16.mxu0 0
    %457 = vmatmul.mubr.bf16.gmra.mrb[0].mxu0 %v329
    %v458 = vpop.f32.mrb[0].mxu0
    %v459 = vadd.f32 0.0, %v458
    %v460 = vpop.f32.mrb[0].mxu0
    %v461 = vadd.f32 0.0, %v460
    %v462 = vpop.f32.mrb[0].mxu0
    %v463 = vadd.f32 0.0, %v462
    %v464 = vpop.f32.mrb[0].mxu0
    %v465 = vadd.f32 0.0, %v464
    %466 = vmatprep.mubr.bf16.mxu0 0
    %467 = vmatmul.mubr.bf16.gmra.mrb[0].mxu0 %v332
    %v468 = vpop.f32.mrb[0].mxu0
    %v469 = vadd.f32 0.0, %v468
    %v470 = vpop.f32.mrb[0].mxu0
    %v471 = vadd.f32 0.0, %v470
    %v472 = vpop.f32.mrb[0].mxu0
    %v473 = vadd.f32 0.0, %v472
    %v474 = vpop.f32.mrb[0].mxu0
    %v475 = vadd.f32 0.0, %v474
    %476 = vmatprep.mubr.bf16.mxu0 0
    %477 = vmatmul.mubr.bf16.gmra.mrb[0].mxu0 %v335
    %v478 = vpop.f32.mrb[0].mxu0
    %v479 = vadd.f32 0.0, %v478
    %v480 = vpop.f32.mrb[0].mxu0
    %v481 = vadd.f32 0.0, %v480
    %v482 = vpop.f32.mrb[0].mxu0
    %v483 = vadd.f32 0.0, %v482
    %v484 = vpop.f32.mrb[0].mxu0
    %v485 = vadd.f32 0.0, %v484
    %486 = vmatprep.mubr.bf16.mxu0 0
    %487 = vmatmul.mubr.bf16.gmra.mrb[0].mxu0 %v338
    %v488 = vpop.f32.mrb[0].mxu0
    %v489 = vadd.f32 0.0, %v488
    %v490 = vpop.f32.mrb[0].mxu0
    %v491 = vadd.f32 0.0, %v490
    %v492 = vpop.f32.mrb[0].mxu0
    %v493 = vadd.f32 0.0, %v492
    %v494 = vpop.f32.mrb[0].mxu0
    %v495 = vadd.f32 0.0, %v494
    %496 = vmatprep.mubr.bf16.mxu0 0
    %497 = vmatmul.mubr.bf16.gmra.mrb[0].mxu0 %v341
    %v498 = vpop.f32.mrb[0].mxu0
    %v499 = vadd.f32 0.0, %v498
    %v500 = vpop.f32.mrb[0].mxu0
    %v501 = vadd.f32 0.0, %v500
    %v502 = vpop.f32.mrb[0].mxu0
    %v503 = vadd.f32 0.0, %v502
    %v504 = vpop.f32.mrb[0].mxu0
    %v505 = vadd.f32 0.0, %v504
    %506 = vmatprep.mubr.bf16.mxu0 0
    %507 = vmatmul.mubr.bf16.gmra.mrb[0].mxu0 %v344
    %v508 = vpop.f32.mrb[0].mxu0
    %v509 = vadd.f32 0.0, %v508
    %v510 = vpop.f32.mrb[0].mxu0
    %v511 = vadd.f32 0.0, %v510
    %v512 = vpop.f32.mrb[0].mxu0
    %v513 = vadd.f32 0.0, %v512
    %v514 = vpop.f32.mrb[0].mxu0
    %v515 = vadd.f32 0.0, %v514
    %516 = vmatprep.mubr.bf16.mxu0 0
    %517 = vmatmul.mubr.bf16.gmra.mrb[0].mxu0 %v347
    %v518 = vpop.f32.mrb[0].mxu0
    %v519 = vadd.f32 0.0, %v518
    %v520 = vpop.f32.mrb[0].mxu0
    %v521 = vadd.f32 0.0, %v520
    %v522 = vpop.f32.mrb[0].mxu0
    %v523 = vadd.f32 0.0, %v522
    %v524 = vpop.f32.mrb[0].mxu0
    %v525 = vadd.f32 0.0, %v524
    %526 = vmatprep.mubr.bf16.mxu0 0
    %527 = vmatmul.mubr.bf16.gmra.mrb[0].mxu0 %v350
    %v528 = vpop.f32.mrb[0].mxu0
    %v529 = vadd.f32 0.0, %v528
    %v530 = vpop.f32.mrb[0].mxu0
    %v531 = vadd.f32 0.0, %v530
    %v532 = vpop.f32.mrb[0].mxu0
    %v533 = vadd.f32 0.0, %v532
    %v534 = vpop.f32.mrb[0].mxu0
    %v535 = vadd.f32 0.0, %v534
    %536 = vmatprep.mubr.bf16.mxu0 0
    %537 = vmatmul.mubr.bf16.gmra.mrb[0].mxu0 %v353
    %v538 = vpop.f32.mrb[0].mxu0
    %v539 = vadd.f32 0.0, %v538
    %v540 = vpop.f32.mrb[0].mxu0
    %v541 = vadd.f32 0.0, %v540
    %v542 = vpop.f32.mrb[0].mxu0
    %v543 = vadd.f32 0.0, %v542
    %v544 = vpop.f32.mrb[0].mxu0
    %v545 = vadd.f32 0.0, %v544
    %546 = vmatprep.mubr.bf16.mxu0 0
    %547 = vmatmul.mubr.bf16.gmra.mrb[0].mxu0 %v356
    %v548 = vpop.f32.mrb[0].mxu0
    %v549 = vadd.f32 0.0, %v548
    %v550 = vpop.f32.mrb[0].mxu0
    %v551 = vadd.f32 0.0, %v550
    %v552 = vpop.f32.mrb[0].mxu0
    %v553 = vadd.f32 0.0, %v552
    %v554 = vpop.f32.mrb[0].mxu0
    %v555 = vadd.f32 0.0, %v554
    %556 = vmatprep.mubr.bf16.mxu0 0
    %557 = vmatmul.mubr.bf16.gmra.mrb[0].mxu0 %v359
    %v558 = vpop.f32.mrb[0].mxu0
    %v559 = vadd.f32 0.0, %v558
    %v560 = vpop.f32.mrb[0].mxu0
    %v561 = vadd.f32 0.0, %v560
    %v562 = vpop.f32.mrb[0].mxu0
    %v563 = vadd.f32 0.0, %v562
    %v564 = vpop.f32.mrb[0].mxu0
    %v565 = vadd.f32 0.0, %v564
    %566 = vmatprep.mubr.bf16.mxu0 0
    %567 = vmatmul.mubr.bf16.gmra.mrb[0].mxu0 %v362
    %v568 = vpop.f32.mrb[0].mxu0
    %v569 = vadd.f32 0.0, %v568
    %v570 = vpop.f32.mrb[0].mxu0
    %v571 = vadd.f32 0.0, %v570
    %v572 = vpop.f32.mrb[0].mxu0
    %v573 = vadd.f32 0.0, %v572
    %v574 = vpop.f32.mrb[0].mxu0
    %v575 = vadd.f32 0.0, %v574
    %576 = vmatprep.mubr.bf16.mxu0 0
    %577 = vmatmul.mubr.bf16.gmra.mrb[0].mxu0 %v365
    %v578 = vpop.f32.mrb[0].mxu0
    %v579 = vadd.f32 0.0, %v578
    %v580 = vpop.f32.mrb[0].mxu0
    %v581 = vadd.f32 0.0, %v580
    %v582 = vpop.f32.mrb[0].mxu0
    %v583 = vadd.f32 0.0, %v582
    %v584 = vpop.f32.mrb[0].mxu0
    %v585 = vadd.f32 0.0, %v584
    %586 = vmatprep.mubr.bf16.mxu0 0
    %587 = vmatmul.mubr.bf16.gmra.mrb[0].mxu0 %v368
    %v588 = vpop.f32.mrb[0].mxu0
    %v589 = vadd.f32 0.0, %v588
    %v590 = vpop.f32.mrb[0].mxu0
    %v591 = vadd.f32 0.0, %v590
    %v592 = vpop.f32.mrb[0].mxu0
    %v593 = vadd.f32 0.0, %v592
    %v594 = vpop.f32.mrb[0].mxu0
    %v595 = vadd.f32 0.0, %v594
    %596 = vmatprep.mubr.bf16.mxu0 0
    %597 = vmatmul.mubr.bf16.gmra.mrb[0].mxu0 %v371
    %v598 = vpop.f32.mrb[0].mxu0
    %v599 = vadd.f32 0.0, %v598
    %v600 = vpop.f32.mrb[0].mxu0
    %v601 = vadd.f32 0.0, %v600
    %v602 = vpop.f32.mrb[0].mxu0
    %v603 = vadd.f32 0.0, %v602
    %v604 = vpop.f32.mrb[0].mxu0
    %v605 = vadd.f32 0.0, %v604
    %606 = vmatprep.mubr.bf16.mxu0 0
    %607 = vmatmul.mubr.bf16.gmra.mrb[0].mxu0 %v374
    %v608 = vpop.f32.mrb[0].mxu0
    %v609 = vadd.f32 0.0, %v608
    %v610 = vpop.f32.mrb[0].mxu0
    %v611 = vadd.f32 0.0, %v610
    %v612 = vpop.f32.mrb[0].mxu0
    %v613 = vadd.f32 0.0, %v612
    %v614 = vpop.f32.mrb[0].mxu0
    %v615 = vadd.f32 0.0, %v614
    %616 = vmatprep.mubr.bf16.mxu0 0
    %617 = vmatmul.mubr.bf16.gmra.mrb[0].mxu0 %v377
    %v618 = vpop.f32.mrb[0].mxu0
    %v619 = vadd.f32 0.0, %v618
    %v620 = vpop.f32.mrb[0].mxu0
    %v621 = vadd.f32 0.0, %v620
    %v622 = vpop.f32.mrb[0].mxu0
    %v623 = vadd.f32 0.0, %v622
    %v624 = vpop.f32.mrb[0].mxu0
    %v625 = vadd.f32 0.0, %v624
    %626 = vmatprep.mubr.bf16.mxu0 0
    %627 = vmatmul.mubr.bf16.gmra.mrb[0].mxu0 %v380
    %v628 = vpop.f32.mrb[0].mxu0
    %v629 = vadd.f32 0.0, %v628
    %v630 = vpop.f32.mrb[0].mxu0
    %v631 = vadd.f32 0.0, %v630
    %v632 = vpop.f32.mrb[0].mxu0
    %v633 = vadd.f32 0.0, %v632
    %v634 = vpop.f32.mrb[0].mxu0
    %v635 = vadd.f32 0.0, %v634
    %636 = vmatprep.mubr.bf16.mxu0 0
    %637 = vmatmul.mubr.bf16.gmra.mrb[0].mxu0 %v383
    %v638 = vpop.f32.mrb[0].mxu0
    %v639 = vadd.f32 0.0, %v638
    %v640 = vpop.f32.mrb[0].mxu0
    %v641 = vadd.f32 0.0, %v640
    %v642 = vpop.f32.mrb[0].mxu0
    %v643 = vadd.f32 0.0, %v642
    %v644 = vpop.f32.mrb[0].mxu0
    %v645 = vadd.f32 0.0, %v644
    %646 = vmatprep.mubr.bf16.mxu0 0
    %647 = vmatmul.mubr.bf16.gmra.mrb[0].mxu0 %v386
    %v648 = vpop.f32.mrb[0].mxu0
    %v649 = vadd.f32 0.0, %v648
    %v650 = vpop.f32.mrb[0].mxu0
    %v651 = vadd.f32 0.0, %v650
    %v652 = vpop.f32.mrb[0].mxu0
    %v653 = vadd.f32 0.0, %v652
    %v654 = vpop.f32.mrb[0].mxu0
    %v655 = vadd.f32 0.0, %v654
    %656 = vmatprep.mubr.bf16.mxu0 0
    %657 = vmatmul.mubr.bf16.gmra.mrb[0].mxu0 %v389
    %v658 = vpop.f32.mrb[0].mxu0
    %v659 = vadd.f32 0.0, %v658
    %v660 = vpop.f32.mrb[0].mxu0
    %v661 = vadd.f32 0.0, %v660
    %v662 = vpop.f32.mrb[0].mxu0
    %v663 = vadd.f32 0.0, %v662
    %v664 = vpop.f32.mrb[0].mxu0
    %v665 = vadd.f32 0.0, %v664
    %666 = vmatprep.mubr.bf16.mxu0 0
    %667 = vmatmul.mubr.bf16.gmra.mrb[0].mxu0 %v392
    %v668 = vpop.f32.mrb[0].mxu0
    %v669 = vadd.f32 0.0, %v668
    %v670 = vpop.f32.mrb[0].mxu0
    %v671 = vadd.f32 0.0, %v670
    %v672 = vpop.f32.mrb[0].mxu0
    %v673 = vadd.f32 0.0, %v672
    %v674 = vpop.f32.mrb[0].mxu0
    %v675 = vadd.f32 0.0, %v674
    %676 = vmatprep.mubr.bf16.mxu0 0
    %677 = vmatmul.mubr.bf16.gmra.mrb[0].mxu0 %v395
    %v678 = vpop.f32.mrb[0].mxu0
    %v679 = vadd.f32 0.0, %v678
    %v680 = vpop.f32.mrb[0].mxu0
    %v681 = vadd.f32 0.0, %v680
    %v682 = vpop.f32.mrb[0].mxu0
    %v683 = vadd.f32 0.0, %v682
    %v684 = vpop.f32.mrb[0].mxu0
    %v685 = vadd.f32 0.0, %v684
    %686 = vmatprep.mubr.bf16.mxu0 0
    %687 = vmatmul.mubr.bf16.gmra.mrb[0].mxu0 %v398
    %v688 = vpop.f32.mrb[0].mxu0
    %v689 = vadd.f32 0.0, %v688
    %v690 = vpop.f32.mrb[0].mxu0
    %v691 = vadd.f32 0.0, %v690
    %v692 = vpop.f32.mrb[0].mxu0
    %v693 = vadd.f32 0.0, %v692
    %v694 = vpop.f32.mrb[0].mxu0
    %v695 = vadd.f32 0.0, %v694
    %696 = vmatprep.mubr.bf16.mxu0 0
    %697 = vmatmul.mubr.bf16.gmra.mrb[0].mxu0 %v401
    %v698 = vpop.f32.mrb[0].mxu0
    %v699 = vadd.f32 0.0, %v698
    %v700 = vpop.f32.mrb[0].mxu0
    %v701 = vadd.f32 0.0, %v700
    %v702 = vpop.f32.mrb[0].mxu0
    %v703 = vadd.f32 0.0, %v702
    %v704 = vpop.f32.mrb[0].mxu0
    %v705 = vadd.f32 0.0, %v704
    %706 = vmatprep.mubr.bf16.mxu0 0
    %707 = vmatmul.mubr.bf16.gmra.mrb[0].mxu0 %v404
    %v708 = vpop.f32.mrb[0].mxu0
    %v709 = vadd.f32 0.0, %v708
    %v710 = vpop.f32.mrb[0].mxu0
    %v711 = vadd.f32 0.0, %v710
    %v712 = vpop.f32.mrb[0].mxu0
    %v713 = vadd.f32 0.0, %v712
    %v714 = vpop.f32.mrb[0].mxu0
    %v715 = vadd.f32 0.0, %v714
    %716 = vmatprep.mubr.bf16.mxu0 0
    %717 = vmatmul.mubr.bf16.gmra.mrb[0].mxu0 %v407
    %v718 = vpop.f32.mrb[0].mxu0
    %v719 = vadd.f32 0.0, %v718
    %v720 = vpop.f32.mrb[0].mxu0
    %v721 = vadd.f32 0.0, %v720
    %v722 = vpop.f32.mrb[0].mxu0
    %v723 = vadd.f32 0.0, %v722
    %v724 = vpop.f32.mrb[0].mxu0
    %v725 = vadd.f32 0.0, %v724
    %726 = vmatprep.mubr.bf16.mxu0 0
    %727 = vmatmul.mubr.bf16.gmra.mrb[0].mxu0 %v410
    %v728 = vpop.f32.mrb[0].mxu0
    %v729 = vadd.f32 0.0, %v728
    %v730 = vpop.f32.mrb[0].mxu0
    %v731 = vadd.f32 0.0, %v730
    %v732 = vpop.f32.mrb[0].mxu0
    %v733 = vadd.f32 0.0, %v732
    %v734 = vpop.f32.mrb[0].mxu0
    %v735 = vadd.f32 0.0, %v734
    %736 = vmatprep.mubr.bf16.mxu0 0
    %737 = vmatmul.mubr.bf16.gmra.mrb[0].mxu0 %v413
    %v738 = vpop.f32.mrb[0].mxu0
    %v739 = vadd.f32 0.0, %v738
    %v740 = vpop.f32.mrb[0].mxu0
    %v741 = vadd.f32 0.0, %v740
    %v742 = vpop.f32.mrb[0].mxu0
    %v743 = vadd.f32 0.0, %v742
    %v744 = vpop.f32.mrb[0].mxu0
    %v745 = vadd.f32 0.0, %v744
    %746 = vmatprep.mubr.bf16.mxu0 0
    %747 = vmatmul.mubr.bf16.gmra.mrb[0].mxu0 %v416
    %v748 = vpop.f32.mrb[0].mxu0
    %v749 = vadd.f32 0.0, %v748
    %v750 = vpop.f32.mrb[0].mxu0
    %v751 = vadd.f32 0.0, %v750
    %v752 = vpop.f32.mrb[0].mxu0
    %v753 = vadd.f32 0.0, %v752
    %v754 = vpop.f32.mrb[0].mxu0
    %v755 = vadd.f32 0.0, %v754
    %756 = vmatprep.mubr.bf16.mxu0 0
    %757 = vmatmul.mubr.bf16.gmra.mrb[0].mxu0 %v419
    %v758 = vpop.f32.mrb[0].mxu0
    %v759 = vadd.f32 0.0, %v758
    %v760 = vpop.f32.mrb[0].mxu0
    %v761 = vadd.f32 0.0, %v760
    %v762 = vpop.f32.mrb[0].mxu0
    %v763 = vadd.f32 0.0, %v762
    %v764 = vpop.f32.mrb[0].mxu0
    %v765 = vadd.f32 0.0, %v764
    %766 = vmatprep.mubr.bf16.mxu0 0
    %767 = vmatmul.mubr.bf16.gmra.mrb[0].mxu0 %v422
    %v768 = vpop.f32.mrb[0].mxu0
    %v769 = vadd.f32 0.0, %v768
    %v770 = vpop.f32.mrb[0].mxu0
    %v771 = vadd.f32 0.0, %v770
    %v772 = vpop.f32.mrb[0].mxu0
    %v773 = vadd.f32 0.0, %v772
    %v774 = vpop.f32.mrb[0].mxu0
    %v775 = vadd.f32 0.0, %v774
    %776 = vdwg.mxu0
    %v777 = vld [vmem:[#allocation4] sm:$0x3]
    %v778 = vld [vmem:[#allocation6] sm:$0x3]
    %v779 = vadd.f32 %v459, %v463
    %v780 = vadd.f32 %v779, %v469
    %v781 = vadd.f32 %v780, %v473
    %v782 = vadd.f32 %v781, %v479
    %v783 = vadd.f32 %v782, %v483
    %v784 = vadd.f32 %v783, %v489
    %v785 = vadd.f32 %v784, %v493
    %v786 = vadd.f32 %v785, %v499
    %v787 = vadd.f32 %v786, %v503
    %v788 = vadd.f32 %v787, %v509
    %v789 = vadd.f32 %v788, %v513
    %v790 = vadd.f32 %v789, %v519
    %v791 = vadd.f32 %v790, %v523
    %v792 = vadd.f32 %v791, %v529
    %v793 = vadd.f32 %v792, %v533
    %v794 = vadd.f32 %v793, %v539
    %v795 = vadd.f32 %v794, %v543
    %v796 = vadd.f32 %v795, %v549
    %v797 = vadd.f32 %v796, %v553
    %v798 = vadd.f32 %v797, %v559
    %v799 = vadd.f32 %v798, %v563
    %v800 = vadd.f32 %v799, %v569
    %v801 = vadd.f32 %v800, %v573
    %v802 = vadd.f32 %v801, %v579
    %v803 = vadd.f32 %v802, %v583
    %v804 = vadd.f32 %v803, %v589
    %v805 = vadd.f32 %v804, %v593
    %v806 = vadd.f32 %v805, %v599
    %v807 = vadd.f32 %v806, %v603
    %v808 = vadd.f32 %v807, %v609
    %v809 = vadd.f32 %v808, %v613
    %v810 = vadd.f32 %v809, %v619
    %v811 = vadd.f32 %v810, %v623
    %v812 = vadd.f32 %v811, %v629
    %v813 = vadd.f32 %v812, %v633
    %v814 = vadd.f32 %v813, %v639
    %v815 = vadd.f32 %v814, %v643
    %v816 = vadd.f32 %v815, %v649
    %v817 = vadd.f32 %v816, %v653
    %v818 = vadd.f32 %v817, %v659
    %v819 = vadd.f32 %v818, %v663
    %v820 = vadd.f32 %v819, %v669
    %v821 = vadd.f32 %v820, %v673
    %v822 = vadd.f32 %v821, %v679
    %v823 = vadd.f32 %v822, %v683
    %v824 = vadd.f32 %v823, %v689
    %v825 = vadd.f32 %v824, %v693
    %v826 = vadd.f32 %v825, %v699
    %v827 = vadd.f32 %v826, %v703
    %v828 = vadd.f32 %v827, %v709
    %v829 = vadd.f32 %v828, %v713
    %v830 = vadd.f32 %v829, %v719
    %v831 = vadd.f32 %v830, %v723
    %v832 = vadd.f32 %v831, %v729
    %v833 = vadd.f32 %v832, %v733
    %v834 = vadd.f32 %v833, %v739
    %v835 = vadd.f32 %v834, %v743
    %v836 = vadd.f32 %v835, %v749
    %v837 = vadd.f32 %v836, %v753
    %v838 = vadd.f32 %v837, %v759
    %v839 = vadd.f32 %v838, %v763
    %v840 = vadd.f32 %v839, %v769
    %v841 = vadd.f32 %v840, %v773
    %v842 = vrot.slane %v841, 4
    %v843 = vadd.f32 %v841, %v842
    %v844 = vrot.slane %v843, 2
    %v845 = vadd.f32 %v843, %v844
    %v846 = vrot.slane %v845, 1
    %v847 = vadd.f32 %v845, %v846
    %v848 = vadd.f32 %v461, %v465
    %v849 = vadd.f32 %v848, %v471
    %v850 = vadd.f32 %v849, %v475
    %v851 = vadd.f32 %v850, %v481
    %v852 = vadd.f32 %v851, %v485
    %v853 = vadd.f32 %v852, %v491
    %v854 = vadd.f32 %v853, %v495
    %v855 = vadd.f32 %v854, %v501
    %v856 = vadd.f32 %v855, %v505
    %v857 = vadd.f32 %v856, %v511
    %v858 = vadd.f32 %v857, %v515
    %v859 = vadd.f32 %v858, %v521
    %v860 = vadd.f32 %v859, %v525
    %v861 = vadd.f32 %v860, %v531
    %v862 = vadd.f32 %v861, %v535
    %v863 = vadd.f32 %v862, %v541
    %v864 = vadd.f32 %v863, %v545
    %v865 = vadd.f32 %v864, %v551
    %v866 = vadd.f32 %v865, %v555
    %v867 = vadd.f32 %v866, %v561
    %v868 = vadd.f32 %v867, %v565
    %v869 = vadd.f32 %v868, %v571
    %v870 = vadd.f32 %v869, %v575
    %v871 = vadd.f32 %v870, %v581
    %v872 = vadd.f32 %v871, %v585
    %v873 = vadd.f32 %v872, %v591
    %v874 = vadd.f32 %v873, %v595
    %v875 = vadd.f32 %v874, %v601
    %v876 = vadd.f32 %v875, %v605
    %v877 = vadd.f32 %v876, %v611
    %v878 = vadd.f32 %v877, %v615
    %v879 = vadd.f32 %v878, %v621
    %v880 = vadd.f32 %v879, %v625
    %v881 = vadd.f32 %v880, %v631
    %v882 = vadd.f32 %v881, %v635
    %v883 = vadd.f32 %v882, %v641
    %v884 = vadd.f32 %v883, %v645
    %v885 = vadd.f32 %v884, %v651
    %v886 = vadd.f32 %v885, %v655
    %v887 = vadd.f32 %v886, %v661
    %v888 = vadd.f32 %v887, %v665
    %v889 = vadd.f32 %v888, %v671
    %v890 = vadd.f32 %v889, %v675
    %v891 = vadd.f32 %v890, %v681
    %v892 = vadd.f32 %v891, %v685
    %v893 = vadd.f32 %v892, %v691
    %v894 = vadd.f32 %v893, %v695
    %v895 = vadd.f32 %v894, %v701
    %v896 = vadd.f32 %v895, %v705
    %v897 = vadd.f32 %v896, %v711
    %v898 = vadd.f32 %v897, %v715
    %v899 = vadd.f32 %v898, %v721
    %v900 = vadd.f32 %v899, %v725
    %v901 = vadd.f32 %v900, %v731
    %v902 = vadd.f32 %v901, %v735
    %v903 = vadd.f32 %v902, %v741
    %v904 = vadd.f32 %v903, %v745
    %v905 = vadd.f32 %v904, %v751
    %v906 = vadd.f32 %v905, %v755
    %v907 = vadd.f32 %v906, %v761
    %v908 = vadd.f32 %v907, %v765
    %v909 = vadd.f32 %v908, %v771
    %v910 = vadd.f32 %v909, %v775
    %v911 = vrot.slane %v910, 4
    %v912 = vadd.f32 %v910, %v911
    %v913 = vrot.slane %v912, 2
    %v914 = vadd.f32 %v912, %v913
    %v915 = vrot.slane %v914, 1
    %v916 = vadd.f32 %v914, %v915
    %v917 = vrcp.pop 512.0
    %v918 = vmul.f32 %v847, %v917
    %v919 = vmul.f32 %v916, %v917
    %v920 = vsub.f32 %v459, %v918
    %v921 = vsub.f32 %v461, %v919
    %v922 = vsub.f32 %v463, %v918
    %v923 = vsub.f32 %v465, %v919
    %v924 = vsub.f32 %v469, %v918
    %v925 = vsub.f32 %v471, %v919
    %v926 = vsub.f32 %v473, %v918
    %v927 = vsub.f32 %v475, %v919
    %v928 = vsub.f32 %v479, %v918
    %v929 = vsub.f32 %v481, %v919
    %v930 = vsub.f32 %v483, %v918
    %v931 = vsub.f32 %v485, %v919
    %v932 = vsub.f32 %v489, %v918
    %v933 = vsub.f32 %v491, %v919
    %v934 = vsub.f32 %v493, %v918
    %v935 = vsub.f32 %v495, %v919
    %v936 = vsub.f32 %v499, %v918
    %v937 = vsub.f32 %v501, %v919
    %v938 = vsub.f32 %v503, %v918
    %v939 = vsub.f32 %v505, %v919
    %v940 = vsub.f32 %v509, %v918
    %v941 = vsub.f32 %v511, %v919
    %v942 = vsub.f32 %v513, %v918
    %v943 = vsub.f32 %v515, %v919
    %v944 = vsub.f32 %v519, %v918
    %v945 = vsub.f32 %v521, %v919
    %v946 = vsub.f32 %v523, %v918
    %v947 = vsub.f32 %v525, %v919
    %v948 = vsub.f32 %v529, %v918
    %v949 = vsub.f32 %v531, %v919
    %v950 = vsub.f32 %v533, %v918
    %v951 = vsub.f32 %v535, %v919
    %v952 = vsub.f32 %v539, %v918
    %v953 = vsub.f32 %v541, %v919
    %v954 = vsub.f32 %v543, %v918
    %v955 = vsub.f32 %v545, %v919
    %v956 = vsub.f32 %v549, %v918
    %v957 = vsub.f32 %v551, %v919
    %v958 = vsub.f32 %v553, %v918
    %v959 = vsub.f32 %v555, %v919
    %v960 = vsub.f32 %v559, %v918
    %v961 = vsub.f32 %v561, %v919
    %v962 = vsub.f32 %v563, %v918
    %v963 = vsub.f32 %v565, %v919
    %v964 = vsub.f32 %v569, %v918
    %v965 = vsub.f32 %v571, %v919
    %v966 = vsub.f32 %v573, %v918
    %v967 = vsub.f32 %v575, %v919
    %v968 = vsub.f32 %v579, %v918
    %v969 = vsub.f32 %v581, %v919
    %v970 = vsub.f32 %v583, %v918
    %v971 = vsub.f32 %v585, %v919
    %v972 = vsub.f32 %v589, %v918
    %v973 = vsub.f32 %v591, %v919
    %v974 = vsub.f32 %v593, %v918
    %v975 = vsub.f32 %v595, %v919
    %v976 = vsub.f32 %v599, %v918
    %v977 = vsub.f32 %v601, %v919
    %v978 = vsub.f32 %v603, %v918
    %v979 = vsub.f32 %v605, %v919
    %v980 = vsub.f32 %v609, %v918
    %v981 = vsub.f32 %v611, %v919
    %v982 = vsub.f32 %v613, %v918
    %v983 = vsub.f32 %v615, %v919
    %v984 = vsub.f32 %v619, %v918
    %v985 = vsub.f32 %v621, %v919
    %v986 = vsub.f32 %v623, %v918
    %v987 = vsub.f32 %v625, %v919
    %v988 = vsub.f32 %v629, %v918
    %v989 = vsub.f32 %v631, %v919
    %v990 = vsub.f32 %v633, %v918
    %v991 = vsub.f32 %v635, %v919
    %v992 = vsub.f32 %v639, %v918
    %v993 = vsub.f32 %v641, %v919
    %v994 = vsub.f32 %v643, %v918
    %v995 = vsub.f32 %v645, %v919
    %v996 = vsub.f32 %v649, %v918
    %v997 = vsub.f32 %v651, %v919
    %v998 = vsub.f32 %v653, %v918
    %v999 = vsub.f32 %v655, %v919
    %v1000 = vsub.f32 %v659, %v918
    %v1001 = vsub.f32 %v661, %v919
    %v1002 = vsub.f32 %v663, %v918
    %v1003 = vsub.f32 %v665, %v919
    %v1004 = vsub.f32 %v669, %v918
    %v1005 = vsub.f32 %v671, %v919
    %v1006 = vsub.f32 %v673, %v918
    %v1007 = vsub.f32 %v675, %v919
    %v1008 = vsub.f32 %v679, %v918
    %v1009 = vsub.f32 %v681, %v919
    %v1010 = vsub.f32 %v683, %v918
    %v1011 = vsub.f32 %v685, %v919
    %v1012 = vsub.f32 %v689, %v918
    %v1013 = vsub.f32 %v691, %v919
    %v1014 = vsub.f32 %v693, %v918
    %v1015 = vsub.f32 %v695, %v919
    %v1016 = vsub.f32 %v699, %v918
    %v1017 = vsub.f32 %v701, %v919
    %v1018 = vsub.f32 %v703, %v918
    %v1019 = vsub.f32 %v705, %v919
    %v1020 = vsub.f32 %v709, %v918
    %v1021 = vsub.f32 %v711, %v919
    %v1022 = vsub.f32 %v713, %v918
    %v1023 = vsub.f32 %v715, %v919
    %v1024 = vsub.f32 %v719, %v918
    %v1025 = vsub.f32 %v721, %v919
    %v1026 = vsub.f32 %v723, %v918
    %v1027 = vsub.f32 %v725, %v919
    %v1028 = vsub.f32 %v729, %v918
    %v1029 = vsub.f32 %v731, %v919
    %v1030 = vsub.f32 %v733, %v918
    %v1031 = vsub.f32 %v735, %v919
    %v1032 = vsub.f32 %v739, %v918
    %v1033 = vsub.f32 %v741, %v919
    %v1034 = vsub.f32 %v743, %v918
    %v1035 = vsub.f32 %v745, %v919
    %v1036 = vsub.f32 %v749, %v918
    %v1037 = vsub.f32 %v751, %v919
    %v1038 = vsub.f32 %v753, %v918
    %v1039 = vsub.f32 %v755, %v919
    %v1040 = vsub.f32 %v759, %v918
    %v1041 = vsub.f32 %v761, %v919
    %v1042 = vsub.f32 %v763, %v918
    %v1043 = vsub.f32 %v765, %v919
    %v1044 = vsub.f32 %v769, %v918
    %v1045 = vsub.f32 %v771, %v919
    %v1046 = vsub.f32 %v773, %v918
    %v1047 = vsub.f32 %v775, %v919
    %v1048 = vmul.f32 %v920, %v920
    %v1049 = vmul.f32 %v921, %v921
    %v1050 = vmul.f32 %v922, %v922
    %v1051 = vmul.f32 %v923, %v923
    %v1052 = vmul.f32 %v924, %v924
    %v1053 = vmul.f32 %v925, %v925
    %v1054 = vmul.f32 %v926, %v926
    %v1055 = vmul.f32 %v927, %v927
    %v1056 = vmul.f32 %v928, %v928
    %v1057 = vmul.f32 %v929, %v929
    %v1058 = vmul.f32 %v930, %v930
    %v1059 = vmul.f32 %v931, %v931
    %v1060 = vmul.f32 %v932, %v932
    %v1061 = vmul.f32 %v933, %v933
    %v1062 = vmul.f32 %v934, %v934
    %v1063 = vmul.f32 %v935, %v935
    %v1064 = vmul.f32 %v936, %v936
    %v1065 = vmul.f32 %v937, %v937
    %v1066 = vmul.f32 %v938, %v938
    %v1067 = vmul.f32 %v939, %v939
    %v1068 = vmul.f32 %v940, %v940
    %v1069 = vmul.f32 %v941, %v941
    %v1070 = vmul.f32 %v942, %v942
    %v1071 = vmul.f32 %v943, %v943
    %v1072 = vmul.f32 %v944, %v944
    %v1073 = vmul.f32 %v945, %v945
    %v1074 = vmul.f32 %v946, %v946
    %v1075 = vmul.f32 %v947, %v947
    %v1076 = vmul.f32 %v948, %v948
    %v1077 = vmul.f32 %v949, %v949
    %v1078 = vmul.f32 %v950, %v950
    %v1079 = vmul.f32 %v951, %v951
    %v1080 = vmul.f32 %v952, %v952
    %v1081 = vmul.f32 %v953, %v953
    %v1082 = vmul.f32 %v954, %v954
    %v1083 = vmul.f32 %v955, %v955
    %v1084 = vmul.f32 %v956, %v956
    %v1085 = vmul.f32 %v957, %v957
    %v1086 = vmul.f32 %v958, %v958
    %v1087 = vmul.f32 %v959, %v959
    %v1088 = vmul.f32 %v960, %v960
    %v1089 = vmul.f32 %v961, %v961
    %v1090 = vmul.f32 %v962, %v962
    %v1091 = vmul.f32 %v963, %v963
    %v1092 = vmul.f32 %v964, %v964
    %v1093 = vmul.f32 %v965, %v965
    %v1094 = vmul.f32 %v966, %v966
    %v1095 = vmul.f32 %v967, %v967
    %v1096 = vmul.f32 %v968, %v968
    %v1097 = vmul.f32 %v969, %v969
    %v1098 = vmul.f32 %v970, %v970
    %v1099 = vmul.f32 %v971, %v971
    %v1100 = vmul.f32 %v972, %v972
    %v1101 = vmul.f32 %v973, %v973
    %v1102 = vmul.f32 %v974, %v974
    %v1103 = vmul.f32 %v975, %v975
    %v1104 = vmul.f32 %v976, %v976
    %v1105 = vmul.f32 %v977, %v977
    %v1106 = vmul.f32 %v978, %v978
    %v1107 = vmul.f32 %v979, %v979
    %v1108 = vmul.f32 %v980, %v980
    %v1109 = vmul.f32 %v981, %v981
    %v1110 = vmul.f32 %v982, %v982
    %v1111 = vmul.f32 %v983, %v983
    %v1112 = vmul.f32 %v984, %v984
    %v1113 = vmul.f32 %v985, %v985
    %v1114 = vmul.f32 %v986, %v986
    %v1115 = vmul.f32 %v987, %v987
    %v1116 = vmul.f32 %v988, %v988
    %v1117 = vmul.f32 %v989, %v989
    %v1118 = vmul.f32 %v990, %v990
    %v1119 = vmul.f32 %v991, %v991
    %v1120 = vmul.f32 %v992, %v992
    %v1121 = vmul.f32 %v993, %v993
    %v1122 = vmul.f32 %v994, %v994
    %v1123 = vmul.f32 %v995, %v995
    %v1124 = vmul.f32 %v996, %v996
    %v1125 = vmul.f32 %v997, %v997
    %v1126 = vmul.f32 %v998, %v998
    %v1127 = vmul.f32 %v999, %v999
    %v1128 = vmul.f32 %v1000, %v1000
    %v1129 = vmul.f32 %v1001, %v1001
    %v1130 = vmul.f32 %v1002, %v1002
    %v1131 = vmul.f32 %v1003, %v1003
    %v1132 = vmul.f32 %v1004, %v1004
    %v1133 = vmul.f32 %v1005, %v1005
    %v1134 = vmul.f32 %v1006, %v1006
    %v1135 = vmul.f32 %v1007, %v1007
    %v1136 = vmul.f32 %v1008, %v1008
    %v1137 = vmul.f32 %v1009, %v1009
    %v1138 = vmul.f32 %v1010, %v1010
    %v1139 = vmul.f32 %v1011, %v1011
    %v1140 = vmul.f32 %v1012, %v1012
    %v1141 = vmul.f32 %v1013, %v1013
    %v1142 = vmul.f32 %v1014, %v1014
    %v1143 = vmul.f32 %v1015, %v1015
    %v1144 = vmul.f32 %v1016, %v1016
    %v1145 = vmul.f32 %v1017, %v1017
    %v1146 = vmul.f32 %v1018, %v1018
    %v1147 = vmul.f32 %v1019, %v1019
    %v1148 = vmul.f32 %v1020, %v1020
    %v1149 = vmul.f32 %v1021, %v1021
    %v1150 = vmul.f32 %v1022, %v1022
    %v1151 = vmul.f32 %v1023, %v1023
    %v1152 = vmul.f32 %v1024, %v1024
    %v1153 = vmul.f32 %v1025, %v1025
    %v1154 = vmul.f32 %v1026, %v1026
    %v1155 = vmul.f32 %v1027, %v1027
    %v1156 = vmul.f32 %v1028, %v1028
    %v1157 = vmul.f32 %v1029, %v1029
    %v1158 = vmul.f32 %v1030, %v1030
    %v1159 = vmul.f32 %v1031, %v1031
    %v1160 = vmul.f32 %v1032, %v1032
    %v1161 = vmul.f32 %v1033, %v1033
    %v1162 = vmul.f32 %v1034, %v1034
    %v1163 = vmul.f32 %v1035, %v1035
    %v1164 = vmul.f32 %v1036, %v1036
    %v1165 = vmul.f32 %v1037, %v1037
    %v1166 = vmul.f32 %v1038, %v1038
    %v1167 = vmul.f32 %v1039, %v1039
    %v1168 = vmul.f32 %v1040, %v1040
    %v1169 = vmul.f32 %v1041, %v1041
    %v1170 = vmul.f32 %v1042, %v1042
    %v1171 = vmul.f32 %v1043, %v1043
    %v1172 = vmul.f32 %v1044, %v1044
    %v1173 = vmul.f32 %v1045, %v1045
    %v1174 = vmul.f32 %v1046, %v1046
    %v1175 = vmul.f32 %v1047, %v1047
    %v1176 = vadd.f32 %v1048, %v1050
    %v1177 = vadd.f32 %v1176, %v1052
    %v1178 = vadd.f32 %v1177, %v1054
    %v1179 = vadd.f32 %v1178, %v1056
    %v1180 = vadd.f32 %v1179, %v1058
    %v1181 = vadd.f32 %v1180, %v1060
    %v1182 = vadd.f32 %v1181, %v1062
    %v1183 = vadd.f32 %v1182, %v1064
    %v1184 = vadd.f32 %v1183, %v1066
    %v1185 = vadd.f32 %v1184, %v1068
    %v1186 = vadd.f32 %v1185, %v1070
    %v1187 = vadd.f32 %v1186, %v1072
    %v1188 = vadd.f32 %v1187, %v1074
    %v1189 = vadd.f32 %v1188, %v1076
    %v1190 = vadd.f32 %v1189, %v1078
    %v1191 = vadd.f32 %v1190, %v1080
    %v1192 = vadd.f32 %v1191, %v1082
    %v1193 = vadd.f32 %v1192, %v1084
    %v1194 = vadd.f32 %v1193, %v1086
    %v1195 = vadd.f32 %v1194, %v1088
    %v1196 = vadd.f32 %v1195, %v1090
    %v1197 = vadd.f32 %v1196, %v1092
    %v1198 = vadd.f32 %v1197, %v1094
    %v1199 = vadd.f32 %v1198, %v1096
    %v1200 = vadd.f32 %v1199, %v1098
    %v1201 = vadd.f32 %v1200, %v1100
    %v1202 = vadd.f32 %v1201, %v1102
    %v1203 = vadd.f32 %v1202, %v1104
    %v1204 = vadd.f32 %v1203, %v1106
    %v1205 = vadd.f32 %v1204, %v1108
    %v1206 = vadd.f32 %v1205, %v1110
    %v1207 = vadd.f32 %v1206, %v1112
    %v1208 = vadd.f32 %v1207, %v1114
    %v1209 = vadd.f32 %v1208, %v1116
    %v1210 = vadd.f32 %v1209, %v1118
    %v1211 = vadd.f32 %v1210, %v1120
    %v1212 = vadd.f32 %v1211, %v1122
    %v1213 = vadd.f32 %v1212, %v1124
    %v1214 = vadd.f32 %v1213, %v1126
    %v1215 = vadd.f32 %v1214, %v1128
    %v1216 = vadd.f32 %v1215, %v1130
    %v1217 = vadd.f32 %v1216, %v1132
    %v1218 = vadd.f32 %v1217, %v1134
    %v1219 = vadd.f32 %v1218, %v1136
    %v1220 = vadd.f32 %v1219, %v1138
    %v1221 = vadd.f32 %v1220, %v1140
    %v1222 = vadd.f32 %v1221, %v1142
    %v1223 = vadd.f32 %v1222, %v1144
    %v1224 = vadd.f32 %v1223, %v1146
    %v1225 = vadd.f32 %v1224, %v1148
    %v1226 = vadd.f32 %v1225, %v1150
    %v1227 = vadd.f32 %v1226, %v1152
    %v1228 = vadd.f32 %v1227, %v1154
    %v1229 = vadd.f32 %v1228, %v1156
    %v1230 = vadd.f32 %v1229, %v1158
    %v1231 = vadd.f32 %v1230, %v1160
    %v1232 = vadd.f32 %v1231, %v1162
    %v1233 = vadd.f32 %v1232, %v1164
    %v1234 = vadd.f32 %v1233, %v1166
    %v1235 = vadd.f32 %v1234, %v1168
    %v1236 = vadd.f32 %v1235, %v1170
    %v1237 = vadd.f32 %v1236, %v1172
    %v1238 = vadd.f32 %v1237, %v1174
    %v1239 = vrot.slane %v1238, 4
    %v1240 = vadd.f32 %v1238, %v1239
    %v1241 = vrot.slane %v1240, 2
    %v1242 = vadd.f32 %v1240, %v1241
    %v1243 = vrot.slane %v1242, 1
    %v1244 = vadd.f32 %v1242, %v1243
    %v1245 = vadd.f32 %v1049, %v1051
    %v1246 = vadd.f32 %v1245, %v1053
    %v1247 = vadd.f32 %v1246, %v1055
    %v1248 = vadd.f32 %v1247, %v1057
    %v1249 = vadd.f32 %v1248, %v1059
    %v1250 = vadd.f32 %v1249, %v1061
    %v1251 = vadd.f32 %v1250, %v1063
    %v1252 = vadd.f32 %v1251, %v1065
    %v1253 = vadd.f32 %v1252, %v1067
    %v1254 = vadd.f32 %v1253, %v1069
    %v1255 = vadd.f32 %v1254, %v1071
    %v1256 = vadd.f32 %v1255, %v1073
    %v1257 = vadd.f32 %v1256, %v1075
    %v1258 = vadd.f32 %v1257, %v1077
    %v1259 = vadd.f32 %v1258, %v1079
    %v1260 = vadd.f32 %v1259, %v1081
    %v1261 = vadd.f32 %v1260, %v1083
    %v1262 = vadd.f32 %v1261, %v1085
    %v1263 = vadd.f32 %v1262, %v1087
    %v1264 = vadd.f32 %v1263, %v1089
    %v1265 = vadd.f32 %v1264, %v1091
    %v1266 = vadd.f32 %v1265, %v1093
    %v1267 = vadd.f32 %v1266, %v1095
    %v1268 = vadd.f32 %v1267, %v1097
    %v1269 = vadd.f32 %v1268, %v1099
    %v1270 = vadd.f32 %v1269, %v1101
    %v1271 = vadd.f32 %v1270, %v1103
    %v1272 = vadd.f32 %v1271, %v1105
    %v1273 = vadd.f32 %v1272, %v1107
    %v1274 = vadd.f32 %v1273, %v1109
    %v1275 = vadd.f32 %v1274, %v1111
    %v1276 = vadd.f32 %v1275, %v1113
    %v1277 = vadd.f32 %v1276, %v1115
    %v1278 = vadd.f32 %v1277, %v1117
    %v1279 = vadd.f32 %v1278, %v1119
    %v1280 = vadd.f32 %v1279, %v1121
    %v1281 = vadd.f32 %v1280, %v1123
    %v1282 = vadd.f32 %v1281, %v1125
    %v1283 = vadd.f32 %v1282, %v1127
    %v1284 = vadd.f32 %v1283, %v1129
    %v1285 = vadd.f32 %v1284, %v1131
    %v1286 = vadd.f32 %v1285, %v1133
    %v1287 = vadd.f32 %v1286, %v1135
    %v1288 = vadd.f32 %v1287, %v1137
    %v1289 = vadd.f32 %v1288, %v1139
    %v1290 = vadd.f32 %v1289, %v1141
    %v1291 = vadd.f32 %v1290, %v1143
    %v1292 = vadd.f32 %v1291, %v1145
    %v1293 = vadd.f32 %v1292, %v1147
    %v1294 = vadd.f32 %v1293, %v1149
    %v1295 = vadd.f32 %v1294, %v1151
    %v1296 = vadd.f32 %v1295, %v1153
    %v1297 = vadd.f32 %v1296, %v1155
    %v1298 = vadd.f32 %v1297, %v1157
    %v1299 = vadd.f32 %v1298, %v1159
    %v1300 = vadd.f32 %v1299, %v1161
    %v1301 = vadd.f32 %v1300, %v1163
    %v1302 = vadd.f32 %v1301, %v1165
    %v1303 = vadd.f32 %v1302, %v1167
    %v1304 = vadd.f32 %v1303, %v1169
    %v1305 = vadd.f32 %v1304, %v1171
    %v1306 = vadd.f32 %v1305, %v1173
    %v1307 = vadd.f32 %v1306, %v1175
    %v1308 = vrot.slane %v1307, 4
    %v1309 = vadd.f32 %v1307, %v1308
    %v1310 = vrot.slane %v1309, 2
    %v1311 = vadd.f32 %v1309, %v1310
    %v1312 = vrot.slane %v1311, 1
    %v1313 = vadd.f32 %v1311, %v1312
    %v1314 = vmul.f32 %v1244, %v917
    %v1315 = vmul.f32 %v1313, %v917
    %v1316 = vadd.f32 %v1314, 1e-05
    %v1317 = vadd.f32 %v1315, 1e-05
    %v1318 = vrsqrt.pop %v1316
    %v1319 = vrsqrt.pop %v1317
    %v1320 = vmul.f32 %v920, %v1318
    %v1321 = vmul.f32 %v921, %v1319
    %v1322 = vmul.f32 %v922, %v1318
    %v1323 = vmul.f32 %v923, %v1319
    %v1324 = vmul.f32 %v924, %v1318
    %v1325 = vmul.f32 %v925, %v1319
    %v1326 = vmul.f32 %v926, %v1318
    %v1327 = vmul.f32 %v927, %v1319
    %v1328 = vmul.f32 %v928, %v1318
    %v1329 = vmul.f32 %v929, %v1319
    %v1330 = vmul.f32 %v930, %v1318
    %v1331 = vmul.f32 %v931, %v1319
    %v1332 = vmul.f32 %v932, %v1318
    %v1333 = vmul.f32 %v933, %v1319
    %v1334 = vmul.f32 %v934, %v1318
    %v1335 = vmul.f32 %v935, %v1319
    %v1336 = vmul.f32 %v936, %v1318
    %v1337 = vmul.f32 %v937, %v1319
    %v1338 = vmul.f32 %v938, %v1318
    %v1339 = vmul.f32 %v939, %v1319
    %v1340 = vmul.f32 %v940, %v1318
    %v1341 = vmul.f32 %v941, %v1319
    %v1342 = vmul.f32 %v942, %v1318
    %v1343 = vmul.f32 %v943, %v1319
    %v1344 = vmul.f32 %v944, %v1318
    %v1345 = vmul.f32 %v945, %v1319
    %v1346 = vmul.f32 %v946, %v1318
    %v1347 = vmul.f32 %v947, %v1319
    %v1348 = vmul.f32 %v948, %v1318
    %v1349 = vmul.f32 %v949, %v1319
    %v1350 = vmul.f32 %v950, %v1318
    %v1351 = vmul.f32 %v951, %v1319
    %v1352 = vmul.f32 %v952, %v1318
    %v1353 = vmul.f32 %v953, %v1319
    %v1354 = vmul.f32 %v954, %v1318
    %v1355 = vmul.f32 %v955, %v1319
    %v1356 = vmul.f32 %v956, %v1318
    %v1357 = vmul.f32 %v957, %v1319
    %v1358 = vmul.f32 %v958, %v1318
    %v1359 = vmul.f32 %v959, %v1319
    %v1360 = vmul.f32 %v960, %v1318
    %v1361 = vmul.f32 %v961, %v1319
    %v1362 = vmul.f32 %v962, %v1318
    %v1363 = vmul.f32 %v963, %v1319
    %v1364 = vmul.f32 %v964, %v1318
    %v1365 = vmul.f32 %v965, %v1319
    %v1366 = vmul.f32 %v966, %v1318
    %v1367 = vmul.f32 %v967, %v1319
    %v1368 = vmul.f32 %v968, %v1318
    %v1369 = vmul.f32 %v969, %v1319
    %v1370 = vmul.f32 %v970, %v1318
    %v1371 = vmul.f32 %v971, %v1319
    %v1372 = vmul.f32 %v972, %v1318
    %v1373 = vmul.f32 %v973, %v1319
    %v1374 = vmul.f32 %v974, %v1318
    %v1375 = vmul.f32 %v975, %v1319
    %v1376 = vmul.f32 %v976, %v1318
    %v1377 = vmul.f32 %v977, %v1319
    %v1378 = vmul.f32 %v978, %v1318
    %v1379 = vmul.f32 %v979, %v1319
    %v1380 = vmul.f32 %v980, %v1318
    %v1381 = vmul.f32 %v981, %v1319
    %v1382 = vmul.f32 %v982, %v1318
    %v1383 = vmul.f32 %v983, %v1319
    %v1384 = vmul.f32 %v984, %v1318
    %v1385 = vmul.f32 %v985, %v1319
    %v1386 = vmul.f32 %v986, %v1318
    %v1387 = vmul.f32 %v987, %v1319
    %v1388 = vmul.f32 %v988, %v1318
    %v1389 = vmul.f32 %v989, %v1319
    %v1390 = vmul.f32 %v990, %v1318
    %v1391 = vmul.f32 %v991, %v1319
    %v1392 = vmul.f32 %v992, %v1318
    %v1393 = vmul.f32 %v993, %v1319
    %v1394 = vmul.f32 %v994, %v1318
    %v1395 = vmul.f32 %v995, %v1319
    %v1396 = vmul.f32 %v996, %v1318
    %v1397 = vmul.f32 %v997, %v1319
    %v1398 = vmul.f32 %v998, %v1318
    %v1399 = vmul.f32 %v999, %v1319
    %v1400 = vmul.f32 %v1000, %v1318
    %v1401 = vmul.f32 %v1001, %v1319
    %v1402 = vmul.f32 %v1002, %v1318
    %v1403 = vmul.f32 %v1003, %v1319
    %v1404 = vmul.f32 %v1004, %v1318
    %v1405 = vmul.f32 %v1005, %v1319
    %v1406 = vmul.f32 %v1006, %v1318
    %v1407 = vmul.f32 %v1007, %v1319
    %v1408 = vmul.f32 %v1008, %v1318
    %v1409 = vmul.f32 %v1009, %v1319
    %v1410 = vmul.f32 %v1010, %v1318
    %v1411 = vmul.f32 %v1011, %v1319
    %v1412 = vmul.f32 %v1012, %v1318
    %v1413 = vmul.f32 %v1013, %v1319
    %v1414 = vmul.f32 %v1014, %v1318
    %v1415 = vmul.f32 %v1015, %v1319
    %v1416 = vmul.f32 %v1016, %v1318
    %v1417 = vmul.f32 %v1017, %v1319
    %v1418 = vmul.f32 %v1018, %v1318
    %v1419 = vmul.f32 %v1019, %v1319
    %v1420 = vmul.f32 %v1020, %v1318
    %v1421 = vmul.f32 %v1021, %v1319
    %v1422 = vmul.f32 %v1022, %v1318
    %v1423 = vmul.f32 %v1023, %v1319
    %v1424 = vmul.f32 %v1024, %v1318
    %v1425 = vmul.f32 %v1025, %v1319
    %v1426 = vmul.f32 %v1026, %v1318
    %v1427 = vmul.f32 %v1027, %v1319
    %v1428 = vmul.f32 %v1028, %v1318
    %v1429 = vmul.f32 %v1029, %v1319
    %v1430 = vmul.f32 %v1030, %v1318
    %v1431 = vmul.f32 %v1031, %v1319
    %v1432 = vmul.f32 %v1032, %v1318
    %v1433 = vmul.f32 %v1033, %v1319
    %v1434 = vmul.f32 %v1034, %v1318
    %v1435 = vmul.f32 %v1035, %v1319
    %v1436 = vmul.f32 %v1036, %v1318
    %v1437 = vmul.f32 %v1037, %v1319
    %v1438 = vmul.f32 %v1038, %v1318
    %v1439 = vmul.f32 %v1039, %v1319
    %v1440 = vmul.f32 %v1040, %v1318
    %v1441 = vmul.f32 %v1041, %v1319
    %v1442 = vmul.f32 %v1042, %v1318
    %v1443 = vmul.f32 %v1043, %v1319
    %v1444 = vmul.f32 %v1044, %v1318
    %v1445 = vmul.f32 %v1045, %v1319
    %v1446 = vmul.f32 %v1046, %v1318
    %v1447 = vmul.f32 %v1047, %v1319
    %v1449 = vlaneseq
    %v1450 = vshrl.u32 %v1449, 7
    %v1451 = vsub.s32 0, %v1450
    %v1452 = vrot.slane %v777, %v1451
    %v1453 = vlaneseq
    %v1454 = vshrl.u32 %v1453, 7
    %v1455 = vsub.s32 1, %v1454
    %v1456 = vrot.slane %v777, %v1455
    %v1459 = vmul.f32 %v1320, %v1452
    %v1460 = vmul.f32 %v1321, %v1456
    %v1461 = vmul.f32 %v1322, %v1452
    %v1462 = vmul.f32 %v1323, %v1456
    %v1463 = vmul.f32 %v1324, %v1452
    %v1464 = vmul.f32 %v1325, %v1456
    %v1465 = vmul.f32 %v1326, %v1452
    %v1466 = vmul.f32 %v1327, %v1456
    %v1467 = vmul.f32 %v1328, %v1452
    %v1468 = vmul.f32 %v1329, %v1456
    %v1469 = vmul.f32 %v1330, %v1452
    %v1470 = vmul.f32 %v1331, %v1456
    %v1471 = vmul.f32 %v1332, %v1452
    %v1472 = vmul.f32 %v1333, %v1456
    %v1473 = vmul.f32 %v1334, %v1452
    %v1474 = vmul.f32 %v1335, %v1456
    %v1475 = vmul.f32 %v1336, %v1452
    %v1476 = vmul.f32 %v1337, %v1456
    %v1477 = vmul.f32 %v1338, %v1452
    %v1478 = vmul.f32 %v1339, %v1456
    %v1479 = vmul.f32 %v1340, %v1452
    %v1480 = vmul.f32 %v1341, %v1456
    %v1481 = vmul.f32 %v1342, %v1452
    %v1482 = vmul.f32 %v1343, %v1456
    %v1483 = vmul.f32 %v1344, %v1452
    %v1484 = vmul.f32 %v1345, %v1456
    %v1485 = vmul.f32 %v1346, %v1452
    %v1486 = vmul.f32 %v1347, %v1456
    %v1487 = vmul.f32 %v1348, %v1452
    %v1488 = vmul.f32 %v1349, %v1456
    %v1489 = vmul.f32 %v1350, %v1452
    %v1490 = vmul.f32 %v1351, %v1456
    %v1491 = vmul.f32 %v1352, %v1452
    %v1492 = vmul.f32 %v1353, %v1456
    %v1493 = vmul.f32 %v1354, %v1452
    %v1494 = vmul.f32 %v1355, %v1456
    %v1495 = vmul.f32 %v1356, %v1452
    %v1496 = vmul.f32 %v1357, %v1456
    %v1497 = vmul.f32 %v1358, %v1452
    %v1498 = vmul.f32 %v1359, %v1456
    %v1499 = vmul.f32 %v1360, %v1452
    %v1500 = vmul.f32 %v1361, %v1456
    %v1501 = vmul.f32 %v1362, %v1452
    %v1502 = vmul.f32 %v1363, %v1456
    %v1503 = vmul.f32 %v1364, %v1452
    %v1504 = vmul.f32 %v1365, %v1456
    %v1505 = vmul.f32 %v1366, %v1452
    %v1506 = vmul.f32 %v1367, %v1456
    %v1507 = vmul.f32 %v1368, %v1452
    %v1508 = vmul.f32 %v1369, %v1456
    %v1509 = vmul.f32 %v1370, %v1452
    %v1510 = vmul.f32 %v1371, %v1456
    %v1511 = vmul.f32 %v1372, %v1452
    %v1512 = vmul.f32 %v1373, %v1456
    %v1513 = vmul.f32 %v1374, %v1452
    %v1514 = vmul.f32 %v1375, %v1456
    %v1515 = vmul.f32 %v1376, %v1452
    %v1516 = vmul.f32 %v1377, %v1456
    %v1517 = vmul.f32 %v1378, %v1452
    %v1518 = vmul.f32 %v1379, %v1456
    %v1519 = vmul.f32 %v1380, %v1452
    %v1520 = vmul.f32 %v1381, %v1456
    %v1521 = vmul.f32 %v1382, %v1452
    %v1522 = vmul.f32 %v1383, %v1456
    %v1523 = vmul.f32 %v1384, %v1452
    %v1524 = vmul.f32 %v1385, %v1456
    %v1525 = vmul.f32 %v1386, %v1452
    %v1526 = vmul.f32 %v1387, %v1456
    %v1527 = vmul.f32 %v1388, %v1452
    %v1528 = vmul.f32 %v1389, %v1456
    %v1529 = vmul.f32 %v1390, %v1452
    %v1530 = vmul.f32 %v1391, %v1456
    %v1531 = vmul.f32 %v1392, %v1452
    %v1532 = vmul.f32 %v1393, %v1456
    %v1533 = vmul.f32 %v1394, %v1452
    %v1534 = vmul.f32 %v1395, %v1456
    %v1535 = vmul.f32 %v1396, %v1452
    %v1536 = vmul.f32 %v1397, %v1456
    %v1537 = vmul.f32 %v1398, %v1452
    %v1538 = vmul.f32 %v1399, %v1456
    %v1539 = vmul.f32 %v1400, %v1452
    %v1540 = vmul.f32 %v1401, %v1456
    %v1541 = vmul.f32 %v1402, %v1452
    %v1542 = vmul.f32 %v1403, %v1456
    %v1543 = vmul.f32 %v1404, %v1452
    %v1544 = vmul.f32 %v1405, %v1456
    %v1545 = vmul.f32 %v1406, %v1452
    %v1546 = vmul.f32 %v1407, %v1456
    %v1547 = vmul.f32 %v1408, %v1452
    %v1548 = vmul.f32 %v1409, %v1456
    %v1549 = vmul.f32 %v1410, %v1452
    %v1550 = vmul.f32 %v1411, %v1456
    %v1551 = vmul.f32 %v1412, %v1452
    %v1552 = vmul.f32 %v1413, %v1456
    %v1553 = vmul.f32 %v1414, %v1452
    %v1554 = vmul.f32 %v1415, %v1456
    %v1555 = vmul.f32 %v1416, %v1452
    %v1556 = vmul.f32 %v1417, %v1456
    %v1557 = vmul.f32 %v1418, %v1452
    %v1558 = vmul.f32 %v1419, %v1456
    %v1559 = vmul.f32 %v1420, %v1452
    %v1560 = vmul.f32 %v1421, %v1456
    %v1561 = vmul.f32 %v1422, %v1452
    %v1562 = vmul.f32 %v1423, %v1456
    %v1563 = vmul.f32 %v1424, %v1452
    %v1564 = vmul.f32 %v1425, %v1456
    %v1565 = vmul.f32 %v1426, %v1452
    %v1566 = vmul.f32 %v1427, %v1456
    %v1567 = vmul.f32 %v1428, %v1452
    %v1568 = vmul.f32 %v1429, %v1456
    %v1569 = vmul.f32 %v1430, %v1452
    %v1570 = vmul.f32 %v1431, %v1456
    %v1571 = vmul.f32 %v1432, %v1452
    %v1572 = vmul.f32 %v1433, %v1456
    %v1573 = vmul.f32 %v1434, %v1452
    %v1574 = vmul.f32 %v1435, %v1456
    %v1575 = vmul.f32 %v1436, %v1452
    %v1576 = vmul.f32 %v1437, %v1456
    %v1577 = vmul.f32 %v1438, %v1452
    %v1578 = vmul.f32 %v1439, %v1456
    %v1579 = vmul.f32 %v1440, %v1452
    %v1580 = vmul.f32 %v1441, %v1456
    %v1581 = vmul.f32 %v1442, %v1452
    %v1582 = vmul.f32 %v1443, %v1456
    %v1583 = vmul.f32 %v1444, %v1452
    %v1584 = vmul.f32 %v1445, %v1456
    %v1585 = vmul.f32 %v1446, %v1452
    %v1586 = vmul.f32 %v1447, %v1456
    %v1588 = vlaneseq
    %v1589 = vshrl.u32 %v1588, 7
    %v1590 = vsub.s32 0, %v1589
    %v1591 = vrot.slane %v778, %v1590
    %v1592 = vlaneseq
    %v1593 = vshrl.u32 %v1592, 7
    %v1594 = vsub.s32 1, %v1593
    %v1595 = vrot.slane %v778, %v1594
    %v1598 = vadd.f32 %v1459, %v1591
    %v1599 = vadd.f32 %v1460, %v1595
    %v1600 = vadd.f32 %v1461, %v1591
    %v1601 = vadd.f32 %v1462, %v1595
    %v1602 = vadd.f32 %v1463, %v1591
    %v1603 = vadd.f32 %v1464, %v1595
    %v1604 = vadd.f32 %v1465, %v1591
    %v1605 = vadd.f32 %v1466, %v1595
    %v1606 = vadd.f32 %v1467, %v1591
    %v1607 = vadd.f32 %v1468, %v1595
    %v1608 = vadd.f32 %v1469, %v1591
    %v1609 = vadd.f32 %v1470, %v1595
    %v1610 = vadd.f32 %v1471, %v1591
    %v1611 = vadd.f32 %v1472, %v1595
    %v1612 = vadd.f32 %v1473, %v1591
    %v1613 = vadd.f32 %v1474, %v1595
    %v1614 = vadd.f32 %v1475, %v1591
    %v1615 = vadd.f32 %v1476, %v1595
    %v1616 = vadd.f32 %v1477, %v1591
    %v1617 = vadd.f32 %v1478, %v1595
    %v1618 = vadd.f32 %v1479, %v1591
    %v1619 = vadd.f32 %v1480, %v1595
    %v1620 = vadd.f32 %v1481, %v1591
    %v1621 = vadd.f32 %v1482, %v1595
    %v1622 = vadd.f32 %v1483, %v1591
    %v1623 = vadd.f32 %v1484, %v1595
    %v1624 = vadd.f32 %v1485, %v1591
    %v1625 = vadd.f32 %v1486, %v1595
    %v1626 = vadd.f32 %v1487, %v1591
    %v1627 = vadd.f32 %v1488, %v1595
    %v1628 = vadd.f32 %v1489, %v1591
    %v1629 = vadd.f32 %v1490, %v1595
    %v1630 = vadd.f32 %v1491, %v1591
    %v1631 = vadd.f32 %v1492, %v1595
    %v1632 = vadd.f32 %v1493, %v1591
    %v1633 = vadd.f32 %v1494, %v1595
    %v1634 = vadd.f32 %v1495, %v1591
    %v1635 = vadd.f32 %v1496, %v1595
    %v1636 = vadd.f32 %v1497, %v1591
    %v1637 = vadd.f32 %v1498, %v1595
    %v1638 = vadd.f32 %v1499, %v1591
    %v1639 = vadd.f32 %v1500, %v1595
    %v1640 = vadd.f32 %v1501, %v1591
    %v1641 = vadd.f32 %v1502, %v1595
    %v1642 = vadd.f32 %v1503, %v1591
    %v1643 = vadd.f32 %v1504, %v1595
    %v1644 = vadd.f32 %v1505, %v1591
    %v1645 = vadd.f32 %v1506, %v1595
    %v1646 = vadd.f32 %v1507, %v1591
    %v1647 = vadd.f32 %v1508, %v1595
    %v1648 = vadd.f32 %v1509, %v1591
    %v1649 = vadd.f32 %v1510, %v1595
    %v1650 = vadd.f32 %v1511, %v1591
    %v1651 = vadd.f32 %v1512, %v1595
    %v1652 = vadd.f32 %v1513, %v1591
    %v1653 = vadd.f32 %v1514, %v1595
    %v1654 = vadd.f32 %v1515, %v1591
    %v1655 = vadd.f32 %v1516, %v1595
    %v1656 = vadd.f32 %v1517, %v1591
    %v1657 = vadd.f32 %v1518, %v1595
    %v1658 = vadd.f32 %v1519, %v1591
    %v1659 = vadd.f32 %v1520, %v1595
    %v1660 = vadd.f32 %v1521, %v1591
    %v1661 = vadd.f32 %v1522, %v1595
    %v1662 = vadd.f32 %v1523, %v1591
    %v1663 = vadd.f32 %v1524, %v1595
    %v1664 = vadd.f32 %v1525, %v1591
    %v1665 = vadd.f32 %v1526, %v1595
    %v1666 = vadd.f32 %v1527, %v1591
    %v1667 = vadd.f32 %v1528, %v1595
    %v1668 = vadd.f32 %v1529, %v1591
    %v1669 = vadd.f32 %v1530, %v1595
    %v1670 = vadd.f32 %v1531, %v1591
    %v1671 = vadd.f32 %v1532, %v1595
    %v1672 = vadd.f32 %v1533, %v1591
    %v1673 = vadd.f32 %v1534, %v1595
    %v1674 = vadd.f32 %v1535, %v1591
    %v1675 = vadd.f32 %v1536, %v1595
    %v1676 = vadd.f32 %v1537, %v1591
    %v1677 = vadd.f32 %v1538, %v1595
    %v1678 = vadd.f32 %v1539, %v1591
    %v1679 = vadd.f32 %v1540, %v1595
    %v1680 = vadd.f32 %v1541, %v1591
    %v1681 = vadd.f32 %v1542, %v1595
    %v1682 = vadd.f32 %v1543, %v1591
    %v1683 = vadd.f32 %v1544, %v1595
    %v1684 = vadd.f32 %v1545, %v1591
    %v1685 = vadd.f32 %v1546, %v1595
    %v1686 = vadd.f32 %v1547, %v1591
    %v1687 = vadd.f32 %v1548, %v1595
    %v1688 = vadd.f32 %v1549, %v1591
    %v1689 = vadd.f32 %v1550, %v1595
    %v1690 = vadd.f32 %v1551, %v1591
    %v1691 = vadd.f32 %v1552, %v1595
    %v1692 = vadd.f32 %v1553, %v1591
    %v1693 = vadd.f32 %v1554, %v1595
    %v1694 = vadd.f32 %v1555, %v1591
    %v1695 = vadd.f32 %v1556, %v1595
    %v1696 = vadd.f32 %v1557, %v1591
    %v1697 = vadd.f32 %v1558, %v1595
    %v1698 = vadd.f32 %v1559, %v1591
    %v1699 = vadd.f32 %v1560, %v1595
    %v1700 = vadd.f32 %v1561, %v1591
    %v1701 = vadd.f32 %v1562, %v1595
    %v1702 = vadd.f32 %v1563, %v1591
    %v1703 = vadd.f32 %v1564, %v1595
    %v1704 = vadd.f32 %v1565, %v1591
    %v1705 = vadd.f32 %v1566, %v1595
    %v1706 = vadd.f32 %v1567, %v1591
    %v1707 = vadd.f32 %v1568, %v1595
    %v1708 = vadd.f32 %v1569, %v1591
    %v1709 = vadd.f32 %v1570, %v1595
    %v1710 = vadd.f32 %v1571, %v1591
    %v1711 = vadd.f32 %v1572, %v1595
    %v1712 = vadd.f32 %v1573, %v1591
    %v1713 = vadd.f32 %v1574, %v1595
    %v1714 = vadd.f32 %v1575, %v1591
    %v1715 = vadd.f32 %v1576, %v1595
    %v1716 = vadd.f32 %v1577, %v1591
    %v1717 = vadd.f32 %v1578, %v1595
    %v1718 = vadd.f32 %v1579, %v1591
    %v1719 = vadd.f32 %v1580, %v1595
    %v1720 = vadd.f32 %v1581, %v1591
    %v1721 = vadd.f32 %v1582, %v1595
    %v1722 = vadd.f32 %v1583, %v1591
    %v1723 = vadd.f32 %v1584, %v1595
    %v1724 = vadd.f32 %v1585, %v1591
    %v1725 = vadd.f32 %v1586, %v1595
    %v1726 = vmax.f32 %v1598, 0.0
    %v1727 = vmax.f32 %v1599, 0.0
    %v1728 = vmax.f32 %v1600, 0.0
    %v1729 = vmax.f32 %v1601, 0.0
    %v1730 = vmax.f32 %v1602, 0.0
    %v1731 = vmax.f32 %v1603, 0.0
    %v1732 = vmax.f32 %v1604, 0.0
    %v1733 = vmax.f32 %v1605, 0.0
    %v1734 = vmax.f32 %v1606, 0.0
    %v1735 = vmax.f32 %v1607, 0.0
    %v1736 = vmax.f32 %v1608, 0.0
    %v1737 = vmax.f32 %v1609, 0.0
    %v1738 = vmax.f32 %v1610, 0.0
    %v1739 = vmax.f32 %v1611, 0.0
    %v1740 = vmax.f32 %v1612, 0.0
    %v1741 = vmax.f32 %v1613, 0.0
    %v1742 = vmax.f32 %v1614, 0.0
    %v1743 = vmax.f32 %v1615, 0.0
    %v1744 = vmax.f32 %v1616, 0.0
    %v1745 = vmax.f32 %v1617, 0.0
    %v1746 = vmax.f32 %v1618, 0.0
    %v1747 = vmax.f32 %v1619, 0.0
    %v1748 = vmax.f32 %v1620, 0.0
    %v1749 = vmax.f32 %v1621, 0.0
    %v1750 = vmax.f32 %v1622, 0.0
    %v1751 = vmax.f32 %v1623, 0.0
    %v1752 = vmax.f32 %v1624, 0.0
    %v1753 = vmax.f32 %v1625, 0.0
    %v1754 = vmax.f32 %v1626, 0.0
    %v1755 = vmax.f32 %v1627, 0.0
    %v1756 = vmax.f32 %v1628, 0.0
    %v1757 = vmax.f32 %v1629, 0.0
    %v1758 = vmax.f32 %v1630, 0.0
    %v1759 = vmax.f32 %v1631, 0.0
    %v1760 = vmax.f32 %v1632, 0.0
    %v1761 = vmax.f32 %v1633, 0.0
    %v1762 = vmax.f32 %v1634, 0.0
    %v1763 = vmax.f32 %v1635, 0.0
    %v1764 = vmax.f32 %v1636, 0.0
    %v1765 = vmax.f32 %v1637, 0.0
    %v1766 = vmax.f32 %v1638, 0.0
    %v1767 = vmax.f32 %v1639, 0.0
    %v1768 = vmax.f32 %v1640, 0.0
    %v1769 = vmax.f32 %v1641, 0.0
    %v1770 = vmax.f32 %v1642, 0.0
    %v1771 = vmax.f32 %v1643, 0.0
    %v1772 = vmax.f32 %v1644, 0.0
    %v1773 = vmax.f32 %v1645, 0.0
    %v1774 = vmax.f32 %v1646, 0.0
    %v1775 = vmax.f32 %v1647, 0.0
    %v1776 = vmax.f32 %v1648, 0.0
    %v1777 = vmax.f32 %v1649, 0.0
    %v1778 = vmax.f32 %v1650, 0.0
    %v1779 = vmax.f32 %v1651, 0.0
    %v1780 = vmax.f32 %v1652, 0.0
    %v1781 = vmax.f32 %v1653, 0.0
    %v1782 = vmax.f32 %v1654, 0.0
    %v1783 = vmax.f32 %v1655, 0.0
    %v1784 = vmax.f32 %v1656, 0.0
    %v1785 = vmax.f32 %v1657, 0.0
    %v1786 = vmax.f32 %v1658, 0.0
    %v1787 = vmax.f32 %v1659, 0.0
    %v1788 = vmax.f32 %v1660, 0.0
    %v1789 = vmax.f32 %v1661, 0.0
    %v1790 = vmax.f32 %v1662, 0.0
    %v1791 = vmax.f32 %v1663, 0.0
    %v1792 = vmax.f32 %v1664, 0.0
    %v1793 = vmax.f32 %v1665, 0.0
    %v1794 = vmax.f32 %v1666, 0.0
    %v1795 = vmax.f32 %v1667, 0.0
    %v1796 = vmax.f32 %v1668, 0.0
    %v1797 = vmax.f32 %v1669, 0.0
    %v1798 = vmax.f32 %v1670, 0.0
    %v1799 = vmax.f32 %v1671, 0.0
    %v1800 = vmax.f32 %v1672, 0.0
    %v1801 = vmax.f32 %v1673, 0.0
    %v1802 = vmax.f32 %v1674, 0.0
    %v1803 = vmax.f32 %v1675, 0.0
    %v1804 = vmax.f32 %v1676, 0.0
    %v1805 = vmax.f32 %v1677, 0.0
    %v1806 = vmax.f32 %v1678, 0.0
    %v1807 = vmax.f32 %v1679, 0.0
    %v1808 = vmax.f32 %v1680, 0.0
    %v1809 = vmax.f32 %v1681, 0.0
    %v1810 = vmax.f32 %v1682, 0.0
    %v1811 = vmax.f32 %v1683, 0.0
    %v1812 = vmax.f32 %v1684, 0.0
    %v1813 = vmax.f32 %v1685, 0.0
    %v1814 = vmax.f32 %v1686, 0.0
    %v1815 = vmax.f32 %v1687, 0.0
    %v1816 = vmax.f32 %v1688, 0.0
    %v1817 = vmax.f32 %v1689, 0.0
    %v1818 = vmax.f32 %v1690, 0.0
    %v1819 = vmax.f32 %v1691, 0.0
    %v1820 = vmax.f32 %v1692, 0.0
    %v1821 = vmax.f32 %v1693, 0.0
    %v1822 = vmax.f32 %v1694, 0.0
    %v1823 = vmax.f32 %v1695, 0.0
    %v1824 = vmax.f32 %v1696, 0.0
    %v1825 = vmax.f32 %v1697, 0.0
    %v1826 = vmax.f32 %v1698, 0.0
    %v1827 = vmax.f32 %v1699, 0.0
    %v1828 = vmax.f32 %v1700, 0.0
    %v1829 = vmax.f32 %v1701, 0.0
    %v1830 = vmax.f32 %v1702, 0.0
    %v1831 = vmax.f32 %v1703, 0.0
    %v1832 = vmax.f32 %v1704, 0.0
    %v1833 = vmax.f32 %v1705, 0.0
    %v1834 = vmax.f32 %v1706, 0.0
    %v1835 = vmax.f32 %v1707, 0.0
    %v1836 = vmax.f32 %v1708, 0.0
    %v1837 = vmax.f32 %v1709, 0.0
    %v1838 = vmax.f32 %v1710, 0.0
    %v1839 = vmax.f32 %v1711, 0.0
    %v1840 = vmax.f32 %v1712, 0.0
    %v1841 = vmax.f32 %v1713, 0.0
    %v1842 = vmax.f32 %v1714, 0.0
    %v1843 = vmax.f32 %v1715, 0.0
    %v1844 = vmax.f32 %v1716, 0.0
    %v1845 = vmax.f32 %v1717, 0.0
    %v1846 = vmax.f32 %v1718, 0.0
    %v1847 = vmax.f32 %v1719, 0.0
    %v1848 = vmax.f32 %v1720, 0.0
    %v1849 = vmax.f32 %v1721, 0.0
    %v1850 = vmax.f32 %v1722, 0.0
    %v1851 = vmax.f32 %v1723, 0.0
    %v1852 = vmax.f32 %v1724, 0.0
    %v1853 = vmax.f32 %v1725, 0.0
    %v1854 = vpack.c.bf16 %v1728, %v1726
    %v1855 = vpack.c.bf16 %v1729, %v1727
    %v1856 = vpack.c.bf16 %v1732, %v1730
    %v1857 = vpack.c.bf16 %v1733, %v1731
    %v1858 = vpack.c.bf16 %v1736, %v1734
    %v1859 = vpack.c.bf16 %v1737, %v1735
    %v1860 = vpack.c.bf16 %v1740, %v1738
    %v1861 = vpack.c.bf16 %v1741, %v1739
    %v1862 = vpack.c.bf16 %v1744, %v1742
    %v1863 = vpack.c.bf16 %v1745, %v1743
    %v1864 = vpack.c.bf16 %v1748, %v1746
    %v1865 = vpack.c.bf16 %v1749, %v1747
    %v1866 = vpack.c.bf16 %v1752, %v1750
    %v1867 = vpack.c.bf16 %v1753, %v1751
    %v1868 = vpack.c.bf16 %v1756, %v1754
    %v1869 = vpack.c.bf16 %v1757, %v1755
    %v1870 = vpack.c.bf16 %v1760, %v1758
    %v1871 = vpack.c.bf16 %v1761, %v1759
    %v1872 = vpack.c.bf16 %v1764, %v1762
    %v1873 = vpack.c.bf16 %v1765, %v1763
    %v1874 = vpack.c.bf16 %v1768, %v1766
    %v1875 = vpack.c.bf16 %v1769, %v1767
    %v1876 = vpack.c.bf16 %v1772, %v1770
    %v1877 = vpack.c.bf16 %v1773, %v1771
    %v1878 = vpack.c.bf16 %v1776, %v1774
    %v1879 = vpack.c.bf16 %v1777, %v1775
    %v1880 = vpack.c.bf16 %v1780, %v1778
    %v1881 = vpack.c.bf16 %v1781, %v1779
    %v1882 = vpack.c.bf16 %v1784, %v1782
    %v1883 = vpack.c.bf16 %v1785, %v1783
    %v1884 = vpack.c.bf16 %v1788, %v1786
    %v1885 = vpack.c.bf16 %v1789, %v1787
    %v1886 = vpack.c.bf16 %v1792, %v1790
    %v1887 = vpack.c.bf16 %v1793, %v1791
    %v1888 = vpack.c.bf16 %v1796, %v1794
    %v1889 = vpack.c.bf16 %v1797, %v1795
    %v1890 = vpack.c.bf16 %v1800, %v1798
    %v1891 = vpack.c.bf16 %v1801, %v1799
    %v1892 = vpack.c.bf16 %v1804, %v1802
    %v1893 = vpack.c.bf16 %v1805, %v1803
    %v1894 = vpack.c.bf16 %v1808, %v1806
    %v1895 = vpack.c.bf16 %v1809, %v1807
    %v1896 = vpack.c.bf16 %v1812, %v1810
    %v1897 = vpack.c.bf16 %v1813, %v1811
    %v1898 = vpack.c.bf16 %v1816, %v1814
    %v1899 = vpack.c.bf16 %v1817, %v1815
    %v1900 = vpack.c.bf16 %v1820, %v1818
    %v1901 = vpack.c.bf16 %v1821, %v1819
    %v1902 = vpack.c.bf16 %v1824, %v1822
    %v1903 = vpack.c.bf16 %v1825, %v1823
    %v1904 = vpack.c.bf16 %v1828, %v1826
    %v1905 = vpack.c.bf16 %v1829, %v1827
    %v1906 = vpack.c.bf16 %v1832, %v1830
    %v1907 = vpack.c.bf16 %v1833, %v1831
    %v1908 = vpack.c.bf16 %v1836, %v1834
    %v1909 = vpack.c.bf16 %v1837, %v1835
    %v1910 = vpack.c.bf16 %v1840, %v1838
    %v1911 = vpack.c.bf16 %v1841, %v1839
    %v1912 = vpack.c.bf16 %v1844, %v1842
    %v1913 = vpack.c.bf16 %v1845, %v1843
    %v1914 = vpack.c.bf16 %v1848, %v1846
    %v1915 = vpack.c.bf16 %v1849, %v1847
    %v1916 = vpack.c.bf16 %v1852, %v1850
    %v1917 = vpack.c.bf16 %v1853, %v1851
    %v1982 = vunpack.c.l.b16 %v1854
    %v1983 = vunpack.c.l.b16 %v1855
    %v1984 = vunpack.c.h.b16 %v1854
    %v1985 = vunpack.c.h.b16 %v1855
    %v1986 = vunpack.c.l.b16 %v1856
    %v1987 = vunpack.c.l.b16 %v1857
    %v1988 = vunpack.c.h.b16 %v1856
    %v1989 = vunpack.c.h.b16 %v1857
    %v1990 = vunpack.c.l.b16 %v1858
    %v1991 = vunpack.c.l.b16 %v1859
    %v1992 = vunpack.c.h.b16 %v1858
    %v1993 = vunpack.c.h.b16 %v1859
    %v1994 = vunpack.c.l.b16 %v1860
    %v1995 = vunpack.c.l.b16 %v1861
    %v1996 = vunpack.c.h.b16 %v1860
    %v1997 = vunpack.c.h.b16 %v1861
    %v1998 = vunpack.c.l.b16 %v1862
    %v1999 = vunpack.c.l.b16 %v1863
    %v2000 = vunpack.c.h.b16 %v1862
    %v2001 = vunpack.c.h.b16 %v1863
    %v2002 = vunpack.c.l.b16 %v1864
    %v2003 = vunpack.c.l.b16 %v1865
    %v2004 = vunpack.c.h.b16 %v1864
    %v2005 = vunpack.c.h.b16 %v1865
    %v2006 = vunpack.c.l.b16 %v1866
    %v2007 = vunpack.c.l.b16 %v1867
    %v2008 = vunpack.c.h.b16 %v1866
    %v2009 = vunpack.c.h.b16 %v1867
    %v2010 = vunpack.c.l.b16 %v1868
    %v2011 = vunpack.c.l.b16 %v1869
    %v2012 = vunpack.c.h.b16 %v1868
    %v2013 = vunpack.c.h.b16 %v1869
    %v2014 = vunpack.c.l.b16 %v1870
    %v2015 = vunpack.c.l.b16 %v1871
    %v2016 = vunpack.c.h.b16 %v1870
    %v2017 = vunpack.c.h.b16 %v1871
    %v2018 = vunpack.c.l.b16 %v1872
    %v2019 = vunpack.c.l.b16 %v1873
    %v2020 = vunpack.c.h.b16 %v1872
    %v2021 = vunpack.c.h.b16 %v1873
    %v2022 = vunpack.c.l.b16 %v1874
    %v2023 = vunpack.c.l.b16 %v1875
    %v2024 = vunpack.c.h.b16 %v1874
    %v2025 = vunpack.c.h.b16 %v1875
    %v2026 = vunpack.c.l.b16 %v1876
    %v2027 = vunpack.c.l.b16 %v1877
    %v2028 = vunpack.c.h.b16 %v1876
    %v2029 = vunpack.c.h.b16 %v1877
    %v2030 = vunpack.c.l.b16 %v1878
    %v2031 = vunpack.c.l.b16 %v1879
    %v2032 = vunpack.c.h.b16 %v1878
    %v2033 = vunpack.c.h.b16 %v1879
    %v2034 = vunpack.c.l.b16 %v1880
    %v2035 = vunpack.c.l.b16 %v1881
    %v2036 = vunpack.c.h.b16 %v1880
    %v2037 = vunpack.c.h.b16 %v1881
    %v2038 = vunpack.c.l.b16 %v1882
    %v2039 = vunpack.c.l.b16 %v1883
    %v2040 = vunpack.c.h.b16 %v1882
    %v2041 = vunpack.c.h.b16 %v1883
    %v2042 = vunpack.c.l.b16 %v1884
    %v2043 = vunpack.c.l.b16 %v1885
    %v2044 = vunpack.c.h.b16 %v1884
    %v2045 = vunpack.c.h.b16 %v1885
    %v2046 = vunpack.c.l.b16 %v1886
    %v2047 = vunpack.c.l.b16 %v1887
    %v2048 = vunpack.c.h.b16 %v1886
    %v2049 = vunpack.c.h.b16 %v1887
    %v2050 = vunpack.c.l.b16 %v1888
    %v2051 = vunpack.c.l.b16 %v1889
    %v2052 = vunpack.c.h.b16 %v1888
    %v2053 = vunpack.c.h.b16 %v1889
    %v2054 = vunpack.c.l.b16 %v1890
    %v2055 = vunpack.c.l.b16 %v1891
    %v2056 = vunpack.c.h.b16 %v1890
    %v2057 = vunpack.c.h.b16 %v1891
    %v2058 = vunpack.c.l.b16 %v1892
    %v2059 = vunpack.c.l.b16 %v1893
    %v2060 = vunpack.c.h.b16 %v1892
    %v2061 = vunpack.c.h.b16 %v1893
    %v2062 = vunpack.c.l.b16 %v1894
    %v2063 = vunpack.c.l.b16 %v1895
    %v2064 = vunpack.c.h.b16 %v1894
    %v2065 = vunpack.c.h.b16 %v1895
    %v2066 = vunpack.c.l.b16 %v1896
    %v2067 = vunpack.c.l.b16 %v1897
    %v2068 = vunpack.c.h.b16 %v1896
    %v2069 = vunpack.c.h.b16 %v1897
    %v2070 = vunpack.c.l.b16 %v1898
    %v2071 = vunpack.c.l.b16 %v1899
    %v2072 = vunpack.c.h.b16 %v1898
    %v2073 = vunpack.c.h.b16 %v1899
    %v2074 = vunpack.c.l.b16 %v1900
    %v2075 = vunpack.c.l.b16 %v1901
    %v2076 = vunpack.c.h.b16 %v1900
    %v2077 = vunpack.c.h.b16 %v1901
    %v2078 = vunpack.c.l.b16 %v1902
    %v2079 = vunpack.c.l.b16 %v1903
    %v2080 = vunpack.c.h.b16 %v1902
    %v2081 = vunpack.c.h.b16 %v1903
    %v2082 = vunpack.c.l.b16 %v1904
    %v2083 = vunpack.c.l.b16 %v1905
    %v2084 = vunpack.c.h.b16 %v1904
    %v2085 = vunpack.c.h.b16 %v1905
    %v2086 = vunpack.c.l.b16 %v1906
    %v2087 = vunpack.c.l.b16 %v1907
    %v2088 = vunpack.c.h.b16 %v1906
    %v2089 = vunpack.c.h.b16 %v1907
    %v2090 = vunpack.c.l.b16 %v1908
    %v2091 = vunpack.c.l.b16 %v1909
    %v2092 = vunpack.c.h.b16 %v1908
    %v2093 = vunpack.c.h.b16 %v1909
    %v2094 = vunpack.c.l.b16 %v1910
    %v2095 = vunpack.c.l.b16 %v1911
    %v2096 = vunpack.c.h.b16 %v1910
    %v2097 = vunpack.c.h.b16 %v1911
    %v2098 = vunpack.c.l.b16 %v1912
    %v2099 = vunpack.c.l.b16 %v1913
    %v2100 = vunpack.c.h.b16 %v1912
    %v2101 = vunpack.c.h.b16 %v1913
    %v2102 = vunpack.c.l.b16 %v1914
    %v2103 = vunpack.c.l.b16 %v1915
    %v2104 = vunpack.c.h.b16 %v1914
    %v2105 = vunpack.c.h.b16 %v1915
    %v2106 = vunpack.c.l.b16 %v1916
    %v2107 = vunpack.c.l.b16 %v1917
    %v2108 = vunpack.c.h.b16 %v1916
    %v2109 = vunpack.c.h.b16 %v1917
    %v2110 = vpack.c.b16 %v1983, %v1982
    %v2111 = vpack.c.b16 %v1985, %v1984
    %v2112 = vpack.c.b16 %v1987, %v1986
    %v2113 = vpack.c.b16 %v1989, %v1988
    %v2114 = vpack.c.b16 %v1991, %v1990
    %v2115 = vpack.c.b16 %v1993, %v1992
    %v2116 = vpack.c.b16 %v1995, %v1994
    %v2117 = vpack.c.b16 %v1997, %v1996
    %v2118 = vpack.c.b16 %v1999, %v1998
    %v2119 = vpack.c.b16 %v2001, %v2000
    %v2120 = vpack.c.b16 %v2003, %v2002
    %v2121 = vpack.c.b16 %v2005, %v2004
    %v2122 = vpack.c.b16 %v2007, %v2006
    %v2123 = vpack.c.b16 %v2009, %v2008
    %v2124 = vpack.c.b16 %v2011, %v2010
    %v2125 = vpack.c.b16 %v2013, %v2012
    %v2126 = vpack.c.b16 %v2015, %v2014
    %v2127 = vpack.c.b16 %v2017, %v2016
    %v2128 = vpack.c.b16 %v2019, %v2018
    %v2129 = vpack.c.b16 %v2021, %v2020
    %v2130 = vpack.c.b16 %v2023, %v2022
    %v2131 = vpack.c.b16 %v2025, %v2024
    %v2132 = vpack.c.b16 %v2027, %v2026
    %v2133 = vpack.c.b16 %v2029, %v2028
    %v2134 = vpack.c.b16 %v2031, %v2030
    %v2135 = vpack.c.b16 %v2033, %v2032
    %v2136 = vpack.c.b16 %v2035, %v2034
    %v2137 = vpack.c.b16 %v2037, %v2036
    %v2138 = vpack.c.b16 %v2039, %v2038
    %v2139 = vpack.c.b16 %v2041, %v2040
    %v2140 = vpack.c.b16 %v2043, %v2042
    %v2141 = vpack.c.b16 %v2045, %v2044
    %v2142 = vpack.c.b16 %v2047, %v2046
    %v2143 = vpack.c.b16 %v2049, %v2048
    %v2144 = vpack.c.b16 %v2051, %v2050
    %v2145 = vpack.c.b16 %v2053, %v2052
    %v2146 = vpack.c.b16 %v2055, %v2054
    %v2147 = vpack.c.b16 %v2057, %v2056
    %v2148 = vpack.c.b16 %v2059, %v2058
    %v2149 = vpack.c.b16 %v2061, %v2060
    %v2150 = vpack.c.b16 %v2063, %v2062
    %v2151 = vpack.c.b16 %v2065, %v2064
    %v2152 = vpack.c.b16 %v2067, %v2066
    %v2153 = vpack.c.b16 %v2069, %v2068
    %v2154 = vpack.c.b16 %v2071, %v2070
    %v2155 = vpack.c.b16 %v2073, %v2072
    %v2156 = vpack.c.b16 %v2075, %v2074
    %v2157 = vpack.c.b16 %v2077, %v2076
    %v2158 = vpack.c.b16 %v2079, %v2078
    %v2159 = vpack.c.b16 %v2081, %v2080
    %v2160 = vpack.c.b16 %v2083, %v2082
    %v2161 = vpack.c.b16 %v2085, %v2084
    %v2162 = vpack.c.b16 %v2087, %v2086
    %v2163 = vpack.c.b16 %v2089, %v2088
    %v2164 = vpack.c.b16 %v2091, %v2090
    %v2165 = vpack.c.b16 %v2093, %v2092
    %v2166 = vpack.c.b16 %v2095, %v2094
    %v2167 = vpack.c.b16 %v2097, %v2096
    %v2168 = vpack.c.b16 %v2099, %v2098
    %v2169 = vpack.c.b16 %v2101, %v2100
    %v2170 = vpack.c.b16 %v2103, %v2102
    %v2171 = vpack.c.b16 %v2105, %v2104
    %v2172 = vpack.c.b16 %v2107, %v2106
    %v2173 = vpack.c.b16 %v2109, %v2108
    %2238 = vst [vmem:[%s4] sm:$0xff] %v2110
    %2239 = vst [vmem:[%s4 + $0x8] sm:$0xff] %v2111
    %2240 = vst [vmem:[%s4 + $0x10] sm:$0xff] %v2112
    %2241 = vst [vmem:[%s4 + $0x18] sm:$0xff] %v2113
    %2242 = vst [vmem:[%s4 + $0x20] sm:$0xff] %v2114
    %2243 = vst [vmem:[%s4 + $0x28] sm:$0xff] %v2115
    %2244 = vst [vmem:[%s4 + $0x30] sm:$0xff] %v2116
    %2245 = vst [vmem:[%s4 + $0x38] sm:$0xff] %v2117
    %2246 = vst [vmem:[%s4 + $0x40] sm:$0xff] %v2118
    %2247 = vst [vmem:[%s4 + $0x48] sm:$0xff] %v2119
    %2248 = vst [vmem:[%s4 + $0x50] sm:$0xff] %v2120
    %2249 = vst [vmem:[%s4 + $0x58] sm:$0xff] %v2121
    %2250 = vst [vmem:[%s4 + $0x60] sm:$0xff] %v2122
    %2251 = vst [vmem:[%s4 + $0x68] sm:$0xff] %v2123
    %2252 = vst [vmem:[%s4 + $0x70] sm:$0xff] %v2124
    %2253 = vst [vmem:[%s4 + $0x78] sm:$0xff] %v2125
    %2254 = vst [vmem:[%s4 + $0x80] sm:$0xff] %v2126
    %2255 = vst [vmem:[%s4 + $0x88] sm:$0xff] %v2127
    %2256 = vst [vmem:[%s4 + $0x90] sm:$0xff] %v2128
    %2257 = vst [vmem:[%s4 + $0x98] sm:$0xff] %v2129
    %2258 = vst [vmem:[%s4 + $0xa0] sm:$0xff] %v2130
    %2259 = vst [vmem:[%s4 + $0xa8] sm:$0xff] %v2131
    %2260 = vst [vmem:[%s4 + $0xb0] sm:$0xff] %v2132
    %2261 = vst [vmem:[%s4 + $0xb8] sm:$0xff] %v2133
    %2262 = vst [vmem:[%s4 + $0xc0] sm:$0xff] %v2134
    %2263 = vst [vmem:[%s4 + $0xc8] sm:$0xff] %v2135
    %2264 = vst [vmem:[%s4 + $0xd0] sm:$0xff] %v2136
    %2265 = vst [vmem:[%s4 + $0xd8] sm:$0xff] %v2137
    %2266 = vst [vmem:[%s4 + $0xe0] sm:$0xff] %v2138
    %2267 = vst [vmem:[%s4 + $0xe8] sm:$0xff] %v2139
    %2268 = vst [vmem:[%s4 + $0xf0] sm:$0xff] %v2140
    %2269 = vst [vmem:[%s4 + $0xf8] sm:$0xff] %v2141
    %2270 = vst [vmem:[%s4 + $0x100] sm:$0xff] %v2142
    %2271 = vst [vmem:[%s4 + $0x108] sm:$0xff] %v2143
    %2272 = vst [vmem:[%s4 + $0x110] sm:$0xff] %v2144
    %2273 = vst [vmem:[%s4 + $0x118] sm:$0xff] %v2145
    %2274 = vst [vmem:[%s4 + $0x120] sm:$0xff] %v2146
    %2275 = vst [vmem:[%s4 + $0x128] sm:$0xff] %v2147
    %2276 = vst [vmem:[%s4 + $0x130] sm:$0xff] %v2148
    %2277 = vst [vmem:[%s4 + $0x138] sm:$0xff] %v2149
    %2278 = vst [vmem:[%s4 + $0x140] sm:$0xff] %v2150
    %2279 = vst [vmem:[%s4 + $0x148] sm:$0xff] %v2151
    %2280 = vst [vmem:[%s4 + $0x150] sm:$0xff] %v2152
    %2281 = vst [vmem:[%s4 + $0x158] sm:$0xff] %v2153
    %2282 = vst [vmem:[%s4 + $0x160] sm:$0xff] %v2154
    %2283 = vst [vmem:[%s4 + $0x168] sm:$0xff] %v2155
    %2284 = vst [vmem:[%s4 + $0x170] sm:$0xff] %v2156
    %2285 = vst [vmem:[%s4 + $0x178] sm:$0xff] %v2157
    %2286 = vst [vmem:[%s4 + $0x180] sm:$0xff] %v2158
    %2287 = vst [vmem:[%s4 + $0x188] sm:$0xff] %v2159
    %2288 = vst [vmem:[%s4 + $0x190] sm:$0xff] %v2160
    %2289 = vst [vmem:[%s4 + $0x198] sm:$0xff] %v2161
    %2290 = vst [vmem:[%s4 + $0x1a0] sm:$0xff] %v2162
    %2291 = vst [vmem:[%s4 + $0x1a8] sm:$0xff] %v2163
    %2292 = vst [vmem:[%s4 + $0x1b0] sm:$0xff] %v2164
    %2293 = vst [vmem:[%s4 + $0x1b8] sm:$0xff] %v2165
    %2294 = vst [vmem:[%s4 + $0x1c0] sm:$0xff] %v2166
    %2295 = vst [vmem:[%s4 + $0x1c8] sm:$0xff] %v2167
    %2296 = vst [vmem:[%s4 + $0x1d0] sm:$0xff] %v2168
    %2297 = vst [vmem:[%s4 + $0x1d8] sm:$0xff] %v2169
    %2298 = vst [vmem:[%s4 + $0x1e0] sm:$0xff] %v2170
    %2299 = vst [vmem:[%s4 + $0x1e8] sm:$0xff] %v2171
    %2300 = vst [vmem:[%s4 + $0x1f0] sm:$0xff] %v2172
    %2301 = vst [vmem:[%s4 + $0x1f8] sm:$0xff] %v2173
    // Predicated region
    $region30: #{_lambda_.2} parent=1 // pred_check
      _
    $region31: #{_lambda_.2} parent=1 // pred_check_branch
      %2303 = sbr.rel (0) target = $region33
    $region32: #{_lambda_.2} parent=1 // pred_region
      _
    $region33: #{_lambda_.2} parent=1 // pred_fallthru
      _
    // Predicated region
    $region34: #{_lambda_.2} parent=1 // pred_check
      _
    $region35: #{_lambda_.2} parent=1 // pred_check_branch
      %2305 = sbr.rel (0) target = $region37
    $region36: #{_lambda_.2} parent=1 // pred_region
      _
    $region37: #{_lambda_.2} parent=1 // pred_fallthru
      _
    %2306 = vsyncpa [#allocation3], 1
    %2307 = vsyncpa [#allocation5], 1

// kernel: _lambda_.3
$region0: #{_lambda_.3}
  #allocation0 [shape = 'u32[]', space=smem, size = 0x4, offset = 0x4, fixed_abs, tag = 'smem constant byte address 0x4 - core index']
  #allocation1 [shape = 'u32[144,128]{1,0:T(1,128)}', space=vmem, size = 0x12000, scoped, tag = 'internal scratch']
  %s0 = inlined_call_operand.vmem [shape: bf16[128,2304], index: 0, kind: input, shape index: {}]
  %s1 = inlined_call_operand.vmem [shape: bf16[2304,256], index: 1, kind: input, shape index: {}]
  %s2 = inlined_call_operand.vmem [shape: f32[1,256], index: 2, kind: input, shape index: {}]
  %s3 = inlined_call_operand.vmem [shape: f32[1,256], index: 3, kind: input, shape index: {}]
  %s4 = inlined_call_operand.vmem [shape: bf16[256,128], index: 4, kind: input, shape index: {}]
  %s5 = inlined_call_operand.vmem [shape: f32[1,128], index: 5, kind: input, shape index: {}]
  %s6 = inlined_call_operand.vmem [shape: f32[1,128], index: 6, kind: input, shape index: {}]
  %s7 = inlined_call_operand.vmem [shape: bf16[128,64], index: 7, kind: input, shape index: {}]
  %s8 = inlined_call_operand.vmem [shape: bf16[64,128], index: 8, kind: input, shape index: {}]
  %s9 = inlined_call_operand.vmem [shape: f32[1,128], index: 9, kind: input, shape index: {}]
  %s10 = inlined_call_operand.vmem [shape: f32[1,128], index: 10, kind: input, shape index: {}]
  %s11 = inlined_call_operand.hbm [shape: f32[128,128], index: 11, kind: output, shape index: {}]
  %s12 = sld [smem:[#allocation0]]
  $region54: #{_lambda_.3} parent=0
    _
  %s14 = ssub.s32 1, %s12
  %s15 = scalar_select 0, %s14, %s12
  $region1: #{_lambda_.3} parent=0
    #allocation2 [shape = 'u8[65536]{0}', space=vmem, size = 0x10000, scoped, tag = 'output window, operand 0, single buffered']
    #allocation3 [shape = 's32[1]{0}', space=sflag, size = 0x4, scoped, tag = 'scoped memory for _lambda_.3']
    %16 = vsyncpa [#allocation3], 0
    // Predicated region
    $region2: #{_lambda_.3} parent=1 // pred_check
      _
    $region3: #{_lambda_.3} parent=1 // pred_check_branch
      %18 = sbr.rel (0) target = $region5
    $region4: #{_lambda_.3} parent=1 // pred_region
      _
    $region5: #{_lambda_.3} parent=1 // pred_fallthru
      _
    // Predicated region
    $region6: #{_lambda_.3} parent=1 // pred_check
      _
    $region7: #{_lambda_.3} parent=1 // pred_check_branch
      %20 = sbr.rel (0) target = $region9
    $region8: #{_lambda_.3} parent=1 // pred_region
      _
    $region9: #{_lambda_.3} parent=1 // pred_fallthru
      _
    // Predicated region
    $region10: #{_lambda_.3} parent=1 // pred_check
      _
    $region11: #{_lambda_.3} parent=1 // pred_check_branch
      %22 = sbr.rel (0) target = $region13
    $region12: #{_lambda_.3} parent=1 // pred_region
      _
    $region13: #{_lambda_.3} parent=1 // pred_fallthru
      _
    // Predicated region
    $region14: #{_lambda_.3} parent=1 // pred_check
      _
    $region15: #{_lambda_.3} parent=1 // pred_check_branch
      %24 = sbr.rel (0) target = $region17
    $region16: #{_lambda_.3} parent=1 // pred_region
      _
    $region17: #{_lambda_.3} parent=1 // pred_fallthru
      _
    // Predicated region
    $region18: #{_lambda_.3} parent=1 // pred_check
      _
    $region19: #{_lambda_.3} parent=1 // pred_check_branch
      %26 = sbr.rel (0) target = $region21
    $region20: #{_lambda_.3} parent=1 // pred_region
      _
    $region21: #{_lambda_.3} parent=1 // pred_fallthru
      _
    // Predicated region
    $region22: #{_lambda_.3} parent=1 // pred_check
      _
    $region23: #{_lambda_.3} parent=1 // pred_check_branch
      %28 = sbr.rel (0) target = $region25
    $region24: #{_lambda_.3} parent=1 // pred_region
      _
    $region25: #{_lambda_.3} parent=1 // pred_fallthru
      _
    // Predicated region
    $region26: #{_lambda_.3} parent=1 // pred_check
      _
    $region27: #{_lambda_.3} parent=1 // pred_check_branch
      %30 = sbr.rel (0) target = $region29
    $region28: #{_lambda_.3} parent=1 // pred_region
      _
    $region29: #{_lambda_.3} parent=1 // pred_fallthru
      _
    // Predicated region
    $region30: #{_lambda_.3} parent=1 // pred_check
      _
    $region31: #{_lambda_.3} parent=1 // pred_check_branch
      %32 = sbr.rel (0) target = $region33
    $region32: #{_lambda_.3} parent=1 // pred_region
      _
    $region33: #{_lambda_.3} parent=1 // pred_fallthru
      _
    // Predicated region
    $region34: #{_lambda_.3} parent=1 // pred_check
      _
    $region35: #{_lambda_.3} parent=1 // pred_check_branch
      %34 = sbr.rel (0) target = $region37
    $region36: #{_lambda_.3} parent=1 // pred_region
      _
    $region37: #{_lambda_.3} parent=1 // pred_fallthru
      _
    // Predicated region
    $region38: #{_lambda_.3} parent=1 // pred_check
      _
    $region39: #{_lambda_.3} parent=1 // pred_check_branch
      %36 = sbr.rel (0) target = $region41
    $region40: #{_lambda_.3} parent=1 // pred_region
      _
    $region41: #{_lambda_.3} parent=1 // pred_fallthru
      _
    // Predicated region
    $region42: #{_lambda_.3} parent=1 // pred_check
      _
    $region43: #{_lambda_.3} parent=1 // pred_check_branch
      %38 = sbr.rel (0) target = $region45
    $region44: #{_lambda_.3} parent=1 // pred_region
      _
    $region45: #{_lambda_.3} parent=1 // pred_fallthru
      _
    %v40 = vld [vmem:[%s0] sm:$0xff]
    %v41 = vld [vmem:[%s0 + $0x8] sm:$0xff]
    %v42 = vld [vmem:[%s0 + $0x10] sm:$0xff]
    %v43 = vld [vmem:[%s0 + $0x18] sm:$0xff]
    %v44 = vld [vmem:[%s0 + $0x20] sm:$0xff]
    %v45 = vld [vmem:[%s0 + $0x28] sm:$0xff]
    %v46 = vld [vmem:[%s0 + $0x30] sm:$0xff]
    %v47 = vld [vmem:[%s0 + $0x38] sm:$0xff]
    %v48 = vld [vmem:[%s0 + $0x40] sm:$0xff]
    %v49 = vld [vmem:[%s0 + $0x48] sm:$0xff]
    %v50 = vld [vmem:[%s0 + $0x50] sm:$0xff]
    %v51 = vld [vmem:[%s0 + $0x58] sm:$0xff]
    %v52 = vld [vmem:[%s0 + $0x60] sm:$0xff]
    %v53 = vld [vmem:[%s0 + $0x68] sm:$0xff]
    %v54 = vld [vmem:[%s0 + $0x70] sm:$0xff]
    %v55 = vld [vmem:[%s0 + $0x78] sm:$0xff]
    %v56 = vld [vmem:[%s0 + $0x80] sm:$0xff]
    %v57 = vld [vmem:[%s0 + $0x88] sm:$0xff]
    %v58 = vld [vmem:[%s0 + $0x90] sm:$0xff]
    %v59 = vld [vmem:[%s0 + $0x98] sm:$0xff]
    %v60 = vld [vmem:[%s0 + $0xa0] sm:$0xff]
    %v61 = vld [vmem:[%s0 + $0xa8] sm:$0xff]
    %v62 = vld [vmem:[%s0 + $0xb0] sm:$0xff]
    %v63 = vld [vmem:[%s0 + $0xb8] sm:$0xff]
    %v64 = vld [vmem:[%s0 + $0xc0] sm:$0xff]
    %v65 = vld [vmem:[%s0 + $0xc8] sm:$0xff]
    %v66 = vld [vmem:[%s0 + $0xd0] sm:$0xff]
    %v67 = vld [vmem:[%s0 + $0xd8] sm:$0xff]
    %v68 = vld [vmem:[%s0 + $0xe0] sm:$0xff]
    %v69 = vld [vmem:[%s0 + $0xe8] sm:$0xff]
    %v70 = vld [vmem:[%s0 + $0xf0] sm:$0xff]
    %v71 = vld [vmem:[%s0 + $0xf8] sm:$0xff]
    %v72 = vld [vmem:[%s0 + $0x100] sm:$0xff]
    %v73 = vld [vmem:[%s0 + $0x108] sm:$0xff]
    %v74 = vld [vmem:[%s0 + $0x110] sm:$0xff]
    %v75 = vld [vmem:[%s0 + $0x118] sm:$0xff]
    %v76 = vld [vmem:[%s0 + $0x120] sm:$0xff]
    %v77 = vld [vmem:[%s0 + $0x128] sm:$0xff]
    %v78 = vld [vmem:[%s0 + $0x130] sm:$0xff]
    %v79 = vld [vmem:[%s0 + $0x138] sm:$0xff]
    %v80 = vld [vmem:[%s0 + $0x140] sm:$0xff]
    %v81 = vld [vmem:[%s0 + $0x148] sm:$0xff]
    %v82 = vld [vmem:[%s0 + $0x150] sm:$0xff]
    %v83 = vld [vmem:[%s0 + $0x158] sm:$0xff]
    %v84 = vld [vmem:[%s0 + $0x160] sm:$0xff]
    %v85 = vld [vmem:[%s0 + $0x168] sm:$0xff]
    %v86 = vld [vmem:[%s0 + $0x170] sm:$0xff]
    %v87 = vld [vmem:[%s0 + $0x178] sm:$0xff]
    %v88 = vld [vmem:[%s0 + $0x180] sm:$0xff]
    %v89 = vld [vmem:[%s0 + $0x188] sm:$0xff]
    %v90 = vld [vmem:[%s0 + $0x190] sm:$0xff]
    %v91 = vld [vmem:[%s0 + $0x198] sm:$0xff]
    %v92 = vld [vmem:[%s0 + $0x1a0] sm:$0xff]
    %v93 = vld [vmem:[%s0 + $0x1a8] sm:$0xff]
    %v94 = vld [vmem:[%s0 + $0x1b0] sm:$0xff]
    %v95 = vld [vmem:[%s0 + $0x1b8] sm:$0xff]
    %v96 = vld [vmem:[%s0 + $0x1c0] sm:$0xff]
    %v97 = vld [vmem:[%s0 + $0x1c8] sm:$0xff]
    %v98 = vld [vmem:[%s0 + $0x1d0] sm:$0xff]
    %v99 = vld [vmem:[%s0 + $0x1d8] sm:$0xff]
    %v100 = vld [vmem:[%s0 + $0x1e0] sm:$0xff]
    %v101 = vld [vmem:[%s0 + $0x1e8] sm:$0xff]
    %v102 = vld [vmem:[%s0 + $0x1f0] sm:$0xff]
    %v103 = vld [vmem:[%s0 + $0x1f8] sm:$0xff]
    %v104 = vld [vmem:[%s0 + $0x200] sm:$0xff]
    %v105 = vld [vmem:[%s0 + $0x208] sm:$0xff]
    %v106 = vld [vmem:[%s0 + $0x210] sm:$0xff]
    %v107 = vld [vmem:[%s0 + $0x218] sm:$0xff]
    %v108 = vld [vmem:[%s0 + $0x220] sm:$0xff]
    %v109 = vld [vmem:[%s0 + $0x228] sm:$0xff]
    %v110 = vld [vmem:[%s0 + $0x230] sm:$0xff]
    %v111 = vld [vmem:[%s0 + $0x238] sm:$0xff]
    %v112 = vld [vmem:[%s0 + $0x240] sm:$0xff]
    %v113 = vld [vmem:[%s0 + $0x248] sm:$0xff]
    %v114 = vld [vmem:[%s0 + $0x250] sm:$0xff]
    %v115 = vld [vmem:[%s0 + $0x258] sm:$0xff]
    %v116 = vld [vmem:[%s0 + $0x260] sm:$0xff]
    %v117 = vld [vmem:[%s0 + $0x268] sm:$0xff]
    %v118 = vld [vmem:[%s0 + $0x270] sm:$0xff]
    %v119 = vld [vmem:[%s0 + $0x278] sm:$0xff]
    %v120 = vld [vmem:[%s0 + $0x280] sm:$0xff]
    %v121 = vld [vmem:[%s0 + $0x288] sm:$0xff]
    %v122 = vld [vmem:[%s0 + $0x290] sm:$0xff]
    %v123 = vld [vmem:[%s0 + $0x298] sm:$0xff]
    %v124 = vld [vmem:[%s0 + $0x2a0] sm:$0xff]
    %v125 = vld [vmem:[%s0 + $0x2a8] sm:$0xff]
    %v126 = vld [vmem:[%s0 + $0x2b0] sm:$0xff]
    %v127 = vld [vmem:[%s0 + $0x2b8] sm:$0xff]
    %v128 = vld [vmem:[%s0 + $0x2c0] sm:$0xff]
    %v129 = vld [vmem:[%s0 + $0x2c8] sm:$0xff]
    %v130 = vld [vmem:[%s0 + $0x2d0] sm:$0xff]
    %v131 = vld [vmem:[%s0 + $0x2d8] sm:$0xff]
    %v132 = vld [vmem:[%s0 + $0x2e0] sm:$0xff]
    %v133 = vld [vmem:[%s0 + $0x2e8] sm:$0xff]
    %v134 = vld [vmem:[%s0 + $0x2f0] sm:$0xff]
    %v135 = vld [vmem:[%s0 + $0x2f8] sm:$0xff]
    %v136 = vld [vmem:[%s0 + $0x300] sm:$0xff]
    %v137 = vld [vmem:[%s0 + $0x308] sm:$0xff]
    %v138 = vld [vmem:[%s0 + $0x310] sm:$0xff]
    %v139 = vld [vmem:[%s0 + $0x318] sm:$0xff]
    %v140 = vld [vmem:[%s0 + $0x320] sm:$0xff]
    %v141 = vld [vmem:[%s0 + $0x328] sm:$0xff]
    %v142 = vld [vmem:[%s0 + $0x330] sm:$0xff]
    %v143 = vld [vmem:[%s0 + $0x338] sm:$0xff]
    %v144 = vld [vmem:[%s0 + $0x340] sm:$0xff]
    %v145 = vld [vmem:[%s0 + $0x348] sm:$0xff]
    %v146 = vld [vmem:[%s0 + $0x350] sm:$0xff]
    %v147 = vld [vmem:[%s0 + $0x358] sm:$0xff]
    %v148 = vld [vmem:[%s0 + $0x360] sm:$0xff]
    %v149 = vld [vmem:[%s0 + $0x368] sm:$0xff]
    %v150 = vld [vmem:[%s0 + $0x370] sm:$0xff]
    %v151 = vld [vmem:[%s0 + $0x378] sm:$0xff]
    %v152 = vld [vmem:[%s0 + $0x380] sm:$0xff]
    %v153 = vld [vmem:[%s0 + $0x388] sm:$0xff]
    %v154 = vld [vmem:[%s0 + $0x390] sm:$0xff]
    %v155 = vld [vmem:[%s0 + $0x398] sm:$0xff]
    %v156 = vld [vmem:[%s0 + $0x3a0] sm:$0xff]
    %v157 = vld [vmem:[%s0 + $0x3a8] sm:$0xff]
    %v158 = vld [vmem:[%s0 + $0x3b0] sm:$0xff]
    %v159 = vld [vmem:[%s0 + $0x3b8] sm:$0xff]
    %v160 = vld [vmem:[%s0 + $0x3c0] sm:$0xff]
    %v161 = vld [vmem:[%s0 + $0x3c8] sm:$0xff]
    %v162 = vld [vmem:[%s0 + $0x3d0] sm:$0xff]
    %v163 = vld [vmem:[%s0 + $0x3d8] sm:$0xff]
    %v164 = vld [vmem:[%s0 + $0x3e0] sm:$0xff]
    %v165 = vld [vmem:[%s0 + $0x3e8] sm:$0xff]
    %v166 = vld [vmem:[%s0 + $0x3f0] sm:$0xff]
    %v167 = vld [vmem:[%s0 + $0x3f8] sm:$0xff]
    %v168 = vld [vmem:[%s0 + $0x400] sm:$0xff]
    %v169 = vld [vmem:[%s0 + $0x408] sm:$0xff]
    %v170 = vld [vmem:[%s0 + $0x410] sm:$0xff]
    %v171 = vld [vmem:[%s0 + $0x418] sm:$0xff]
    %v172 = vld [vmem:[%s0 + $0x420] sm:$0xff]
    %v173 = vld [vmem:[%s0 + $0x428] sm:$0xff]
    %v174 = vld [vmem:[%s0 + $0x430] sm:$0xff]
    %v175 = vld [vmem:[%s0 + $0x438] sm:$0xff]
    %v176 = vld [vmem:[%s0 + $0x440] sm:$0xff]
    %v177 = vld [vmem:[%s0 + $0x448] sm:$0xff]
    %v178 = vld [vmem:[%s0 + $0x450] sm:$0xff]
    %v179 = vld [vmem:[%s0 + $0x458] sm:$0xff]
    %v180 = vld [vmem:[%s0 + $0x460] sm:$0xff]
    %v181 = vld [vmem:[%s0 + $0x468] sm:$0xff]
    %v182 = vld [vmem:[%s0 + $0x470] sm:$0xff]
    %v183 = vld [vmem:[%s0 + $0x478] sm:$0xff]
    %v184 = vld [vmem:[%s1] sm:$0xff]
    %v185 = vld [vmem:[%s1 + $0x8] sm:$0xff]
    %v186 = vld [vmem:[%s1 + $0x10] sm:$0xff]
    %v187 = vld [vmem:[%s1 + $0x18] sm:$0xff]
    %v188 = vld [vmem:[%s1 + $0x20] sm:$0xff]
    %v189 = vld [vmem:[%s1 + $0x28] sm:$0xff]
    %v190 = vld [vmem:[%s1 + $0x30] sm:$0xff]
    %v191 = vld [vmem:[%s1 + $0x38] sm:$0xff]
    %v192 = vld [vmem:[%s1 + $0x40] sm:$0xff]
    %v193 = vld [vmem:[%s1 + $0x48] sm:$0xff]
    %v194 = vld [vmem:[%s1 + $0x50] sm:$0xff]
    %v195 = vld [vmem:[%s1 + $0x58] sm:$0xff]
    %v196 = vld [vmem:[%s1 + $0x60] sm:$0xff]
    %v197 = vld [vmem:[%s1 + $0x68] sm:$0xff]
    %v198 = vld [vmem:[%s1 + $0x70] sm:$0xff]
    %v199 = vld [vmem:[%s1 + $0x78] sm:$0xff]
    %v200 = vld [vmem:[%s1 + $0x80] sm:$0xff]
    %v201 = vld [vmem:[%s1 + $0x88] sm:$0xff]
    %v202 = vld [vmem:[%s1 + $0x90] sm:$0xff]
    %v203 = vld [vmem:[%s1 + $0x98] sm:$0xff]
    %v204 = vld [vmem:[%s1 + $0xa0] sm:$0xff]
    %v205 = vld [vmem:[%s1 + $0xa8] sm:$0xff]
    %v206 = vld [vmem:[%s1 + $0xb0] sm:$0xff]
    %v207 = vld [vmem:[%s1 + $0xb8] sm:$0xff]
    %v208 = vld [vmem:[%s1 + $0xc0] sm:$0xff]
    %v209 = vld [vmem:[%s1 + $0xc8] sm:$0xff]
    %v210 = vld [vmem:[%s1 + $0xd0] sm:$0xff]
    %v211 = vld [vmem:[%s1 + $0xd8] sm:$0xff]
    %v212 = vld [vmem:[%s1 + $0xe0] sm:$0xff]
    %v213 = vld [vmem:[%s1 + $0xe8] sm:$0xff]
    %v214 = vld [vmem:[%s1 + $0xf0] sm:$0xff]
    %v215 = vld [vmem:[%s1 + $0xf8] sm:$0xff]
    %v216 = vld [vmem:[%s1 + $0x100] sm:$0xff]
    %v217 = vld [vmem:[%s1 + $0x108] sm:$0xff]
    %v218 = vld [vmem:[%s1 + $0x110] sm:$0xff]
    %v219 = vld [vmem:[%s1 + $0x118] sm:$0xff]
    %v220 = vld [vmem:[%s1 + $0x120] sm:$0xff]
    %v221 = vld [vmem:[%s1 + $0x128] sm:$0xff]
    %v222 = vld [vmem:[%s1 + $0x130] sm:$0xff]
    %v223 = vld [vmem:[%s1 + $0x138] sm:$0xff]
    %v224 = vld [vmem:[%s1 + $0x140] sm:$0xff]
    %v225 = vld [vmem:[%s1 + $0x148] sm:$0xff]
    %v226 = vld [vmem:[%s1 + $0x150] sm:$0xff]
    %v227 = vld [vmem:[%s1 + $0x158] sm:$0xff]
    %v228 = vld [vmem:[%s1 + $0x160] sm:$0xff]
    %v229 = vld [vmem:[%s1 + $0x168] sm:$0xff]
    %v230 = vld [vmem:[%s1 + $0x170] sm:$0xff]
    %v231 = vld [vmem:[%s1 + $0x178] sm:$0xff]
    %v232 = vld [vmem:[%s1 + $0x180] sm:$0xff]
    %v233 = vld [vmem:[%s1 + $0x188] sm:$0xff]
    %v234 = vld [vmem:[%s1 + $0x190] sm:$0xff]
    %v235 = vld [vmem:[%s1 + $0x198] sm:$0xff]
    %v236 = vld [vmem:[%s1 + $0x1a0] sm:$0xff]
    %v237 = vld [vmem:[%s1 + $0x1a8] sm:$0xff]
    %v238 = vld [vmem:[%s1 + $0x1b0] sm:$0xff]
    %v239 = vld [vmem:[%s1 + $0x1b8] sm:$0xff]
    %v240 = vld [vmem:[%s1 + $0x1c0] sm:$0xff]
    %v241 = vld [vmem:[%s1 + $0x1c8] sm:$0xff]
    %v242 = vld [vmem:[%s1 + $0x1d0] sm:$0xff]
    %v243 = vld [vmem:[%s1 + $0x1d8] sm:$0xff]
    %v244 = vld [vmem:[%s1 + $0x1e0] sm:$0xff]
    %v245 = vld [vmem:[%s1 + $0x1e8] sm:$0xff]
    %v246 = vld [vmem:[%s1 + $0x1f0] sm:$0xff]
    %v247 = vld [vmem:[%s1 + $0x1f8] sm:$0xff]
    %v248 = vld [vmem:[%s1 + $0x200] sm:$0xff]
    %v249 = vld [vmem:[%s1 + $0x208] sm:$0xff]
    %v250 = vld [vmem:[%s1 + $0x210] sm:$0xff]
    %v251 = vld [vmem:[%s1 + $0x218] sm:$0xff]
    %v252 = vld [vmem:[%s1 + $0x220] sm:$0xff]
    %v253 = vld [vmem:[%s1 + $0x228] sm:$0xff]
    %v254 = vld [vmem:[%s1 + $0x230] sm:$0xff]
    %v255 = vld [vmem:[%s1 + $0x238] sm:$0xff]
    %v256 = vld [vmem:[%s1 + $0x240] sm:$0xff]
    %v257 = vld [vmem:[%s1 + $0x248] sm:$0xff]
    %v258 = vld [vmem:[%s1 + $0x250] sm:$0xff]
    %v259 = vld [vmem:[%s1 + $0x258] sm:$0xff]
    %v260 = vld [vmem:[%s1 + $0x260] sm:$0xff]
    %v261 = vld [vmem:[%s1 + $0x268] sm:$0xff]
    %v262 = vld [vmem:[%s1 + $0x270] sm:$0xff]
    %v263 = vld [vmem:[%s1 + $0x278] sm:$0xff]
    %v264 = vld [vmem:[%s1 + $0x280] sm:$0xff]
    %v265 = vld [vmem:[%s1 + $0x288] sm:$0xff]
    %v266 = vld [vmem:[%s1 + $0x290] sm:$0xff]
    %v267 = vld [vmem:[%s1 + $0x298] sm:$0xff]
    %v268 = vld [vmem:[%s1 + $0x2a0] sm:$0xff]
    %v269 = vld [vmem:[%s1 + $0x2a8] sm:$0xff]
    %v270 = vld [vmem:[%s1 + $0x2b0] sm:$0xff]
    %v271 = vld [vmem:[%s1 + $0x2b8] sm:$0xff]
    %v272 = vld [vmem:[%s1 + $0x2c0] sm:$0xff]
    %v273 = vld [vmem:[%s1 + $0x2c8] sm:$0xff]
    %v274 = vld [vmem:[%s1 + $0x2d0] sm:$0xff]
    %v275 = vld [vmem:[%s1 + $0x2d8] sm:$0xff]
    %v276 = vld [vmem:[%s1 + $0x2e0] sm:$0xff]
    %v277 = vld [vmem:[%s1 + $0x2e8] sm:$0xff]
    %v278 = vld [vmem:[%s1 + $0x2f0] sm:$0xff]
    %v279 = vld [vmem:[%s1 + $0x2f8] sm:$0xff]
    %v280 = vld [vmem:[%s1 + $0x300] sm:$0xff]
    %v281 = vld [vmem:[%s1 + $0x308] sm:$0xff]
    %v282 = vld [vmem:[%s1 + $0x310] sm:$0xff]
    %v283 = vld [vmem:[%s1 + $0x318] sm:$0xff]
    %v284 = vld [vmem:[%s1 + $0x320] sm:$0xff]
    %v285 = vld [vmem:[%s1 + $0x328] sm:$0xff]
    %v286 = vld [vmem:[%s1 + $0x330] sm:$0xff]
    %v287 = vld [vmem:[%s1 + $0x338] sm:$0xff]
    %v288 = vld [vmem:[%s1 + $0x340] sm:$0xff]
    %v289 = vld [vmem:[%s1 + $0x348] sm:$0xff]
    %v290 = vld [vmem:[%s1 + $0x350] sm:$0xff]
    %v291 = vld [vmem:[%s1 + $0x358] sm:$0xff]
    %v292 = vld [vmem:[%s1 + $0x360] sm:$0xff]
    %v293 = vld [vmem:[%s1 + $0x368] sm:$0xff]
    %v294 = vld [vmem:[%s1 + $0x370] sm:$0xff]
    %v295 = vld [vmem:[%s1 + $0x378] sm:$0xff]
    %v296 = vld [vmem:[%s1 + $0x380] sm:$0xff]
    %v297 = vld [vmem:[%s1 + $0x388] sm:$0xff]
    %v298 = vld [vmem:[%s1 + $0x390] sm:$0xff]
    %v299 = vld [vmem:[%s1 + $0x398] sm:$0xff]
    %v300 = vld [vmem:[%s1 + $0x3a0] sm:$0xff]
    %v301 = vld [vmem:[%s1 + $0x3a8] sm:$0xff]
    %v302 = vld [vmem:[%s1 + $0x3b0] sm:$0xff]
    %v303 = vld [vmem:[%s1 + $0x3b8] sm:$0xff]
    %v304 = vld [vmem:[%s1 + $0x3c0] sm:$0xff]
    %v305 = vld [vmem:[%s1 + $0x3c8] sm:$0xff]
    %v306 = vld [vmem:[%s1 + $0x3d0] sm:$0xff]
    %v307 = vld [vmem:[%s1 + $0x3d8] sm:$0xff]
    %v308 = vld [vmem:[%s1 + $0x3e0] sm:$0xff]
    %v309 = vld [vmem:[%s1 + $0x3e8] sm:$0xff]
    %v310 = vld [vmem:[%s1 + $0x3f0] sm:$0xff]
    %v311 = vld [vmem:[%s1 + $0x3f8] sm:$0xff]
    %v312 = vld [vmem:[%s1 + $0x400] sm:$0xff]
    %v313 = vld [vmem:[%s1 + $0x408] sm:$0xff]
    %v314 = vld [vmem:[%s1 + $0x410] sm:$0xff]
    %v315 = vld [vmem:[%s1 + $0x418] sm:$0xff]
    %v316 = vld [vmem:[%s1 + $0x420] sm:$0xff]
    %v317 = vld [vmem:[%s1 + $0x428] sm:$0xff]
    %v318 = vld [vmem:[%s1 + $0x430] sm:$0xff]
    %v319 = vld [vmem:[%s1 + $0x438] sm:$0xff]
    %v320 = vld [vmem:[%s1 + $0x440] sm:$0xff]
    %v321 = vld [vmem:[%s1 + $0x448] sm:$0xff]
    %v322 = vld [vmem:[%s1 + $0x450] sm:$0xff]
    %v323 = vld [vmem:[%s1 + $0x458] sm:$0xff]
    %v324 = vld [vmem:[%s1 + $0x460] sm:$0xff]
    %v325 = vld [vmem:[%s1 + $0x468] sm:$0xff]
    %v326 = vld [vmem:[%s1 + $0x470] sm:$0xff]
    %v327 = vld [vmem:[%s1 + $0x478] sm:$0xff]
    %v328 = vld [vmem:[%s1 + $0x480] sm:$0xff]
    %v329 = vld [vmem:[%s1 + $0x488] sm:$0xff]
    %v330 = vld [vmem:[%s1 + $0x490] sm:$0xff]
    %v331 = vld [vmem:[%s1 + $0x498] sm:$0xff]
    %v332 = vld [vmem:[%s1 + $0x4a0] sm:$0xff]
    %v333 = vld [vmem:[%s1 + $0x4a8] sm:$0xff]
    %v334 = vld [vmem:[%s1 + $0x4b0] sm:$0xff]
    %v335 = vld [vmem:[%s1 + $0x4b8] sm:$0xff]
    %v336 = vld [vmem:[%s1 + $0x4c0] sm:$0xff]
    %v337 = vld [vmem:[%s1 + $0x4c8] sm:$0xff]
    %v338 = vld [vmem:[%s1 + $0x4d0] sm:$0xff]
    %v339 = vld [vmem:[%s1 + $0x4d8] sm:$0xff]
    %v340 = vld [vmem:[%s1 + $0x4e0] sm:$0xff]
    %v341 = vld [vmem:[%s1 + $0x4e8] sm:$0xff]
    %v342 = vld [vmem:[%s1 + $0x4f0] sm:$0xff]
    %v343 = vld [vmem:[%s1 + $0x4f8] sm:$0xff]
    %v344 = vld [vmem:[%s1 + $0x500] sm:$0xff]
    %v345 = vld [vmem:[%s1 + $0x508] sm:$0xff]
    %v346 = vld [vmem:[%s1 + $0x510] sm:$0xff]
    %v347 = vld [vmem:[%s1 + $0x518] sm:$0xff]
    %v348 = vld [vmem:[%s1 + $0x520] sm:$0xff]
    %v349 = vld [vmem:[%s1 + $0x528] sm:$0xff]
    %v350 = vld [vmem:[%s1 + $0x530] sm:$0xff]
    %v351 = vld [vmem:[%s1 + $0x538] sm:$0xff]
    %v352 = vld [vmem:[%s1 + $0x540] sm:$0xff]
    %v353 = vld [vmem:[%s1 + $0x548] sm:$0xff]
    %v354 = vld [vmem:[%s1 + $0x550] sm:$0xff]
    %v355 = vld [vmem:[%s1 + $0x558] sm:$0xff]
    %v356 = vld [vmem:[%s1 + $0x560] sm:$0xff]
    %v357 = vld [vmem:[%s1 + $0x568] sm:$0xff]
    %v358 = vld [vmem:[%s1 + $0x570] sm:$0xff]
    %v359 = vld [vmem:[%s1 + $0x578] sm:$0xff]
    %v360 = vld [vmem:[%s1 + $0x580] sm:$0xff]
    %v361 = vld [vmem:[%s1 + $0x588] sm:$0xff]
    %v362 = vld [vmem:[%s1 + $0x590] sm:$0xff]
    %v363 = vld [vmem:[%s1 + $0x598] sm:$0xff]
    %v364 = vld [vmem:[%s1 + $0x5a0] sm:$0xff]
    %v365 = vld [vmem:[%s1 + $0x5a8] sm:$0xff]
    %v366 = vld [vmem:[%s1 + $0x5b0] sm:$0xff]
    %v367 = vld [vmem:[%s1 + $0x5b8] sm:$0xff]
    %v368 = vld [vmem:[%s1 + $0x5c0] sm:$0xff]
    %v369 = vld [vmem:[%s1 + $0x5c8] sm:$0xff]
    %v370 = vld [vmem:[%s1 + $0x5d0] sm:$0xff]
    %v371 = vld [vmem:[%s1 + $0x5d8] sm:$0xff]
    %v372 = vld [vmem:[%s1 + $0x5e0] sm:$0xff]
    %v373 = vld [vmem:[%s1 + $0x5e8] sm:$0xff]
    %v374 = vld [vmem:[%s1 + $0x5f0] sm:$0xff]
    %v375 = vld [vmem:[%s1 + $0x5f8] sm:$0xff]
    %v376 = vld [vmem:[%s1 + $0x600] sm:$0xff]
    %v377 = vld [vmem:[%s1 + $0x608] sm:$0xff]
    %v378 = vld [vmem:[%s1 + $0x610] sm:$0xff]
    %v379 = vld [vmem:[%s1 + $0x618] sm:$0xff]
    %v380 = vld [vmem:[%s1 + $0x620] sm:$0xff]
    %v381 = vld [vmem:[%s1 + $0x628] sm:$0xff]
    %v382 = vld [vmem:[%s1 + $0x630] sm:$0xff]
    %v383 = vld [vmem:[%s1 + $0x638] sm:$0xff]
    %v384 = vld [vmem:[%s1 + $0x640] sm:$0xff]
    %v385 = vld [vmem:[%s1 + $0x648] sm:$0xff]
    %v386 = vld [vmem:[%s1 + $0x650] sm:$0xff]
    %v387 = vld [vmem:[%s1 + $0x658] sm:$0xff]
    %v388 = vld [vmem:[%s1 + $0x660] sm:$0xff]
    %v389 = vld [vmem:[%s1 + $0x668] sm:$0xff]
    %v390 = vld [vmem:[%s1 + $0x670] sm:$0xff]
    %v391 = vld [vmem:[%s1 + $0x678] sm:$0xff]
    %v392 = vld [vmem:[%s1 + $0x680] sm:$0xff]
    %v393 = vld [vmem:[%s1 + $0x688] sm:$0xff]
    %v394 = vld [vmem:[%s1 + $0x690] sm:$0xff]
    %v395 = vld [vmem:[%s1 + $0x698] sm:$0xff]
    %v396 = vld [vmem:[%s1 + $0x6a0] sm:$0xff]
    %v397 = vld [vmem:[%s1 + $0x6a8] sm:$0xff]
    %v398 = vld [vmem:[%s1 + $0x6b0] sm:$0xff]
    %v399 = vld [vmem:[%s1 + $0x6b8] sm:$0xff]
    %v400 = vld [vmem:[%s1 + $0x6c0] sm:$0xff]
    %v401 = vld [vmem:[%s1 + $0x6c8] sm:$0xff]
    %v402 = vld [vmem:[%s1 + $0x6d0] sm:$0xff]
    %v403 = vld [vmem:[%s1 + $0x6d8] sm:$0xff]
    %v404 = vld [vmem:[%s1 + $0x6e0] sm:$0xff]
    %v405 = vld [vmem:[%s1 + $0x6e8] sm:$0xff]
    %v406 = vld [vmem:[%s1 + $0x6f0] sm:$0xff]
    %v407 = vld [vmem:[%s1 + $0x6f8] sm:$0xff]
    %v408 = vld [vmem:[%s1 + $0x700] sm:$0xff]
    %v409 = vld [vmem:[%s1 + $0x708] sm:$0xff]
    %v410 = vld [vmem:[%s1 + $0x710] sm:$0xff]
    %v411 = vld [vmem:[%s1 + $0x718] sm:$0xff]
    %v412 = vld [vmem:[%s1 + $0x720] sm:$0xff]
    %v413 = vld [vmem:[%s1 + $0x728] sm:$0xff]
    %v414 = vld [vmem:[%s1 + $0x730] sm:$0xff]
    %v415 = vld [vmem:[%s1 + $0x738] sm:$0xff]
    %v416 = vld [vmem:[%s1 + $0x740] sm:$0xff]
    %v417 = vld [vmem:[%s1 + $0x748] sm:$0xff]
    %v418 = vld [vmem:[%s1 + $0x750] sm:$0xff]
    %v419 = vld [vmem:[%s1 + $0x758] sm:$0xff]
    %v420 = vld [vmem:[%s1 + $0x760] sm:$0xff]
    %v421 = vld [vmem:[%s1 + $0x768] sm:$0xff]
    %v422 = vld [vmem:[%s1 + $0x770] sm:$0xff]
    %v423 = vld [vmem:[%s1 + $0x778] sm:$0xff]
    %v424 = vld [vmem:[%s1 + $0x780] sm:$0xff]
    %v425 = vld [vmem:[%s1 + $0x788] sm:$0xff]
    %v426 = vld [vmem:[%s1 + $0x790] sm:$0xff]
    %v427 = vld [vmem:[%s1 + $0x798] sm:$0xff]
    %v428 = vld [vmem:[%s1 + $0x7a0] sm:$0xff]
    %v429 = vld [vmem:[%s1 + $0x7a8] sm:$0xff]
    %v430 = vld [vmem:[%s1 + $0x7b0] sm:$0xff]
    %v431 = vld [vmem:[%s1 + $0x7b8] sm:$0xff]
    %v432 = vld [vmem:[%s1 + $0x7c0] sm:$0xff]
    %v433 = vld [vmem:[%s1 + $0x7c8] sm:$0xff]
    %v434 = vld [vmem:[%s1 + $0x7d0] sm:$0xff]
    %v435 = vld [vmem:[%s1 + $0x7d8] sm:$0xff]
    %v436 = vld [vmem:[%s1 + $0x7e0] sm:$0xff]
    %v437 = vld [vmem:[%s1 + $0x7e8] sm:$0xff]
    %v438 = vld [vmem:[%s1 + $0x7f0] sm:$0xff]
    %v439 = vld [vmem:[%s1 + $0x7f8] sm:$0xff]
    %v440 = vld [vmem:[%s1 + $0x800] sm:$0xff]
    %v441 = vld [vmem:[%s1 + $0x808] sm:$0xff]
    %v442 = vld [vmem:[%s1 + $0x810] sm:$0xff]
    %v443 = vld [vmem:[%s1 + $0x818] sm:$0xff]
    %v444 = vld [vmem:[%s1 + $0x820] sm:$0xff]
    %v445 = vld [vmem:[%s1 + $0x828] sm:$0xff]
    %v446 = vld [vmem:[%s1 + $0x830] sm:$0xff]
    %v447 = vld [vmem:[%s1 + $0x838] sm:$0xff]
    %v448 = vld [vmem:[%s1 + $0x840] sm:$0xff]
    %v449 = vld [vmem:[%s1 + $0x848] sm:$0xff]
    %v450 = vld [vmem:[%s1 + $0x850] sm:$0xff]
    %v451 = vld [vmem:[%s1 + $0x858] sm:$0xff]
    %v452 = vld [vmem:[%s1 + $0x860] sm:$0xff]
    %v453 = vld [vmem:[%s1 + $0x868] sm:$0xff]
    %v454 = vld [vmem:[%s1 + $0x870] sm:$0xff]
    %v455 = vld [vmem:[%s1 + $0x878] sm:$0xff]
    %v456 = vld [vmem:[%s1 + $0x880] sm:$0xff]
    %v457 = vld [vmem:[%s1 + $0x888] sm:$0xff]
    %v458 = vld [vmem:[%s1 + $0x890] sm:$0xff]
    %v459 = vld [vmem:[%s1 + $0x898] sm:$0xff]
    %v460 = vld [vmem:[%s1 + $0x8a0] sm:$0xff]
    %v461 = vld [vmem:[%s1 + $0x8a8] sm:$0xff]
    %v462 = vld [vmem:[%s1 + $0x8b0] sm:$0xff]
    %v463 = vld [vmem:[%s1 + $0x8b8] sm:$0xff]
    %v464 = vld [vmem:[%s1 + $0x8c0] sm:$0xff]
    %v465 = vld [vmem:[%s1 + $0x8c8] sm:$0xff]
    %v466 = vld [vmem:[%s1 + $0x8d0] sm:$0xff]
    %v467 = vld [vmem:[%s1 + $0x8d8] sm:$0xff]
    %v468 = vld [vmem:[%s1 + $0x8e0] sm:$0xff]
    %v469 = vld [vmem:[%s1 + $0x8e8] sm:$0xff]
    %v470 = vld [vmem:[%s1 + $0x8f0] sm:$0xff]
    %v471 = vld [vmem:[%s1 + $0x8f8] sm:$0xff]
    %v616 = vunpack.c.l.b16 %v40
    %v617 = vunpack.c.h.b16 %v40
    %v618 = vunpack.c.l.b16 %v41
    %v619 = vunpack.c.h.b16 %v41
    %v620 = vunpack.c.l.b16 %v42
    %v621 = vunpack.c.h.b16 %v42
    %v622 = vunpack.c.l.b16 %v43
    %v623 = vunpack.c.h.b16 %v43
    %v624 = vunpack.c.l.b16 %v44
    %v625 = vunpack.c.h.b16 %v44
    %v626 = vunpack.c.l.b16 %v45
    %v627 = vunpack.c.h.b16 %v45
    %v628 = vunpack.c.l.b16 %v46
    %v629 = vunpack.c.h.b16 %v46
    %v630 = vunpack.c.l.b16 %v47
    %v631 = vunpack.c.h.b16 %v47
    %v632 = vunpack.c.l.b16 %v48
    %v633 = vunpack.c.h.b16 %v48
    %v634 = vunpack.c.l.b16 %v49
    %v635 = vunpack.c.h.b16 %v49
    %v636 = vunpack.c.l.b16 %v50
    %v637 = vunpack.c.h.b16 %v50
    %v638 = vunpack.c.l.b16 %v51
    %v639 = vunpack.c.h.b16 %v51
    %v640 = vunpack.c.l.b16 %v52
    %v641 = vunpack.c.h.b16 %v52
    %v642 = vunpack.c.l.b16 %v53
    %v643 = vunpack.c.h.b16 %v53
    %v644 = vunpack.c.l.b16 %v54
    %v645 = vunpack.c.h.b16 %v54
    %v646 = vunpack.c.l.b16 %v55
    %v647 = vunpack.c.h.b16 %v55
    %v648 = vunpack.c.l.b16 %v56
    %v649 = vunpack.c.h.b16 %v56
    %v650 = vunpack.c.l.b16 %v57
    %v651 = vunpack.c.h.b16 %v57
    %v652 = vunpack.c.l.b16 %v58
    %v653 = vunpack.c.h.b16 %v58
    %v654 = vunpack.c.l.b16 %v59
    %v655 = vunpack.c.h.b16 %v59
    %v656 = vunpack.c.l.b16 %v60
    %v657 = vunpack.c.h.b16 %v60
    %v658 = vunpack.c.l.b16 %v61
    %v659 = vunpack.c.h.b16 %v61
    %v660 = vunpack.c.l.b16 %v62
    %v661 = vunpack.c.h.b16 %v62
    %v662 = vunpack.c.l.b16 %v63
    %v663 = vunpack.c.h.b16 %v63
    %v664 = vunpack.c.l.b16 %v64
    %v665 = vunpack.c.h.b16 %v64
    %v666 = vunpack.c.l.b16 %v65
    %v667 = vunpack.c.h.b16 %v65
    %v668 = vunpack.c.l.b16 %v66
    %v669 = vunpack.c.h.b16 %v66
    %v670 = vunpack.c.l.b16 %v67
    %v671 = vunpack.c.h.b16 %v67
    %v672 = vunpack.c.l.b16 %v68
    %v673 = vunpack.c.h.b16 %v68
    %v674 = vunpack.c.l.b16 %v69
    %v675 = vunpack.c.h.b16 %v69
    %v676 = vunpack.c.l.b16 %v70
    %v677 = vunpack.c.h.b16 %v70
    %v678 = vunpack.c.l.b16 %v71
    %v679 = vunpack.c.h.b16 %v71
    %v680 = vunpack.c.l.b16 %v72
    %v681 = vunpack.c.h.b16 %v72
    %v682 = vunpack.c.l.b16 %v73
    %v683 = vunpack.c.h.b16 %v73
    %v684 = vunpack.c.l.b16 %v74
    %v685 = vunpack.c.h.b16 %v74
    %v686 = vunpack.c.l.b16 %v75
    %v687 = vunpack.c.h.b16 %v75
    %v688 = vunpack.c.l.b16 %v76
    %v689 = vunpack.c.h.b16 %v76
    %v690 = vunpack.c.l.b16 %v77
    %v691 = vunpack.c.h.b16 %v77
    %v692 = vunpack.c.l.b16 %v78
    %v693 = vunpack.c.h.b16 %v78
    %v694 = vunpack.c.l.b16 %v79
    %v695 = vunpack.c.h.b16 %v79
    %v696 = vunpack.c.l.b16 %v80
    %v697 = vunpack.c.h.b16 %v80
    %v698 = vunpack.c.l.b16 %v81
    %v699 = vunpack.c.h.b16 %v81
    %v700 = vunpack.c.l.b16 %v82
    %v701 = vunpack.c.h.b16 %v82
    %v702 = vunpack.c.l.b16 %v83
    %v703 = vunpack.c.h.b16 %v83
    %v704 = vunpack.c.l.b16 %v84
    %v705 = vunpack.c.h.b16 %v84
    %v706 = vunpack.c.l.b16 %v85
    %v707 = vunpack.c.h.b16 %v85
    %v708 = vunpack.c.l.b16 %v86
    %v709 = vunpack.c.h.b16 %v86
    %v710 = vunpack.c.l.b16 %v87
    %v711 = vunpack.c.h.b16 %v87
    %v712 = vunpack.c.l.b16 %v88
    %v713 = vunpack.c.h.b16 %v88
    %v714 = vunpack.c.l.b16 %v89
    %v715 = vunpack.c.h.b16 %v89
    %v716 = vunpack.c.l.b16 %v90
    %v717 = vunpack.c.h.b16 %v90
    %v718 = vunpack.c.l.b16 %v91
    %v719 = vunpack.c.h.b16 %v91
    %v720 = vunpack.c.l.b16 %v92
    %v721 = vunpack.c.h.b16 %v92
    %v722 = vunpack.c.l.b16 %v93
    %v723 = vunpack.c.h.b16 %v93
    %v724 = vunpack.c.l.b16 %v94
    %v725 = vunpack.c.h.b16 %v94
    %v726 = vunpack.c.l.b16 %v95
    %v727 = vunpack.c.h.b16 %v95
    %v728 = vunpack.c.l.b16 %v96
    %v729 = vunpack.c.h.b16 %v96
    %v730 = vunpack.c.l.b16 %v97
    %v731 = vunpack.c.h.b16 %v97
    %v732 = vunpack.c.l.b16 %v98
    %v733 = vunpack.c.h.b16 %v98
    %v734 = vunpack.c.l.b16 %v99
    %v735 = vunpack.c.h.b16 %v99
    %v736 = vunpack.c.l.b16 %v100
    %v737 = vunpack.c.h.b16 %v100
    %v738 = vunpack.c.l.b16 %v101
    %v739 = vunpack.c.h.b16 %v101
    %v740 = vunpack.c.l.b16 %v102
    %v741 = vunpack.c.h.b16 %v102
    %v742 = vunpack.c.l.b16 %v103
    %v743 = vunpack.c.h.b16 %v103
    %v744 = vunpack.c.l.b16 %v104
    %v745 = vunpack.c.h.b16 %v104
    %v746 = vunpack.c.l.b16 %v105
    %v747 = vunpack.c.h.b16 %v105
    %v748 = vunpack.c.l.b16 %v106
    %v749 = vunpack.c.h.b16 %v106
    %v750 = vunpack.c.l.b16 %v107
    %v751 = vunpack.c.h.b16 %v107
    %v752 = vunpack.c.l.b16 %v108
    %v753 = vunpack.c.h.b16 %v108
    %v754 = vunpack.c.l.b16 %v109
    %v755 = vunpack.c.h.b16 %v109
    %v756 = vunpack.c.l.b16 %v110
    %v757 = vunpack.c.h.b16 %v110
    %v758 = vunpack.c.l.b16 %v111
    %v759 = vunpack.c.h.b16 %v111
    %v760 = vunpack.c.l.b16 %v112
    %v761 = vunpack.c.h.b16 %v112
    %v762 = vunpack.c.l.b16 %v113
    %v763 = vunpack.c.h.b16 %v113
    %v764 = vunpack.c.l.b16 %v114
    %v765 = vunpack.c.h.b16 %v114
    %v766 = vunpack.c.l.b16 %v115
    %v767 = vunpack.c.h.b16 %v115
    %v768 = vunpack.c.l.b16 %v116
    %v769 = vunpack.c.h.b16 %v116
    %v770 = vunpack.c.l.b16 %v117
    %v771 = vunpack.c.h.b16 %v117
    %v772 = vunpack.c.l.b16 %v118
    %v773 = vunpack.c.h.b16 %v118
    %v774 = vunpack.c.l.b16 %v119
    %v775 = vunpack.c.h.b16 %v119
    %v776 = vunpack.c.l.b16 %v120
    %v777 = vunpack.c.h.b16 %v120
    %v778 = vunpack.c.l.b16 %v121
    %v779 = vunpack.c.h.b16 %v121
    %v780 = vunpack.c.l.b16 %v122
    %v781 = vunpack.c.h.b16 %v122
    %v782 = vunpack.c.l.b16 %v123
    %v783 = vunpack.c.h.b16 %v123
    %v784 = vunpack.c.l.b16 %v124
    %v785 = vunpack.c.h.b16 %v124
    %v786 = vunpack.c.l.b16 %v125
    %v787 = vunpack.c.h.b16 %v125
    %v788 = vunpack.c.l.b16 %v126
    %v789 = vunpack.c.h.b16 %v126
    %v790 = vunpack.c.l.b16 %v127
    %v791 = vunpack.c.h.b16 %v127
    %v792 = vunpack.c.l.b16 %v128
    %v793 = vunpack.c.h.b16 %v128
    %v794 = vunpack.c.l.b16 %v129
    %v795 = vunpack.c.h.b16 %v129
    %v796 = vunpack.c.l.b16 %v130
    %v797 = vunpack.c.h.b16 %v130
    %v798 = vunpack.c.l.b16 %v131
    %v799 = vunpack.c.h.b16 %v131
    %v800 = vunpack.c.l.b16 %v132
    %v801 = vunpack.c.h.b16 %v132
    %v802 = vunpack.c.l.b16 %v133
    %v803 = vunpack.c.h.b16 %v133
    %v804 = vunpack.c.l.b16 %v134
    %v805 = vunpack.c.h.b16 %v134
    %v806 = vunpack.c.l.b16 %v135
    %v807 = vunpack.c.h.b16 %v135
    %v808 = vunpack.c.l.b16 %v136
    %v809 = vunpack.c.h.b16 %v136
    %v810 = vunpack.c.l.b16 %v137
    %v811 = vunpack.c.h.b16 %v137
    %v812 = vunpack.c.l.b16 %v138
    %v813 = vunpack.c.h.b16 %v138
    %v814 = vunpack.c.l.b16 %v139
    %v815 = vunpack.c.h.b16 %v139
    %v816 = vunpack.c.l.b16 %v140
    %v817 = vunpack.c.h.b16 %v140
    %v818 = vunpack.c.l.b16 %v141
    %v819 = vunpack.c.h.b16 %v141
    %v820 = vunpack.c.l.b16 %v142
    %v821 = vunpack.c.h.b16 %v142
    %v822 = vunpack.c.l.b16 %v143
    %v823 = vunpack.c.h.b16 %v143
    %v824 = vunpack.c.l.b16 %v144
    %v825 = vunpack.c.h.b16 %v144
    %v826 = vunpack.c.l.b16 %v145
    %v827 = vunpack.c.h.b16 %v145
    %v828 = vunpack.c.l.b16 %v146
    %v829 = vunpack.c.h.b16 %v146
    %v830 = vunpack.c.l.b16 %v147
    %v831 = vunpack.c.h.b16 %v147
    %v832 = vunpack.c.l.b16 %v148
    %v833 = vunpack.c.h.b16 %v148
    %v834 = vunpack.c.l.b16 %v149
    %v835 = vunpack.c.h.b16 %v149
    %v836 = vunpack.c.l.b16 %v150
    %v837 = vunpack.c.h.b16 %v150
    %v838 = vunpack.c.l.b16 %v151
    %v839 = vunpack.c.h.b16 %v151
    %v840 = vunpack.c.l.b16 %v152
    %v841 = vunpack.c.h.b16 %v152
    %v842 = vunpack.c.l.b16 %v153
    %v843 = vunpack.c.h.b16 %v153
    %v844 = vunpack.c.l.b16 %v154
    %v845 = vunpack.c.h.b16 %v154
    %v846 = vunpack.c.l.b16 %v155
    %v847 = vunpack.c.h.b16 %v155
    %v848 = vunpack.c.l.b16 %v156
    %v849 = vunpack.c.h.b16 %v156
    %v850 = vunpack.c.l.b16 %v157
    %v851 = vunpack.c.h.b16 %v157
    %v852 = vunpack.c.l.b16 %v158
    %v853 = vunpack.c.h.b16 %v158
    %v854 = vunpack.c.l.b16 %v159
    %v855 = vunpack.c.h.b16 %v159
    %v856 = vunpack.c.l.b16 %v160
    %v857 = vunpack.c.h.b16 %v160
    %v858 = vunpack.c.l.b16 %v161
    %v859 = vunpack.c.h.b16 %v161
    %v860 = vunpack.c.l.b16 %v162
    %v861 = vunpack.c.h.b16 %v162
    %v862 = vunpack.c.l.b16 %v163
    %v863 = vunpack.c.h.b16 %v163
    %v864 = vunpack.c.l.b16 %v164
    %v865 = vunpack.c.h.b16 %v164
    %v866 = vunpack.c.l.b16 %v165
    %v867 = vunpack.c.h.b16 %v165
    %v868 = vunpack.c.l.b16 %v166
    %v869 = vunpack.c.h.b16 %v166
    %v870 = vunpack.c.l.b16 %v167
    %v871 = vunpack.c.h.b16 %v167
    %v872 = vunpack.c.l.b16 %v168
    %v873 = vunpack.c.h.b16 %v168
    %v874 = vunpack.c.l.b16 %v169
    %v875 = vunpack.c.h.b16 %v169
    %v876 = vunpack.c.l.b16 %v170
    %v877 = vunpack.c.h.b16 %v170
    %v878 = vunpack.c.l.b16 %v171
    %v879 = vunpack.c.h.b16 %v171
    %v880 = vunpack.c.l.b16 %v172
    %v881 = vunpack.c.h.b16 %v172
    %v882 = vunpack.c.l.b16 %v173
    %v883 = vunpack.c.h.b16 %v173
    %v884 = vunpack.c.l.b16 %v174
    %v885 = vunpack.c.h.b16 %v174
    %v886 = vunpack.c.l.b16 %v175
    %v887 = vunpack.c.h.b16 %v175
    %v888 = vunpack.c.l.b16 %v176
    %v889 = vunpack.c.h.b16 %v176
    %v890 = vunpack.c.l.b16 %v177
    %v891 = vunpack.c.h.b16 %v177
    %v892 = vunpack.c.l.b16 %v178
    %v893 = vunpack.c.h.b16 %v178
    %v894 = vunpack.c.l.b16 %v179
    %v895 = vunpack.c.h.b16 %v179
    %v896 = vunpack.c.l.b16 %v180
    %v897 = vunpack.c.h.b16 %v180
    %v898 = vunpack.c.l.b16 %v181
    %v899 = vunpack.c.h.b16 %v181
    %v900 = vunpack.c.l.b16 %v182
    %v901 = vunpack.c.h.b16 %v182
    %v902 = vunpack.c.l.b16 %v183
    %v903 = vunpack.c.h.b16 %v183
    %v904 = vpack.c.b16 %v634, %v616
    %v905 = vpack.c.b16 %v635, %v617
    %v906 = vpack.c.b16 %v636, %v618
    %v907 = vpack.c.b16 %v637, %v619
    %v908 = vpack.c.b16 %v638, %v620
    %v909 = vpack.c.b16 %v639, %v621
    %v910 = vpack.c.b16 %v640, %v622
    %v911 = vpack.c.b16 %v641, %v623
    %v912 = vpack.c.b16 %v642, %v624
    %v913 = vpack.c.b16 %v643, %v625
    %v914 = vpack.c.b16 %v644, %v626
    %v915 = vpack.c.b16 %v645, %v627
    %v916 = vpack.c.b16 %v646, %v628
    %v917 = vpack.c.b16 %v647, %v629
    %v918 = vpack.c.b16 %v648, %v630
    %v919 = vpack.c.b16 %v649, %v631
    %v920 = vpack.c.b16 %v650, %v632
    %v921 = vpack.c.b16 %v651, %v633
    %v922 = vpack.c.b16 %v670, %v652
    %v923 = vpack.c.b16 %v671, %v653
    %v924 = vpack.c.b16 %v672, %v654
    %v925 = vpack.c.b16 %v673, %v655
    %v926 = vpack.c.b16 %v674, %v656
    %v927 = vpack.c.b16 %v675, %v657
    %v928 = vpack.c.b16 %v676, %v658
    %v929 = vpack.c.b16 %v677, %v659
    %v930 = vpack.c.b16 %v678, %v660
    %v931 = vpack.c.b16 %v679, %v661
    %v932 = vpack.c.b16 %v680, %v662
    %v933 = vpack.c.b16 %v681, %v663
    %v934 = vpack.c.b16 %v682, %v664
    %v935 = vpack.c.b16 %v683, %v665
    %v936 = vpack.c.b16 %v684, %v666
    %v937 = vpack.c.b16 %v685, %v667
    %v938 = vpack.c.b16 %v686, %v668
    %v939 = vpack.c.b16 %v687, %v669
    %v940 = vpack.c.b16 %v706, %v688
    %v941 = vpack.c.b16 %v707, %v689
    %v942 = vpack.c.b16 %v708, %v690
    %v943 = vpack.c.b16 %v709, %v691
    %v944 = vpack.c.b16 %v710, %v692
    %v945 = vpack.c.b16 %v711, %v693
    %v946 = vpack.c.b16 %v712, %v694
    %v947 = vpack.c.b16 %v713, %v695
    %v948 = vpack.c.b16 %v714, %v696
    %v949 = vpack.c.b16 %v715, %v697
    %v950 = vpack.c.b16 %v716, %v698
    %v951 = vpack.c.b16 %v717, %v699
    %v952 = vpack.c.b16 %v718, %v700
    %v953 = vpack.c.b16 %v719, %v701
    %v954 = vpack.c.b16 %v720, %v702
    %v955 = vpack.c.b16 %v721, %v703
    %v956 = vpack.c.b16 %v722, %v704
    %v957 = vpack.c.b16 %v723, %v705
    %v958 = vpack.c.b16 %v742, %v724
    %v959 = vpack.c.b16 %v743, %v725
    %v960 = vpack.c.b16 %v744, %v726
    %v961 = vpack.c.b16 %v745, %v727
    %v962 = vpack.c.b16 %v746, %v728
    %v963 = vpack.c.b16 %v747, %v729
    %v964 = vpack.c.b16 %v748, %v730
    %v965 = vpack.c.b16 %v749, %v731
    %v966 = vpack.c.b16 %v750, %v732
    %v967 = vpack.c.b16 %v751, %v733
    %v968 = vpack.c.b16 %v752, %v734
    %v969 = vpack.c.b16 %v753, %v735
    %v970 = vpack.c.b16 %v754, %v736
    %v971 = vpack.c.b16 %v755, %v737
    %v972 = vpack.c.b16 %v756, %v738
    %v973 = vpack.c.b16 %v757, %v739
    %v974 = vpack.c.b16 %v758, %v740
    %v975 = vpack.c.b16 %v759, %v741
    %v976 = vpack.c.b16 %v778, %v760
    %v977 = vpack.c.b16 %v779, %v761
    %v978 = vpack.c.b16 %v780, %v762
    %v979 = vpack.c.b16 %v781, %v763
    %v980 = vpack.c.b16 %v782, %v764
    %v981 = vpack.c.b16 %v783, %v765
    %v982 = vpack.c.b16 %v784, %v766
    %v983 = vpack.c.b16 %v785, %v767
    %v984 = vpack.c.b16 %v786, %v768
    %v985 = vpack.c.b16 %v787, %v769
    %v986 = vpack.c.b16 %v788, %v770
    %v987 = vpack.c.b16 %v789, %v771
    %v988 = vpack.c.b16 %v790, %v772
    %v989 = vpack.c.b16 %v791, %v773
    %v990 = vpack.c.b16 %v792, %v774
    %v991 = vpack.c.b16 %v793, %v775
    %v992 = vpack.c.b16 %v794, %v776
    %v993 = vpack.c.b16 %v795, %v777
    %v994 = vpack.c.b16 %v814, %v796
    %v995 = vpack.c.b16 %v815, %v797
    %v996 = vpack.c.b16 %v816, %v798
    %v997 = vpack.c.b16 %v817, %v799
    %v998 = vpack.c.b16 %v818, %v800
    %v999 = vpack.c.b16 %v819, %v801
    %v1000 = vpack.c.b16 %v820, %v802
    %v1001 = vpack.c.b16 %v821, %v803
    %v1002 = vpack.c.b16 %v822, %v804
    %v1003 = vpack.c.b16 %v823, %v805
    %v1004 = vpack.c.b16 %v824, %v806
    %v1005 = vpack.c.b16 %v825, %v807
    %v1006 = vpack.c.b16 %v826, %v808
    %v1007 = vpack.c.b16 %v827, %v809
    %v1008 = vpack.c.b16 %v828, %v810
    %v1009 = vpack.c.b16 %v829, %v811
    %v1010 = vpack.c.b16 %v830, %v812
    %v1011 = vpack.c.b16 %v831, %v813
    %v1012 = vpack.c.b16 %v850, %v832
    %v1013 = vpack.c.b16 %v851, %v833
    %v1014 = vpack.c.b16 %v852, %v834
    %v1015 = vpack.c.b16 %v853, %v835
    %v1016 = vpack.c.b16 %v854, %v836
    %v1017 = vpack.c.b16 %v855, %v837
    %v1018 = vpack.c.b16 %v856, %v838
    %v1019 = vpack.c.b16 %v857, %v839
    %v1020 = vpack.c.b16 %v858, %v840
    %v1021 = vpack.c.b16 %v859, %v841
    %v1022 = vpack.c.b16 %v860, %v842
    %v1023 = vpack.c.b16 %v861, %v843
    %v1024 = vpack.c.b16 %v862, %v844
    %v1025 = vpack.c.b16 %v863, %v845
    %v1026 = vpack.c.b16 %v864, %v846
    %v1027 = vpack.c.b16 %v865, %v847
    %v1028 = vpack.c.b16 %v866, %v848
    %v1029 = vpack.c.b16 %v867, %v849
    %v1030 = vpack.c.b16 %v886, %v868
    %v1031 = vpack.c.b16 %v887, %v869
    %v1032 = vpack.c.b16 %v888, %v870
    %v1033 = vpack.c.b16 %v889, %v871
    %v1034 = vpack.c.b16 %v890, %v872
    %v1035 = vpack.c.b16 %v891, %v873
    %v1036 = vpack.c.b16 %v892, %v874
    %v1037 = vpack.c.b16 %v893, %v875
    %v1038 = vpack.c.b16 %v894, %v876
    %v1039 = vpack.c.b16 %v895, %v877
    %v1040 = vpack.c.b16 %v896, %v878
    %v1041 = vpack.c.b16 %v897, %v879
    %v1042 = vpack.c.b16 %v898, %v880
    %v1043 = vpack.c.b16 %v899, %v881
    %v1044 = vpack.c.b16 %v900, %v882
    %v1045 = vpack.c.b16 %v901, %v883
    %v1046 = vpack.c.b16 %v902, %v884
    %v1047 = vpack.c.b16 %v903, %v885
    %v1480 = vunpack.c.l.b16 %v184
    %v1481 = vunpack.c.h.b16 %v184
    %v1482 = vunpack.c.l.b16 %v185
    %v1483 = vunpack.c.h.b16 %v185
    %v1484 = vunpack.c.l.b16 %v186
    %v1485 = vunpack.c.h.b16 %v186
    %v1486 = vunpack.c.l.b16 %v187
    %v1487 = vunpack.c.h.b16 %v187
    %v1488 = vunpack.c.l.b16 %v188
    %v1489 = vunpack.c.h.b16 %v188
    %v1490 = vunpack.c.l.b16 %v189
    %v1491 = vunpack.c.h.b16 %v189
    %v1492 = vunpack.c.l.b16 %v190
    %v1493 = vunpack.c.h.b16 %v190
    %v1494 = vunpack.c.l.b16 %v191
    %v1495 = vunpack.c.h.b16 %v191
    %v1496 = vunpack.c.l.b16 %v192
    %v1497 = vunpack.c.h.b16 %v192
    %v1498 = vunpack.c.l.b16 %v193
    %v1499 = vunpack.c.h.b16 %v193
    %v1500 = vunpack.c.l.b16 %v194
    %v1501 = vunpack.c.h.b16 %v194
    %v1502 = vunpack.c.l.b16 %v195
    %v1503 = vunpack.c.h.b16 %v195
    %v1504 = vunpack.c.l.b16 %v196
    %v1505 = vunpack.c.h.b16 %v196
    %v1506 = vunpack.c.l.b16 %v197
    %v1507 = vunpack.c.h.b16 %v197
    %v1508 = vunpack.c.l.b16 %v198
    %v1509 = vunpack.c.h.b16 %v198
    %v1510 = vunpack.c.l.b16 %v199
    %v1511 = vunpack.c.h.b16 %v199
    %v1512 = vunpack.c.l.b16 %v200
    %v1513 = vunpack.c.h.b16 %v200
    %v1514 = vunpack.c.l.b16 %v201
    %v1515 = vunpack.c.h.b16 %v201
    %v1516 = vunpack.c.l.b16 %v202
    %v1517 = vunpack.c.h.b16 %v202
    %v1518 = vunpack.c.l.b16 %v203
    %v1519 = vunpack.c.h.b16 %v203
    %v1520 = vunpack.c.l.b16 %v204
    %v1521 = vunpack.c.h.b16 %v204
    %v1522 = vunpack.c.l.b16 %v205
    %v1523 = vunpack.c.h.b16 %v205
    %v1524 = vunpack.c.l.b16 %v206
    %v1525 = vunpack.c.h.b16 %v206
    %v1526 = vunpack.c.l.b16 %v207
    %v1527 = vunpack.c.h.b16 %v207
    %v1528 = vunpack.c.l.b16 %v208
    %v1529 = vunpack.c.h.b16 %v208
    %v1530 = vunpack.c.l.b16 %v209
    %v1531 = vunpack.c.h.b16 %v209
    %v1532 = vunpack.c.l.b16 %v210
    %v1533 = vunpack.c.h.b16 %v210
    %v1534 = vunpack.c.l.b16 %v211
    %v1535 = vunpack.c.h.b16 %v211
    %v1536 = vunpack.c.l.b16 %v212
    %v1537 = vunpack.c.h.b16 %v212
    %v1538 = vunpack.c.l.b16 %v213
    %v1539 = vunpack.c.h.b16 %v213
    %v1540 = vunpack.c.l.b16 %v214
    %v1541 = vunpack.c.h.b16 %v214
    %v1542 = vunpack.c.l.b16 %v215
    %v1543 = vunpack.c.h.b16 %v215
    %v1544 = vunpack.c.l.b16 %v216
    %v1545 = vunpack.c.h.b16 %v216
    %v1546 = vunpack.c.l.b16 %v217
    %v1547 = vunpack.c.h.b16 %v217
    %v1548 = vunpack.c.l.b16 %v218
    %v1549 = vunpack.c.h.b16 %v218
    %v1550 = vunpack.c.l.b16 %v219
    %v1551 = vunpack.c.h.b16 %v219
    %v1552 = vunpack.c.l.b16 %v220
    %v1553 = vunpack.c.h.b16 %v220
    %v1554 = vunpack.c.l.b16 %v221
    %v1555 = vunpack.c.h.b16 %v221
    %v1556 = vunpack.c.l.b16 %v222
    %v1557 = vunpack.c.h.b16 %v222
    %v1558 = vunpack.c.l.b16 %v223
    %v1559 = vunpack.c.h.b16 %v223
    %v1560 = vunpack.c.l.b16 %v224
    %v1561 = vunpack.c.h.b16 %v224
    %v1562 = vunpack.c.l.b16 %v225
    %v1563 = vunpack.c.h.b16 %v225
    %v1564 = vunpack.c.l.b16 %v226
    %v1565 = vunpack.c.h.b16 %v226
    %v1566 = vunpack.c.l.b16 %v227
    %v1567 = vunpack.c.h.b16 %v227
    %v1568 = vunpack.c.l.b16 %v228
    %v1569 = vunpack.c.h.b16 %v228
    %v1570 = vunpack.c.l.b16 %v229
    %v1571 = vunpack.c.h.b16 %v229
    %v1572 = vunpack.c.l.b16 %v230
    %v1573 = vunpack.c.h.b16 %v230
    %v1574 = vunpack.c.l.b16 %v231
    %v1575 = vunpack.c.h.b16 %v231
    %v1576 = vunpack.c.l.b16 %v232
    %v1577 = vunpack.c.h.b16 %v232
    %v1578 = vunpack.c.l.b16 %v233
    %v1579 = vunpack.c.h.b16 %v233
    %v1580 = vunpack.c.l.b16 %v234
    %v1581 = vunpack.c.h.b16 %v234
    %v1582 = vunpack.c.l.b16 %v235
    %v1583 = vunpack.c.h.b16 %v235
    %v1584 = vunpack.c.l.b16 %v236
    %v1585 = vunpack.c.h.b16 %v236
    %v1586 = vunpack.c.l.b16 %v237
    %v1587 = vunpack.c.h.b16 %v237
    %v1588 = vunpack.c.l.b16 %v238
    %v1589 = vunpack.c.h.b16 %v238
    %v1590 = vunpack.c.l.b16 %v239
    %v1591 = vunpack.c.h.b16 %v239
    %v1592 = vunpack.c.l.b16 %v240
    %v1593 = vunpack.c.h.b16 %v240
    %v1594 = vunpack.c.l.b16 %v241
    %v1595 = vunpack.c.h.b16 %v241
    %v1596 = vunpack.c.l.b16 %v242
    %v1597 = vunpack.c.h.b16 %v242
    %v1598 = vunpack.c.l.b16 %v243
    %v1599 = vunpack.c.h.b16 %v243
    %v1600 = vunpack.c.l.b16 %v244
    %v1601 = vunpack.c.h.b16 %v244
    %v1602 = vunpack.c.l.b16 %v245
    %v1603 = vunpack.c.h.b16 %v245
    %v1604 = vunpack.c.l.b16 %v246
    %v1605 = vunpack.c.h.b16 %v246
    %v1606 = vunpack.c.l.b16 %v247
    %v1607 = vunpack.c.h.b16 %v247
    %v1608 = vunpack.c.l.b16 %v248
    %v1609 = vunpack.c.h.b16 %v248
    %v1610 = vunpack.c.l.b16 %v249
    %v1611 = vunpack.c.h.b16 %v249
    %v1612 = vunpack.c.l.b16 %v250
    %v1613 = vunpack.c.h.b16 %v250
    %v1614 = vunpack.c.l.b16 %v251
    %v1615 = vunpack.c.h.b16 %v251
    %v1616 = vunpack.c.l.b16 %v252
    %v1617 = vunpack.c.h.b16 %v252
    %v1618 = vunpack.c.l.b16 %v253
    %v1619 = vunpack.c.h.b16 %v253
    %v1620 = vunpack.c.l.b16 %v254
    %v1621 = vunpack.c.h.b16 %v254
    %v1622 = vunpack.c.l.b16 %v255
    %v1623 = vunpack.c.h.b16 %v255
    %v1624 = vunpack.c.l.b16 %v256
    %v1625 = vunpack.c.h.b16 %v256
    %v1626 = vunpack.c.l.b16 %v257
    %v1627 = vunpack.c.h.b16 %v257
    %v1628 = vunpack.c.l.b16 %v258
    %v1629 = vunpack.c.h.b16 %v258
    %v1630 = vunpack.c.l.b16 %v259
    %v1631 = vunpack.c.h.b16 %v259
    %v1632 = vunpack.c.l.b16 %v260
    %v1633 = vunpack.c.h.b16 %v260
    %v1634 = vunpack.c.l.b16 %v261
    %v1635 = vunpack.c.h.b16 %v261
    %v1636 = vunpack.c.l.b16 %v262
    %v1637 = vunpack.c.h.b16 %v262
    %v1638 = vunpack.c.l.b16 %v263
    %v1639 = vunpack.c.h.b16 %v263
    %v1640 = vunpack.c.l.b16 %v264
    %v1641 = vunpack.c.h.b16 %v264
    %v1642 = vunpack.c.l.b16 %v265
    %v1643 = vunpack.c.h.b16 %v265
    %v1644 = vunpack.c.l.b16 %v266
    %v1645 = vunpack.c.h.b16 %v266
    %v1646 = vunpack.c.l.b16 %v267
    %v1647 = vunpack.c.h.b16 %v267
    %v1648 = vunpack.c.l.b16 %v268
    %v1649 = vunpack.c.h.b16 %v268
    %v1650 = vunpack.c.l.b16 %v269
    %v1651 = vunpack.c.h.b16 %v269
    %v1652 = vunpack.c.l.b16 %v270
    %v1653 = vunpack.c.h.b16 %v270
    %v1654 = vunpack.c.l.b16 %v271
    %v1655 = vunpack.c.h.b16 %v271
    %v1656 = vunpack.c.l.b16 %v272
    %v1657 = vunpack.c.h.b16 %v272
    %v1658 = vunpack.c.l.b16 %v273
    %v1659 = vunpack.c.h.b16 %v273
    %v1660 = vunpack.c.l.b16 %v274
    %v1661 = vunpack.c.h.b16 %v274
    %v1662 = vunpack.c.l.b16 %v275
    %v1663 = vunpack.c.h.b16 %v275
    %v1664 = vunpack.c.l.b16 %v276
    %v1665 = vunpack.c.h.b16 %v276
    %v1666 = vunpack.c.l.b16 %v277
    %v1667 = vunpack.c.h.b16 %v277
    %v1668 = vunpack.c.l.b16 %v278
    %v1669 = vunpack.c.h.b16 %v278
    %v1670 = vunpack.c.l.b16 %v279
    %v1671 = vunpack.c.h.b16 %v279
    %v1672 = vunpack.c.l.b16 %v280
    %v1673 = vunpack.c.h.b16 %v280
    %v1674 = vunpack.c.l.b16 %v281
    %v1675 = vunpack.c.h.b16 %v281
    %v1676 = vunpack.c.l.b16 %v282
    %v1677 = vunpack.c.h.b16 %v282
    %v1678 = vunpack.c.l.b16 %v283
    %v1679 = vunpack.c.h.b16 %v283
    %v1680 = vunpack.c.l.b16 %v284
    %v1681 = vunpack.c.h.b16 %v284
    %v1682 = vunpack.c.l.b16 %v285
    %v1683 = vunpack.c.h.b16 %v285
    %v1684 = vunpack.c.l.b16 %v286
    %v1685 = vunpack.c.h.b16 %v286
    %v1686 = vunpack.c.l.b16 %v287
    %v1687 = vunpack.c.h.b16 %v287
    %v1688 = vunpack.c.l.b16 %v288
    %v1689 = vunpack.c.h.b16 %v288
    %v1690 = vunpack.c.l.b16 %v289
    %v1691 = vunpack.c.h.b16 %v289
    %v1692 = vunpack.c.l.b16 %v290
    %v1693 = vunpack.c.h.b16 %v290
    %v1694 = vunpack.c.l.b16 %v291
    %v1695 = vunpack.c.h.b16 %v291
    %v1696 = vunpack.c.l.b16 %v292
    %v1697 = vunpack.c.h.b16 %v292
    %v1698 = vunpack.c.l.b16 %v293
    %v1699 = vunpack.c.h.b16 %v293
    %v1700 = vunpack.c.l.b16 %v294
    %v1701 = vunpack.c.h.b16 %v294
    %v1702 = vunpack.c.l.b16 %v295
    %v1703 = vunpack.c.h.b16 %v295
    %v1704 = vunpack.c.l.b16 %v296
    %v1705 = vunpack.c.h.b16 %v296
    %v1706 = vunpack.c.l.b16 %v297
    %v1707 = vunpack.c.h.b16 %v297
    %v1708 = vunpack.c.l.b16 %v298
    %v1709 = vunpack.c.h.b16 %v298
    %v1710 = vunpack.c.l.b16 %v299
    %v1711 = vunpack.c.h.b16 %v299
    %v1712 = vunpack.c.l.b16 %v300
    %v1713 = vunpack.c.h.b16 %v300
    %v1714 = vunpack.c.l.b16 %v301
    %v1715 = vunpack.c.h.b16 %v301
    %v1716 = vunpack.c.l.b16 %v302
    %v1717 = vunpack.c.h.b16 %v302
    %v1718 = vunpack.c.l.b16 %v303
    %v1719 = vunpack.c.h.b16 %v303
    %v1720 = vunpack.c.l.b16 %v304
    %v1721 = vunpack.c.h.b16 %v304
    %v1722 = vunpack.c.l.b16 %v305
    %v1723 = vunpack.c.h.b16 %v305
    %v1724 = vunpack.c.l.b16 %v306
    %v1725 = vunpack.c.h.b16 %v306
    %v1726 = vunpack.c.l.b16 %v307
    %v1727 = vunpack.c.h.b16 %v307
    %v1728 = vunpack.c.l.b16 %v308
    %v1729 = vunpack.c.h.b16 %v308
    %v1730 = vunpack.c.l.b16 %v309
    %v1731 = vunpack.c.h.b16 %v309
    %v1732 = vunpack.c.l.b16 %v310
    %v1733 = vunpack.c.h.b16 %v310
    %v1734 = vunpack.c.l.b16 %v311
    %v1735 = vunpack.c.h.b16 %v311
    %v1736 = vunpack.c.l.b16 %v312
    %v1737 = vunpack.c.h.b16 %v312
    %v1738 = vunpack.c.l.b16 %v313
    %v1739 = vunpack.c.h.b16 %v313
    %v1740 = vunpack.c.l.b16 %v314
    %v1741 = vunpack.c.h.b16 %v314
    %v1742 = vunpack.c.l.b16 %v315
    %v1743 = vunpack.c.h.b16 %v315
    %v1744 = vunpack.c.l.b16 %v316
    %v1745 = vunpack.c.h.b16 %v316
    %v1746 = vunpack.c.l.b16 %v317
    %v1747 = vunpack.c.h.b16 %v317
    %v1748 = vunpack.c.l.b16 %v318
    %v1749 = vunpack.c.h.b16 %v318
    %v1750 = vunpack.c.l.b16 %v319
    %v1751 = vunpack.c.h.b16 %v319
    %v1752 = vunpack.c.l.b16 %v320
    %v1753 = vunpack.c.h.b16 %v320
    %v1754 = vunpack.c.l.b16 %v321
    %v1755 = vunpack.c.h.b16 %v321
    %v1756 = vunpack.c.l.b16 %v322
    %v1757 = vunpack.c.h.b16 %v322
    %v1758 = vunpack.c.l.b16 %v323
    %v1759 = vunpack.c.h.b16 %v323
    %v1760 = vunpack.c.l.b16 %v324
    %v1761 = vunpack.c.h.b16 %v324
    %v1762 = vunpack.c.l.b16 %v325
    %v1763 = vunpack.c.h.b16 %v325
    %v1764 = vunpack.c.l.b16 %v326
    %v1765 = vunpack.c.h.b16 %v326
    %v1766 = vunpack.c.l.b16 %v327
    %v1767 = vunpack.c.h.b16 %v327
    %v1768 = vunpack.c.l.b16 %v328
    %v1769 = vunpack.c.h.b16 %v328
    %v1770 = vunpack.c.l.b16 %v329
    %v1771 = vunpack.c.h.b16 %v329
    %v1772 = vunpack.c.l.b16 %v330
    %v1773 = vunpack.c.h.b16 %v330
    %v1774 = vunpack.c.l.b16 %v331
    %v1775 = vunpack.c.h.b16 %v331
    %v1776 = vunpack.c.l.b16 %v332
    %v1777 = vunpack.c.h.b16 %v332
    %v1778 = vunpack.c.l.b16 %v333
    %v1779 = vunpack.c.h.b16 %v333
    %v1780 = vunpack.c.l.b16 %v334
    %v1781 = vunpack.c.h.b16 %v334
    %v1782 = vunpack.c.l.b16 %v335
    %v1783 = vunpack.c.h.b16 %v335
    %v1784 = vunpack.c.l.b16 %v336
    %v1785 = vunpack.c.h.b16 %v336
    %v1786 = vunpack.c.l.b16 %v337
    %v1787 = vunpack.c.h.b16 %v337
    %v1788 = vunpack.c.l.b16 %v338
    %v1789 = vunpack.c.h.b16 %v338
    %v1790 = vunpack.c.l.b16 %v339
    %v1791 = vunpack.c.h.b16 %v339
    %v1792 = vunpack.c.l.b16 %v340
    %v1793 = vunpack.c.h.b16 %v340
    %v1794 = vunpack.c.l.b16 %v341
    %v1795 = vunpack.c.h.b16 %v341
    %v1796 = vunpack.c.l.b16 %v342
    %v1797 = vunpack.c.h.b16 %v342
    %v1798 = vunpack.c.l.b16 %v343
    %v1799 = vunpack.c.h.b16 %v343
    %v1800 = vunpack.c.l.b16 %v344
    %v1801 = vunpack.c.h.b16 %v344
    %v1802 = vunpack.c.l.b16 %v345
    %v1803 = vunpack.c.h.b16 %v345
    %v1804 = vunpack.c.l.b16 %v346
    %v1805 = vunpack.c.h.b16 %v346
    %v1806 = vunpack.c.l.b16 %v347
    %v1807 = vunpack.c.h.b16 %v347
    %v1808 = vunpack.c.l.b16 %v348
    %v1809 = vunpack.c.h.b16 %v348
    %v1810 = vunpack.c.l.b16 %v349
    %v1811 = vunpack.c.h.b16 %v349
    %v1812 = vunpack.c.l.b16 %v350
    %v1813 = vunpack.c.h.b16 %v350
    %v1814 = vunpack.c.l.b16 %v351
    %v1815 = vunpack.c.h.b16 %v351
    %v1816 = vunpack.c.l.b16 %v352
    %v1817 = vunpack.c.h.b16 %v352
    %v1818 = vunpack.c.l.b16 %v353
    %v1819 = vunpack.c.h.b16 %v353
    %v1820 = vunpack.c.l.b16 %v354
    %v1821 = vunpack.c.h.b16 %v354
    %v1822 = vunpack.c.l.b16 %v355
    %v1823 = vunpack.c.h.b16 %v355
    %v1824 = vunpack.c.l.b16 %v356
    %v1825 = vunpack.c.h.b16 %v356
    %v1826 = vunpack.c.l.b16 %v357
    %v1827 = vunpack.c.h.b16 %v357
    %v1828 = vunpack.c.l.b16 %v358
    %v1829 = vunpack.c.h.b16 %v358
    %v1830 = vunpack.c.l.b16 %v359
    %v1831 = vunpack.c.h.b16 %v359
    %v1832 = vunpack.c.l.b16 %v360
    %v1833 = vunpack.c.h.b16 %v360
    %v1834 = vunpack.c.l.b16 %v361
    %v1835 = vunpack.c.h.b16 %v361
    %v1836 = vunpack.c.l.b16 %v362
    %v1837 = vunpack.c.h.b16 %v362
    %v1838 = vunpack.c.l.b16 %v363
    %v1839 = vunpack.c.h.b16 %v363
    %v1840 = vunpack.c.l.b16 %v364
    %v1841 = vunpack.c.h.b16 %v364
    %v1842 = vunpack.c.l.b16 %v365
    %v1843 = vunpack.c.h.b16 %v365
    %v1844 = vunpack.c.l.b16 %v366
    %v1845 = vunpack.c.h.b16 %v366
    %v1846 = vunpack.c.l.b16 %v367
    %v1847 = vunpack.c.h.b16 %v367
    %v1848 = vunpack.c.l.b16 %v368
    %v1849 = vunpack.c.h.b16 %v368
    %v1850 = vunpack.c.l.b16 %v369
    %v1851 = vunpack.c.h.b16 %v369
    %v1852 = vunpack.c.l.b16 %v370
    %v1853 = vunpack.c.h.b16 %v370
    %v1854 = vunpack.c.l.b16 %v371
    %v1855 = vunpack.c.h.b16 %v371
    %v1856 = vunpack.c.l.b16 %v372
    %v1857 = vunpack.c.h.b16 %v372
    %v1858 = vunpack.c.l.b16 %v373
    %v1859 = vunpack.c.h.b16 %v373
    %v1860 = vunpack.c.l.b16 %v374
    %v1861 = vunpack.c.h.b16 %v374
    %v1862 = vunpack.c.l.b16 %v375
    %v1863 = vunpack.c.h.b16 %v375
    %v1864 = vunpack.c.l.b16 %v376
    %v1865 = vunpack.c.h.b16 %v376
    %v1866 = vunpack.c.l.b16 %v377
    %v1867 = vunpack.c.h.b16 %v377
    %v1868 = vunpack.c.l.b16 %v378
    %v1869 = vunpack.c.h.b16 %v378
    %v1870 = vunpack.c.l.b16 %v379
    %v1871 = vunpack.c.h.b16 %v379
    %v1872 = vunpack.c.l.b16 %v380
    %v1873 = vunpack.c.h.b16 %v380
    %v1874 = vunpack.c.l.b16 %v381
    %v1875 = vunpack.c.h.b16 %v381
    %v1876 = vunpack.c.l.b16 %v382
    %v1877 = vunpack.c.h.b16 %v382
    %v1878 = vunpack.c.l.b16 %v383
    %v1879 = vunpack.c.h.b16 %v383
    %v1880 = vunpack.c.l.b16 %v384
    %v1881 = vunpack.c.h.b16 %v384
    %v1882 = vunpack.c.l.b16 %v385
    %v1883 = vunpack.c.h.b16 %v385
    %v1884 = vunpack.c.l.b16 %v386
    %v1885 = vunpack.c.h.b16 %v386
    %v1886 = vunpack.c.l.b16 %v387
    %v1887 = vunpack.c.h.b16 %v387
    %v1888 = vunpack.c.l.b16 %v388
    %v1889 = vunpack.c.h.b16 %v388
    %v1890 = vunpack.c.l.b16 %v389
    %v1891 = vunpack.c.h.b16 %v389
    %v1892 = vunpack.c.l.b16 %v390
    %v1893 = vunpack.c.h.b16 %v390
    %v1894 = vunpack.c.l.b16 %v391
    %v1895 = vunpack.c.h.b16 %v391
    %v1896 = vunpack.c.l.b16 %v392
    %v1897 = vunpack.c.h.b16 %v392
    %v1898 = vunpack.c.l.b16 %v393
    %v1899 = vunpack.c.h.b16 %v393
    %v1900 = vunpack.c.l.b16 %v394
    %v1901 = vunpack.c.h.b16 %v394
    %v1902 = vunpack.c.l.b16 %v395
    %v1903 = vunpack.c.h.b16 %v395
    %v1904 = vunpack.c.l.b16 %v396
    %v1905 = vunpack.c.h.b16 %v396
    %v1906 = vunpack.c.l.b16 %v397
    %v1907 = vunpack.c.h.b16 %v397
    %v1908 = vunpack.c.l.b16 %v398
    %v1909 = vunpack.c.h.b16 %v398
    %v1910 = vunpack.c.l.b16 %v399
    %v1911 = vunpack.c.h.b16 %v399
    %v1912 = vunpack.c.l.b16 %v400
    %v1913 = vunpack.c.h.b16 %v400
    %v1914 = vunpack.c.l.b16 %v401
    %v1915 = vunpack.c.h.b16 %v401
    %v1916 = vunpack.c.l.b16 %v402
    %v1917 = vunpack.c.h.b16 %v402
    %v1918 = vunpack.c.l.b16 %v403
    %v1919 = vunpack.c.h.b16 %v403
    %v1920 = vunpack.c.l.b16 %v404
    %v1921 = vunpack.c.h.b16 %v404
    %v1922 = vunpack.c.l.b16 %v405
    %v1923 = vunpack.c.h.b16 %v405
    %v1924 = vunpack.c.l.b16 %v406
    %v1925 = vunpack.c.h.b16 %v406
    %v1926 = vunpack.c.l.b16 %v407
    %v1927 = vunpack.c.h.b16 %v407
    %v1928 = vunpack.c.l.b16 %v408
    %v1929 = vunpack.c.h.b16 %v408
    %v1930 = vunpack.c.l.b16 %v409
    %v1931 = vunpack.c.h.b16 %v409
    %v1932 = vunpack.c.l.b16 %v410
    %v1933 = vunpack.c.h.b16 %v410
    %v1934 = vunpack.c.l.b16 %v411
    %v1935 = vunpack.c.h.b16 %v411
    %v1936 = vunpack.c.l.b16 %v412
    %v1937 = vunpack.c.h.b16 %v412
    %v1938 = vunpack.c.l.b16 %v413
    %v1939 = vunpack.c.h.b16 %v413
    %v1940 = vunpack.c.l.b16 %v414
    %v1941 = vunpack.c.h.b16 %v414
    %v1942 = vunpack.c.l.b16 %v415
    %v1943 = vunpack.c.h.b16 %v415
    %v1944 = vunpack.c.l.b16 %v416
    %v1945 = vunpack.c.h.b16 %v416
    %v1946 = vunpack.c.l.b16 %v417
    %v1947 = vunpack.c.h.b16 %v417
    %v1948 = vunpack.c.l.b16 %v418
    %v1949 = vunpack.c.h.b16 %v418
    %v1950 = vunpack.c.l.b16 %v419
    %v1951 = vunpack.c.h.b16 %v419
    %v1952 = vunpack.c.l.b16 %v420
    %v1953 = vunpack.c.h.b16 %v420
    %v1954 = vunpack.c.l.b16 %v421
    %v1955 = vunpack.c.h.b16 %v421
    %v1956 = vunpack.c.l.b16 %v422
    %v1957 = vunpack.c.h.b16 %v422
    %v1958 = vunpack.c.l.b16 %v423
    %v1959 = vunpack.c.h.b16 %v423
    %v1960 = vunpack.c.l.b16 %v424
    %v1961 = vunpack.c.h.b16 %v424
    %v1962 = vunpack.c.l.b16 %v425
    %v1963 = vunpack.c.h.b16 %v425
    %v1964 = vunpack.c.l.b16 %v426
    %v1965 = vunpack.c.h.b16 %v426
    %v1966 = vunpack.c.l.b16 %v427
    %v1967 = vunpack.c.h.b16 %v427
    %v1968 = vunpack.c.l.b16 %v428
    %v1969 = vunpack.c.h.b16 %v428
    %v1970 = vunpack.c.l.b16 %v429
    %v1971 = vunpack.c.h.b16 %v429
    %v1972 = vunpack.c.l.b16 %v430
    %v1973 = vunpack.c.h.b16 %v430
    %v1974 = vunpack.c.l.b16 %v431
    %v1975 = vunpack.c.h.b16 %v431
    %v1976 = vunpack.c.l.b16 %v432
    %v1977 = vunpack.c.h.b16 %v432
    %v1978 = vunpack.c.l.b16 %v433
    %v1979 = vunpack.c.h.b16 %v433
    %v1980 = vunpack.c.l.b16 %v434
    %v1981 = vunpack.c.h.b16 %v434
    %v1982 = vunpack.c.l.b16 %v435
    %v1983 = vunpack.c.h.b16 %v435
    %v1984 = vunpack.c.l.b16 %v436
    %v1985 = vunpack.c.h.b16 %v436
    %v1986 = vunpack.c.l.b16 %v437
    %v1987 = vunpack.c.h.b16 %v437
    %v1988 = vunpack.c.l.b16 %v438
    %v1989 = vunpack.c.h.b16 %v438
    %v1990 = vunpack.c.l.b16 %v439
    %v1991 = vunpack.c.h.b16 %v439
    %v1992 = vunpack.c.l.b16 %v440
    %v1993 = vunpack.c.h.b16 %v440
    %v1994 = vunpack.c.l.b16 %v441
    %v1995 = vunpack.c.h.b16 %v441
    %v1996 = vunpack.c.l.b16 %v442
    %v1997 = vunpack.c.h.b16 %v442
    %v1998 = vunpack.c.l.b16 %v443
    %v1999 = vunpack.c.h.b16 %v443
    %v2000 = vunpack.c.l.b16 %v444
    %v2001 = vunpack.c.h.b16 %v444
    %v2002 = vunpack.c.l.b16 %v445
    %v2003 = vunpack.c.h.b16 %v445
    %v2004 = vunpack.c.l.b16 %v446
    %v2005 = vunpack.c.h.b16 %v446
    %v2006 = vunpack.c.l.b16 %v447
    %v2007 = vunpack.c.h.b16 %v447
    %v2008 = vunpack.c.l.b16 %v448
    %v2009 = vunpack.c.h.b16 %v448
    %v2010 = vunpack.c.l.b16 %v449
    %v2011 = vunpack.c.h.b16 %v449
    %v2012 = vunpack.c.l.b16 %v450
    %v2013 = vunpack.c.h.b16 %v450
    %v2014 = vunpack.c.l.b16 %v451
    %v2015 = vunpack.c.h.b16 %v451
    %v2016 = vunpack.c.l.b16 %v452
    %v2017 = vunpack.c.h.b16 %v452
    %v2018 = vunpack.c.l.b16 %v453
    %v2019 = vunpack.c.h.b16 %v453
    %v2020 = vunpack.c.l.b16 %v454
    %v2021 = vunpack.c.h.b16 %v454
    %v2022 = vunpack.c.l.b16 %v455
    %v2023 = vunpack.c.h.b16 %v455
    %v2024 = vunpack.c.l.b16 %v456
    %v2025 = vunpack.c.h.b16 %v456
    %v2026 = vunpack.c.l.b16 %v457
    %v2027 = vunpack.c.h.b16 %v457
    %v2028 = vunpack.c.l.b16 %v458
    %v2029 = vunpack.c.h.b16 %v458
    %v2030 = vunpack.c.l.b16 %v459
    %v2031 = vunpack.c.h.b16 %v459
    %v2032 = vunpack.c.l.b16 %v460
    %v2033 = vunpack.c.h.b16 %v460
    %v2034 = vunpack.c.l.b16 %v461
    %v2035 = vunpack.c.h.b16 %v461
    %v2036 = vunpack.c.l.b16 %v462
    %v2037 = vunpack.c.h.b16 %v462
    %v2038 = vunpack.c.l.b16 %v463
    %v2039 = vunpack.c.h.b16 %v463
    %v2040 = vunpack.c.l.b16 %v464
    %v2041 = vunpack.c.h.b16 %v464
    %v2042 = vunpack.c.l.b16 %v465
    %v2043 = vunpack.c.h.b16 %v465
    %v2044 = vunpack.c.l.b16 %v466
    %v2045 = vunpack.c.h.b16 %v466
    %v2046 = vunpack.c.l.b16 %v467
    %v2047 = vunpack.c.h.b16 %v467
    %v2048 = vunpack.c.l.b16 %v468
    %v2049 = vunpack.c.h.b16 %v468
    %v2050 = vunpack.c.l.b16 %v469
    %v2051 = vunpack.c.h.b16 %v469
    %v2052 = vunpack.c.l.b16 %v470
    %v2053 = vunpack.c.h.b16 %v470
    %v2054 = vunpack.c.l.b16 %v471
    %v2055 = vunpack.c.h.b16 %v471
    %v2056 = vpack.c.b16 %v1482, %v1480
    %v2057 = vpack.c.b16 %v1483, %v1481
    %v2058 = vpack.c.b16 %v1486, %v1484
    %v2059 = vpack.c.b16 %v1487, %v1485
    %v2060 = vpack.c.b16 %v1490, %v1488
    %v2061 = vpack.c.b16 %v1491, %v1489
    %v2062 = vpack.c.b16 %v1494, %v1492
    %v2063 = vpack.c.b16 %v1495, %v1493
    %v2064 = vpack.c.b16 %v1498, %v1496
    %v2065 = vpack.c.b16 %v1499, %v1497
    %v2066 = vpack.c.b16 %v1502, %v1500
    %v2067 = vpack.c.b16 %v1503, %v1501
    %v2068 = vpack.c.b16 %v1506, %v1504
    %v2069 = vpack.c.b16 %v1507, %v1505
    %v2070 = vpack.c.b16 %v1510, %v1508
    %v2071 = vpack.c.b16 %v1511, %v1509
    %v2072 = vpack.c.b16 %v1514, %v1512
    %v2073 = vpack.c.b16 %v1515, %v1513
    %v2074 = vpack.c.b16 %v1518, %v1516
    %v2075 = vpack.c.b16 %v1519, %v1517
    %v2076 = vpack.c.b16 %v1522, %v1520
    %v2077 = vpack.c.b16 %v1523, %v1521
    %v2078 = vpack.c.b16 %v1526, %v1524
    %v2079 = vpack.c.b16 %v1527, %v1525
    %v2080 = vpack.c.b16 %v1530, %v1528
    %v2081 = vpack.c.b16 %v1531, %v1529
    %v2082 = vpack.c.b16 %v1534, %v1532
    %v2083 = vpack.c.b16 %v1535, %v1533
    %v2084 = vpack.c.b16 %v1538, %v1536
    %v2085 = vpack.c.b16 %v1539, %v1537
    %v2086 = vpack.c.b16 %v1542, %v1540
    %v2087 = vpack.c.b16 %v1543, %v1541
    %v2088 = vpack.c.b16 %v1546, %v1544
    %v2089 = vpack.c.b16 %v1547, %v1545
    %v2090 = vpack.c.b16 %v1550, %v1548
    %v2091 = vpack.c.b16 %v1551, %v1549
    %v2092 = vpack.c.b16 %v1554, %v1552
    %v2093 = vpack.c.b16 %v1555, %v1553
    %v2094 = vpack.c.b16 %v1558, %v1556
    %v2095 = vpack.c.b16 %v1559, %v1557
    %v2096 = vpack.c.b16 %v1562, %v1560
    %v2097 = vpack.c.b16 %v1563, %v1561
    %v2098 = vpack.c.b16 %v1566, %v1564
    %v2099 = vpack.c.b16 %v1567, %v1565
    %v2100 = vpack.c.b16 %v1570, %v1568
    %v2101 = vpack.c.b16 %v1571, %v1569
    %v2102 = vpack.c.b16 %v1574, %v1572
    %v2103 = vpack.c.b16 %v1575, %v1573
    %v2104 = vpack.c.b16 %v1578, %v1576
    %v2105 = vpack.c.b16 %v1579, %v1577
    %v2106 = vpack.c.b16 %v1582, %v1580
    %v2107 = vpack.c.b16 %v1583, %v1581
    %v2108 = vpack.c.b16 %v1586, %v1584
    %v2109 = vpack.c.b16 %v1587, %v1585
    %v2110 = vpack.c.b16 %v1590, %v1588
    %v2111 = vpack.c.b16 %v1591, %v1589
    %v2112 = vpack.c.b16 %v1594, %v1592
    %v2113 = vpack.c.b16 %v1595, %v1593
    %v2114 = vpack.c.b16 %v1598, %v1596
    %v2115 = vpack.c.b16 %v1599, %v1597
    %v2116 = vpack.c.b16 %v1602, %v1600
    %v2117 = vpack.c.b16 %v1603, %v1601
    %v2118 = vpack.c.b16 %v1606, %v1604
    %v2119 = vpack.c.b16 %v1607, %v1605
    %v2120 = vpack.c.b16 %v1610, %v1608
    %v2121 = vpack.c.b16 %v1611, %v1609
    %v2122 = vpack.c.b16 %v1614, %v1612
    %v2123 = vpack.c.b16 %v1615, %v1613
    %v2124 = vpack.c.b16 %v1618, %v1616
    %v2125 = vpack.c.b16 %v1619, %v1617
    %v2126 = vpack.c.b16 %v1622, %v1620
    %v2127 = vpack.c.b16 %v1623, %v1621
    %v2128 = vpack.c.b16 %v1626, %v1624
    %v2129 = vpack.c.b16 %v1627, %v1625
    %v2130 = vpack.c.b16 %v1630, %v1628
    %v2131 = vpack.c.b16 %v1631, %v1629
    %v2132 = vpack.c.b16 %v1634, %v1632
    %v2133 = vpack.c.b16 %v1635, %v1633
    %v2134 = vpack.c.b16 %v1638, %v1636
    %v2135 = vpack.c.b16 %v1639, %v1637
    %v2136 = vpack.c.b16 %v1642, %v1640
    %v2137 = vpack.c.b16 %v1643, %v1641
    %v2138 = vpack.c.b16 %v1646, %v1644
    %v2139 = vpack.c.b16 %v1647, %v1645
    %v2140 = vpack.c.b16 %v1650, %v1648
    %v2141 = vpack.c.b16 %v1651, %v1649
    %v2142 = vpack.c.b16 %v1654, %v1652
    %v2143 = vpack.c.b16 %v1655, %v1653
    %v2144 = vpack.c.b16 %v1658, %v1656
    %v2145 = vpack.c.b16 %v1659, %v1657
    %v2146 = vpack.c.b16 %v1662, %v1660
    %v2147 = vpack.c.b16 %v1663, %v1661
    %v2148 = vpack.c.b16 %v1666, %v1664
    %v2149 = vpack.c.b16 %v1667, %v1665
    %v2150 = vpack.c.b16 %v1670, %v1668
    %v2151 = vpack.c.b16 %v1671, %v1669
    %v2152 = vpack.c.b16 %v1674, %v1672
    %v2153 = vpack.c.b16 %v1675, %v1673
    %v2154 = vpack.c.b16 %v1678, %v1676
    %v2155 = vpack.c.b16 %v1679, %v1677
    %v2156 = vpack.c.b16 %v1682, %v1680
    %v2157 = vpack.c.b16 %v1683, %v1681
    %v2158 = vpack.c.b16 %v1686, %v1684
    %v2159 = vpack.c.b16 %v1687, %v1685
    %v2160 = vpack.c.b16 %v1690, %v1688
    %v2161 = vpack.c.b16 %v1691, %v1689
    %v2162 = vpack.c.b16 %v1694, %v1692
    %v2163 = vpack.c.b16 %v1695, %v1693
    %v2164 = vpack.c.b16 %v1698, %v1696
    %v2165 = vpack.c.b16 %v1699, %v1697
    %v2166 = vpack.c.b16 %v1702, %v1700
    %v2167 = vpack.c.b16 %v1703, %v1701
    %v2168 = vpack.c.b16 %v1706, %v1704
    %v2169 = vpack.c.b16 %v1707, %v1705
    %v2170 = vpack.c.b16 %v1710, %v1708
    %v2171 = vpack.c.b16 %v1711, %v1709
    %v2172 = vpack.c.b16 %v1714, %v1712
    %v2173 = vpack.c.b16 %v1715, %v1713
    %v2174 = vpack.c.b16 %v1718, %v1716
    %v2175 = vpack.c.b16 %v1719, %v1717
    %v2176 = vpack.c.b16 %v1722, %v1720
    %v2177 = vpack.c.b16 %v1723, %v1721
    %v2178 = vpack.c.b16 %v1726, %v1724
    %v2179 = vpack.c.b16 %v1727, %v1725
    %v2180 = vpack.c.b16 %v1730, %v1728
    %v2181 = vpack.c.b16 %v1731, %v1729
    %v2182 = vpack.c.b16 %v1734, %v1732
    %v2183 = vpack.c.b16 %v1735, %v1733
    %v2184 = vpack.c.b16 %v1738, %v1736
    %v2185 = vpack.c.b16 %v1739, %v1737
    %v2186 = vpack.c.b16 %v1742, %v1740
    %v2187 = vpack.c.b16 %v1743, %v1741
    %v2188 = vpack.c.b16 %v1746, %v1744
    %v2189 = vpack.c.b16 %v1747, %v1745
    %v2190 = vpack.c.b16 %v1750, %v1748
    %v2191 = vpack.c.b16 %v1751, %v1749
    %v2192 = vpack.c.b16 %v1754, %v1752
    %v2193 = vpack.c.b16 %v1755, %v1753
    %v2194 = vpack.c.b16 %v1758, %v1756
    %v2195 = vpack.c.b16 %v1759, %v1757
    %v2196 = vpack.c.b16 %v1762, %v1760
    %v2197 = vpack.c.b16 %v1763, %v1761
    %v2198 = vpack.c.b16 %v1766, %v1764
    %v2199 = vpack.c.b16 %v1767, %v1765
    %v2200 = vpack.c.b16 %v1770, %v1768
    %v2201 = vpack.c.b16 %v1771, %v1769
    %v2202 = vpack.c.b16 %v1774, %v1772
    %v2203 = vpack.c.b16 %v1775, %v1773
    %v2204 = vpack.c.b16 %v1778, %v1776
    %v2205 = vpack.c.b16 %v1779, %v1777
    %v2206 = vpack.c.b16 %v1782, %v1780
    %v2207 = vpack.c.b16 %v1783, %v1781
    %v2208 = vpack.c.b16 %v1786, %v1784
    %v2209 = vpack.c.b16 %v1787, %v1785
    %v2210 = vpack.c.b16 %v1790, %v1788
    %v2211 = vpack.c.b16 %v1791, %v1789
    %v2212 = vpack.c.b16 %v1794, %v1792
    %v2213 = vpack.c.b16 %v1795, %v1793
    %v2214 = vpack.c.b16 %v1798, %v1796
    %v2215 = vpack.c.b16 %v1799, %v1797
    %v2216 = vpack.c.b16 %v1802, %v1800
    %v2217 = vpack.c.b16 %v1803, %v1801
    %v2218 = vpack.c.b16 %v1806, %v1804
    %v2219 = vpack.c.b16 %v1807, %v1805
    %v2220 = vpack.c.b16 %v1810, %v1808
    %v2221 = vpack.c.b16 %v1811, %v1809
    %v2222 = vpack.c.b16 %v1814, %v1812
    %v2223 = vpack.c.b16 %v1815, %v1813
    %v2224 = vpack.c.b16 %v1818, %v1816
    %v2225 = vpack.c.b16 %v1819, %v1817
    %v2226 = vpack.c.b16 %v1822, %v1820
    %v2227 = vpack.c.b16 %v1823, %v1821
    %v2228 = vpack.c.b16 %v1826, %v1824
    %v2229 = vpack.c.b16 %v1827, %v1825
    %v2230 = vpack.c.b16 %v1830, %v1828
    %v2231 = vpack.c.b16 %v1831, %v1829
    %v2232 = vpack.c.b16 %v1834, %v1832
    %v2233 = vpack.c.b16 %v1835, %v1833
    %v2234 = vpack.c.b16 %v1838, %v1836
    %v2235 = vpack.c.b16 %v1839, %v1837
    %v2236 = vpack.c.b16 %v1842, %v1840
    %v2237 = vpack.c.b16 %v1843, %v1841
    %v2238 = vpack.c.b16 %v1846, %v1844
    %v2239 = vpack.c.b16 %v1847, %v1845
    %v2240 = vpack.c.b16 %v1850, %v1848
    %v2241 = vpack.c.b16 %v1851, %v1849
    %v2242 = vpack.c.b16 %v1854, %v1852
    %v2243 = vpack.c.b16 %v1855, %v1853
    %v2244 = vpack.c.b16 %v1858, %v1856
    %v2245 = vpack.c.b16 %v1859, %v1857
    %v2246 = vpack.c.b16 %v1862, %v1860
    %v2247 = vpack.c.b16 %v1863, %v1861
    %v2248 = vpack.c.b16 %v1866, %v1864
    %v2249 = vpack.c.b16 %v1867, %v1865
    %v2250 = vpack.c.b16 %v1870, %v1868
    %v2251 = vpack.c.b16 %v1871, %v1869
    %v2252 = vpack.c.b16 %v1874, %v1872
    %v2253 = vpack.c.b16 %v1875, %v1873
    %v2254 = vpack.c.b16 %v1878, %v1876
    %v2255 = vpack.c.b16 %v1879, %v1877
    %v2256 = vpack.c.b16 %v1882, %v1880
    %v2257 = vpack.c.b16 %v1883, %v1881
    %v2258 = vpack.c.b16 %v1886, %v1884
    %v2259 = vpack.c.b16 %v1887, %v1885
    %v2260 = vpack.c.b16 %v1890, %v1888
    %v2261 = vpack.c.b16 %v1891, %v1889
    %v2262 = vpack.c.b16 %v1894, %v1892
    %v2263 = vpack.c.b16 %v1895, %v1893
    %v2264 = vpack.c.b16 %v1898, %v1896
    %v2265 = vpack.c.b16 %v1899, %v1897
    %v2266 = vpack.c.b16 %v1902, %v1900
    %v2267 = vpack.c.b16 %v1903, %v1901
    %v2268 = vpack.c.b16 %v1906, %v1904
    %v2269 = vpack.c.b16 %v1907, %v1905
    %v2270 = vpack.c.b16 %v1910, %v1908
    %v2271 = vpack.c.b16 %v1911, %v1909
    %v2272 = vpack.c.b16 %v1914, %v1912
    %v2273 = vpack.c.b16 %v1915, %v1913
    %v2274 = vpack.c.b16 %v1918, %v1916
    %v2275 = vpack.c.b16 %v1919, %v1917
    %v2276 = vpack.c.b16 %v1922, %v1920
    %v2277 = vpack.c.b16 %v1923, %v1921
    %v2278 = vpack.c.b16 %v1926, %v1924
    %v2279 = vpack.c.b16 %v1927, %v1925
    %v2280 = vpack.c.b16 %v1930, %v1928
    %v2281 = vpack.c.b16 %v1931, %v1929
    %v2282 = vpack.c.b16 %v1934, %v1932
    %v2283 = vpack.c.b16 %v1935, %v1933
    %v2284 = vpack.c.b16 %v1938, %v1936
    %v2285 = vpack.c.b16 %v1939, %v1937
    %v2286 = vpack.c.b16 %v1942, %v1940
    %v2287 = vpack.c.b16 %v1943, %v1941
    %v2288 = vpack.c.b16 %v1946, %v1944
    %v2289 = vpack.c.b16 %v1947, %v1945
    %v2290 = vpack.c.b16 %v1950, %v1948
    %v2291 = vpack.c.b16 %v1951, %v1949
    %v2292 = vpack.c.b16 %v1954, %v1952
    %v2293 = vpack.c.b16 %v1955, %v1953
    %v2294 = vpack.c.b16 %v1958, %v1956
    %v2295 = vpack.c.b16 %v1959, %v1957
    %v2296 = vpack.c.b16 %v1962, %v1960
    %v2297 = vpack.c.b16 %v1963, %v1961
    %v2298 = vpack.c.b16 %v1966, %v1964
    %v2299 = vpack.c.b16 %v1967, %v1965
    %v2300 = vpack.c.b16 %v1970, %v1968
    %v2301 = vpack.c.b16 %v1971, %v1969
    %v2302 = vpack.c.b16 %v1974, %v1972
    %v2303 = vpack.c.b16 %v1975, %v1973
    %v2304 = vpack.c.b16 %v1978, %v1976
    %v2305 = vpack.c.b16 %v1979, %v1977
    %v2306 = vpack.c.b16 %v1982, %v1980
    %v2307 = vpack.c.b16 %v1983, %v1981
    %v2308 = vpack.c.b16 %v1986, %v1984
    %v2309 = vpack.c.b16 %v1987, %v1985
    %v2310 = vpack.c.b16 %v1990, %v1988
    %v2311 = vpack.c.b16 %v1991, %v1989
    %v2312 = vpack.c.b16 %v1994, %v1992
    %v2313 = vpack.c.b16 %v1995, %v1993
    %v2314 = vpack.c.b16 %v1998, %v1996
    %v2315 = vpack.c.b16 %v1999, %v1997
    %v2316 = vpack.c.b16 %v2002, %v2000
    %v2317 = vpack.c.b16 %v2003, %v2001
    %v2318 = vpack.c.b16 %v2006, %v2004
    %v2319 = vpack.c.b16 %v2007, %v2005
    %v2320 = vpack.c.b16 %v2010, %v2008
    %v2321 = vpack.c.b16 %v2011, %v2009
    %v2322 = vpack.c.b16 %v2014, %v2012
    %v2323 = vpack.c.b16 %v2015, %v2013
    %v2324 = vpack.c.b16 %v2018, %v2016
    %v2325 = vpack.c.b16 %v2019, %v2017
    %v2326 = vpack.c.b16 %v2022, %v2020
    %v2327 = vpack.c.b16 %v2023, %v2021
    %v2328 = vpack.c.b16 %v2026, %v2024
    %v2329 = vpack.c.b16 %v2027, %v2025
    %v2330 = vpack.c.b16 %v2030, %v2028
    %v2331 = vpack.c.b16 %v2031, %v2029
    %v2332 = vpack.c.b16 %v2034, %v2032
    %v2333 = vpack.c.b16 %v2035, %v2033
    %v2334 = vpack.c.b16 %v2038, %v2036
    %v2335 = vpack.c.b16 %v2039, %v2037
    %v2336 = vpack.c.b16 %v2042, %v2040
    %v2337 = vpack.c.b16 %v2043, %v2041
    %v2338 = vpack.c.b16 %v2046, %v2044
    %v2339 = vpack.c.b16 %v2047, %v2045
    %v2340 = vpack.c.b16 %v2050, %v2048
    %v2341 = vpack.c.b16 %v2051, %v2049
    %v2342 = vpack.c.b16 %v2054, %v2052
    %v2343 = vpack.c.b16 %v2055, %v2053
    %2632 = vmatprep.subr.bf16.mxu0 %v2057
    %2633 = vmatpush1.bf16.msra.mxu0 %v2056
    %2634 = vmatprep.subr.bf16.mxu0 %v2059
    %2635 = vmatpush1.bf16.msra.mxu0 %v2058
    %2636 = vmatprep.subr.bf16.mxu0 %v2061
    %2637 = vmatpush1.bf16.msra.mxu0 %v2060
    %2638 = vmatprep.subr.bf16.mxu0 %v2063
    %2639 = vmatpush1.bf16.msra.mxu0 %v2062
    %2640 = vmatprep.subr.bf16.mxu0 %v2065
    %2641 = vmatpush1.bf16.msra.mxu0 %v2064
    %2642 = vmatprep.subr.bf16.mxu0 %v2067
    %2643 = vmatpush1.bf16.msra.mxu0 %v2066
    %2644 = vmatprep.subr.bf16.mxu0 %v2069
    %2645 = vmatpush1.bf16.msra.mxu0 %v2068
    %2646 = vmatprep.subr.bf16.mxu0 %v2071
    %2647 = vmatpush1.bf16.msra.mxu0 %v2070
    %2648 = vmatprep.subr.bf16.mxu0 %v2073
    %2649 = vmatpush1.bf16.msra.mxu0 %v2072
    %2650 = vmatprep.subr.bf16.mxu0 %v2075
    %2651 = vmatpush1.bf16.msra.mxu0 %v2074
    %2652 = vmatprep.subr.bf16.mxu0 %v2077
    %2653 = vmatpush1.bf16.msra.mxu0 %v2076
    %2654 = vmatprep.subr.bf16.mxu0 %v2079
    %2655 = vmatpush1.bf16.msra.mxu0 %v2078
    %2656 = vmatprep.subr.bf16.mxu0 %v2081
    %2657 = vmatpush1.bf16.msra.mxu0 %v2080
    %2658 = vmatprep.subr.bf16.mxu0 %v2083
    %2659 = vmatpush1.bf16.msra.mxu0 %v2082
    %2660 = vmatprep.subr.bf16.mxu0 %v2085
    %2661 = vmatpush1.bf16.msra.mxu0 %v2084
    %2662 = vmatprep.subr.bf16.mxu0 %v2087
    %2663 = vmatpush1.bf16.msra.mxu0 %v2086
    %2664 = vmatprep.mubr.bf16.mxu0 %v905
    %2665 = vmatmul.mubr.bf16.gmra.mrb[0].mxu0 %v904
    %v2666 = vpop.f32.mrb[0].mxu0
    %v2667 = vadd.f32 0.0, %v2666
    %v2668 = vpop.f32.mrb[0].mxu0
    %v2669 = vadd.f32 0.0, %v2668
    %v2670 = vpop.f32.mrb[0].mxu0
    %v2671 = vadd.f32 0.0, %v2670
    %v2672 = vpop.f32.mrb[0].mxu0
    %v2673 = vadd.f32 0.0, %v2672
    %2674 = vmatprep.mubr.bf16.mxu0 %v923
    %2675 = vmatmul.mubr.bf16.gmra.mrb[0].mxu0 %v922
    %v2676 = vpop.f32.mrb[0].mxu0
    %v2677 = vadd.f32 0.0, %v2676
    %v2678 = vpop.f32.mrb[0].mxu0
    %v2679 = vadd.f32 0.0, %v2678
    %v2680 = vpop.f32.mrb[0].mxu0
    %v2681 = vadd.f32 0.0, %v2680
    %v2682 = vpop.f32.mrb[0].mxu0
    %v2683 = vadd.f32 0.0, %v2682
    %2684 = vmatprep.mubr.bf16.mxu0 %v941
    %2685 = vmatmul.mubr.bf16.gmra.mrb[0].mxu0 %v940
    %v2686 = vpop.f32.mrb[0].mxu0
    %v2687 = vadd.f32 0.0, %v2686
    %v2688 = vpop.f32.mrb[0].mxu0
    %v2689 = vadd.f32 0.0, %v2688
    %v2690 = vpop.f32.mrb[0].mxu0
    %v2691 = vadd.f32 0.0, %v2690
    %v2692 = vpop.f32.mrb[0].mxu0
    %v2693 = vadd.f32 0.0, %v2692
    %2694 = vmatprep.mubr.bf16.mxu0 %v959
    %2695 = vmatmul.mubr.bf16.gmra.mrb[0].mxu0 %v958
    %v2696 = vpop.f32.mrb[0].mxu0
    %v2697 = vadd.f32 0.0, %v2696
    %v2698 = vpop.f32.mrb[0].mxu0
    %v2699 = vadd.f32 0.0, %v2698
    %v2700 = vpop.f32.mrb[0].mxu0
    %v2701 = vadd.f32 0.0, %v2700
    %v2702 = vpop.f32.mrb[0].mxu0
    %v2703 = vadd.f32 0.0, %v2702
    %2704 = vmatprep.mubr.bf16.mxu0 %v977
    %2705 = vmatmul.mubr.bf16.gmra.mrb[0].mxu0 %v976
    %v2706 = vpop.f32.mrb[0].mxu0
    %v2707 = vadd.f32 0.0, %v2706
    %v2708 = vpop.f32.mrb[0].mxu0
    %v2709 = vadd.f32 0.0, %v2708
    %v2710 = vpop.f32.mrb[0].mxu0
    %v2711 = vadd.f32 0.0, %v2710
    %v2712 = vpop.f32.mrb[0].mxu0
    %v2713 = vadd.f32 0.0, %v2712
    %2714 = vmatprep.mubr.bf16.mxu0 %v995
    %2715 = vmatmul.mubr.bf16.gmra.mrb[0].mxu0 %v994
    %v2716 = vpop.f32.mrb[0].mxu0
    %v2717 = vadd.f32 0.0, %v2716
    %v2718 = vpop.f32.mrb[0].mxu0
    %v2719 = vadd.f32 0.0, %v2718
    %v2720 = vpop.f32.mrb[0].mxu0
    %v2721 = vadd.f32 0.0, %v2720
    %v2722 = vpop.f32.mrb[0].mxu0
    %v2723 = vadd.f32 0.0, %v2722
    %2724 = vmatprep.mubr.bf16.mxu0 %v1013
    %2725 = vmatmul.mubr.bf16.gmra.mrb[0].mxu0 %v1012
    %v2726 = vpop.f32.mrb[0].mxu0
    %v2727 = vadd.f32 0.0, %v2726
    %v2728 = vpop.f32.mrb[0].mxu0
    %v2729 = vadd.f32 0.0, %v2728
    %v2730 = vpop.f32.mrb[0].mxu0
    %v2731 = vadd.f32 0.0, %v2730
    %v2732 = vpop.f32.mrb[0].mxu0
    %v2733 = vadd.f32 0.0, %v2732
    %2734 = vmatprep.mubr.bf16.mxu0 %v1031
    %2735 = vmatmul.mubr.bf16.gmra.mrb[0].mxu0 %v1030
    %v2736 = vpop.f32.mrb[0].mxu0
    %v2737 = vadd.f32 0.0, %v2736
    %v2738 = vpop.f32.mrb[0].mxu0
    %v2739 = vadd.f32 0.0, %v2738
    %v2740 = vpop.f32.mrb[0].mxu0
    %v2741 = vadd.f32 0.0, %v2740
    %v2742 = vpop.f32.mrb[0].mxu0
    %v2743 = vadd.f32 0.0, %v2742
    %2744 = vdwg.mxu0
    %2745 = vmatprep.subr.bf16.mxu0 %v2089
    %2746 = vmatpush1.bf16.msra.mxu0 %v2088
    %2747 = vmatprep.subr.bf16.mxu0 %v2091
    %2748 = vmatpush1.bf16.msra.mxu0 %v2090
    %2749 = vmatprep.subr.bf16.mxu0 %v2093
    %2750 = vmatpush1.bf16.msra.mxu0 %v2092
    %2751 = vmatprep.subr.bf16.mxu0 %v2095
    %2752 = vmatpush1.bf16.msra.mxu0 %v2094
    %2753 = vmatprep.subr.bf16.mxu0 %v2097
    %2754 = vmatpush1.bf16.msra.mxu0 %v2096
    %2755 = vmatprep.subr.bf16.mxu0 %v2099
    %2756 = vmatpush1.bf16.msra.mxu0 %v2098
    %2757 = vmatprep.subr.bf16.mxu0 %v2101
    %2758 = vmatpush1.bf16.msra.mxu0 %v2100
    %2759 = vmatprep.subr.bf16.mxu0 %v2103
    %2760 = vmatpush1.bf16.msra.mxu0 %v2102
    %2761 = vmatprep.subr.bf16.mxu0 %v2105
    %2762 = vmatpush1.bf16.msra.mxu0 %v2104
    %2763 = vmatprep.subr.bf16.mxu0 %v2107
    %2764 = vmatpush1.bf16.msra.mxu0 %v2106
    %2765 = vmatprep.subr.bf16.mxu0 %v2109
    %2766 = vmatpush1.bf16.msra.mxu0 %v2108
    %2767 = vmatprep.subr.bf16.mxu0 %v2111
    %2768 = vmatpush1.bf16.msra.mxu0 %v2110
    %2769 = vmatprep.subr.bf16.mxu0 %v2113
    %2770 = vmatpush1.bf16.msra.mxu0 %v2112
    %2771 = vmatprep.subr.bf16.mxu0 %v2115
    %2772 = vmatpush1.bf16.msra.mxu0 %v2114
    %2773 = vmatprep.subr.bf16.mxu0 %v2117
    %2774 = vmatpush1.bf16.msra.mxu0 %v2116
    %2775 = vmatprep.subr.bf16.mxu0 %v2119
    %2776 = vmatpush1.bf16.msra.mxu0 %v2118
    %2777 = vmatprep.mubr.bf16.mxu0 %v907
    %2778 = vmatmul.mubr.bf16.gmra.mrb[0].mxu0 %v906
    %v2779 = vpop.f32.mrb[0].mxu0
    %v2780 = vadd.f32 %v2667, %v2779
    %v2781 = vpop.f32.mrb[0].mxu0
    %v2782 = vadd.f32 %v2669, %v2781
    %v2783 = vpop.f32.mrb[0].mxu0
    %v2784 = vadd.f32 %v2671, %v2783
    %v2785 = vpop.f32.mrb[0].mxu0
    %v2786 = vadd.f32 %v2673, %v2785
    %2787 = vmatprep.mubr.bf16.mxu0 %v925
    %2788 = vmatmul.mubr.bf16.gmra.mrb[0].mxu0 %v924
    %v2789 = vpop.f32.mrb[0].mxu0
    %v2790 = vadd.f32 %v2677, %v2789
    %v2791 = vpop.f32.mrb[0].mxu0
    %v2792 = vadd.f32 %v2679, %v2791
    %v2793 = vpop.f32.mrb[0].mxu0
    %v2794 = vadd.f32 %v2681, %v2793
    %v2795 = vpop.f32.mrb[0].mxu0
    %v2796 = vadd.f32 %v2683, %v2795
    %2797 = vmatprep.mubr.bf16.mxu0 %v943
    %2798 = vmatmul.mubr.bf16.gmra.mrb[0].mxu0 %v942
    %v2799 = vpop.f32.mrb[0].mxu0
    %v2800 = vadd.f32 %v2687, %v2799
    %v2801 = vpop.f32.mrb[0].mxu0
    %v2802 = vadd.f32 %v2689, %v2801
    %v2803 = vpop.f32.mrb[0].mxu0
    %v2804 = vadd.f32 %v2691, %v2803
    %v2805 = vpop.f32.mrb[0].mxu0
    %v2806 = vadd.f32 %v2693, %v2805
    %2807 = vmatprep.mubr.bf16.mxu0 %v961
    %2808 = vmatmul.mubr.bf16.gmra.mrb[0].mxu0 %v960
    %v2809 = vpop.f32.mrb[0].mxu0
    %v2810 = vadd.f32 %v2697, %v2809
    %v2811 = vpop.f32.mrb[0].mxu0
    %v2812 = vadd.f32 %v2699, %v2811
    %v2813 = vpop.f32.mrb[0].mxu0
    %v2814 = vadd.f32 %v2701, %v2813
    %v2815 = vpop.f32.mrb[0].mxu0
    %v2816 = vadd.f32 %v2703, %v2815
    %2817 = vmatprep.mubr.bf16.mxu0 %v979
    %2818 = vmatmul.mubr.bf16.gmra.mrb[0].mxu0 %v978
    %v2819 = vpop.f32.mrb[0].mxu0
    %v2820 = vadd.f32 %v2707, %v2819
    %v2821 = vpop.f32.mrb[0].mxu0
    %v2822 = vadd.f32 %v2709, %v2821
    %v2823 = vpop.f32.mrb[0].mxu0
    %v2824 = vadd.f32 %v2711, %v2823
    %v2825 = vpop.f32.mrb[0].mxu0
    %v2826 = vadd.f32 %v2713, %v2825
    %2827 = vmatprep.mubr.bf16.mxu0 %v997
    %2828 = vmatmul.mubr.bf16.gmra.mrb[0].mxu0 %v996
    %v2829 = vpop.f32.mrb[0].mxu0
    %v2830 = vadd.f32 %v2717, %v2829
    %v2831 = vpop.f32.mrb[0].mxu0
    %v2832 = vadd.f32 %v2719, %v2831
    %v2833 = vpop.f32.mrb[0].mxu0
    %v2834 = vadd.f32 %v2721, %v2833
    %v2835 = vpop.f32.mrb[0].mxu0
    %v2836 = vadd.f32 %v2723, %v2835
    %2837 = vmatprep.mubr.bf16.mxu0 %v1015
    %2838 = vmatmul.mubr.bf16.gmra.mrb[0].mxu0 %v1014
    %v2839 = vpop.f32.mrb[0].mxu0
    %v2840 = vadd.f32 %v2727, %v2839
    %v2841 = vpop.f32.mrb[0].mxu0
    %v2842 = vadd.f32 %v2729, %v2841
    %v2843 = vpop.f32.mrb[0].mxu0
    %v2844 = vadd.f32 %v2731, %v2843
    %v2845 = vpop.f32.mrb[0].mxu0
    %v2846 = vadd.f32 %v2733, %v2845
    %2847 = vmatprep.mubr.bf16.mxu0 %v1033
    %2848 = vmatmul.mubr.bf16.gmra.mrb[0].mxu0 %v1032
    %v2849 = vpop.f32.mrb[0].mxu0
    %v2850 = vadd.f32 %v2737, %v2849
    %v2851 = vpop.f32.mrb[0].mxu0
    %v2852 = vadd.f32 %v2739, %v2851
    %v2853 = vpop.f32.mrb[0].mxu0
    %v2854 = vadd.f32 %v2741, %v2853
    %v2855 = vpop.f32.mrb[0].mxu0
    %v2856 = vadd.f32 %v2743, %v2855
    %2857 = vdwg.mxu0
    %2858 = vmatprep.subr.bf16.mxu0 %v2121
    %2859 = vmatpush1.bf16.msra.mxu0 %v2120
    %2860 = vmatprep.subr.bf16.mxu0 %v2123
    %2861 = vmatpush1.bf16.msra.mxu0 %v2122
    %2862 = vmatprep.subr.bf16.mxu0 %v2125
    %2863 = vmatpush1.bf16.msra.mxu0 %v2124
    %2864 = vmatprep.subr.bf16.mxu0 %v2127
    %2865 = vmatpush1.bf16.msra.mxu0 %v2126
    %2866 = vmatprep.subr.bf16.mxu0 %v2129
    %2867 = vmatpush1.bf16.msra.mxu0 %v2128
    %2868 = vmatprep.subr.bf16.mxu0 %v2131
    %2869 = vmatpush1.bf16.msra.mxu0 %v2130
    %2870 = vmatprep.subr.bf16.mxu0 %v2133
    %2871 = vmatpush1.bf16.msra.mxu0 %v2132
    %2872 = vmatprep.subr.bf16.mxu0 %v2135
    %2873 = vmatpush1.bf16.msra.mxu0 %v2134
    %2874 = vmatprep.subr.bf16.mxu0 %v2137
    %2875 = vmatpush1.bf16.msra.mxu0 %v2136
    %2876 = vmatprep.subr.bf16.mxu0 %v2139
    %2877 = vmatpush1.bf16.msra.mxu0 %v2138
    %2878 = vmatprep.subr.bf16.mxu0 %v2141
    %2879 = vmatpush1.bf16.msra.mxu0 %v2140
    %2880 = vmatprep.subr.bf16.mxu0 %v2143
    %2881 = vmatpush1.bf16.msra.mxu0 %v2142
    %2882 = vmatprep.subr.bf16.mxu0 %v2145
    %2883 = vmatpush1.bf16.msra.mxu0 %v2144
    %2884 = vmatprep.subr.bf16.mxu0 %v2147
    %2885 = vmatpush1.bf16.msra.mxu0 %v2146
    %2886 = vmatprep.subr.bf16.mxu0 %v2149
    %2887 = vmatpush1.bf16.msra.mxu0 %v2148
    %2888 = vmatprep.subr.bf16.mxu0 %v2151
    %2889 = vmatpush1.bf16.msra.mxu0 %v2150
    %2890 = vmatprep.mubr.bf16.mxu0 %v909
    %2891 = vmatmul.mubr.bf16.gmra.mrb[0].mxu0 %v908
    %v2892 = vpop.f32.mrb[0].mxu0
    %v2893 = vadd.f32 %v2780, %v2892
    %v2894 = vpop.f32.mrb[0].mxu0
    %v2895 = vadd.f32 %v2782, %v2894
    %v2896 = vpop.f32.mrb[0].mxu0
    %v2897 = vadd.f32 %v2784, %v2896
    %v2898 = vpop.f32.mrb[0].mxu0
    %v2899 = vadd.f32 %v2786, %v2898
    %2900 = vmatprep.mubr.bf16.mxu0 %v927
    %2901 = vmatmul.mubr.bf16.gmra.mrb[0].mxu0 %v926
    %v2902 = vpop.f32.mrb[0].mxu0
    %v2903 = vadd.f32 %v2790, %v2902
    %v2904 = vpop.f32.mrb[0].mxu0
    %v2905 = vadd.f32 %v2792, %v2904
    %v2906 = vpop.f32.mrb[0].mxu0
    %v2907 = vadd.f32 %v2794, %v2906
    %v2908 = vpop.f32.mrb[0].mxu0
    %v2909 = vadd.f32 %v2796, %v2908
    %2910 = vmatprep.mubr.bf16.mxu0 %v945
    %2911 = vmatmul.mubr.bf16.gmra.mrb[0].mxu0 %v944
    %v2912 = vpop.f32.mrb[0].mxu0
    %v2913 = vadd.f32 %v2800, %v2912
    %v2914 = vpop.f32.mrb[0].mxu0
    %v2915 = vadd.f32 %v2802, %v2914
    %v2916 = vpop.f32.mrb[0].mxu0
    %v2917 = vadd.f32 %v2804, %v2916
    %v2918 = vpop.f32.mrb[0].mxu0
    %v2919 = vadd.f32 %v2806, %v2918
    %2920 = vmatprep.mubr.bf16.mxu0 %v963
    %2921 = vmatmul.mubr.bf16.gmra.mrb[0].mxu0 %v962
    %v2922 = vpop.f32.mrb[0].mxu0
    %v2923 = vadd.f32 %v2810, %v2922
    %v2924 = vpop.f32.mrb[0].mxu0
    %v2925 = vadd.f32 %v2812, %v2924
    %v2926 = vpop.f32.mrb[0].mxu0
    %v2927 = vadd.f32 %v2814, %v2926
    %v2928 = vpop.f32.mrb[0].mxu0
    %v2929 = vadd.f32 %v2816, %v2928
    %2930 = vmatprep.mubr.bf16.mxu0 %v981
    %2931 = vmatmul.mubr.bf16.gmra.mrb[0].mxu0 %v980
    %v2932 = vpop.f32.mrb[0].mxu0
    %v2933 = vadd.f32 %v2820, %v2932
    %v2934 = vpop.f32.mrb[0].mxu0
    %v2935 = vadd.f32 %v2822, %v2934
    %v2936 = vpop.f32.mrb[0].mxu0
    %v2937 = vadd.f32 %v2824, %v2936
    %v2938 = vpop.f32.mrb[0].mxu0
    %v2939 = vadd.f32 %v2826, %v2938
    %2940 = vmatprep.mubr.bf16.mxu0 %v999
    %2941 = vmatmul.mubr.bf16.gmra.mrb[0].mxu0 %v998
    %v2942 = vpop.f32.mrb[0].mxu0
    %v2943 = vadd.f32 %v2830, %v2942
    %v2944 = vpop.f32.mrb[0].mxu0
    %v2945 = vadd.f32 %v2832, %v2944
    %v2946 = vpop.f32.mrb[0].mxu0
    %v2947 = vadd.f32 %v2834, %v2946
    %v2948 = vpop.f32.mrb[0].mxu0
    %v2949 = vadd.f32 %v2836, %v2948
    %2950 = vmatprep.mubr.bf16.mxu0 %v1017
    %2951 = vmatmul.mubr.bf16.gmra.mrb[0].mxu0 %v1016
    %v2952 = vpop.f32.mrb[0].mxu0
    %v2953 = vadd.f32 %v2840, %v2952
    %v2954 = vpop.f32.mrb[0].mxu0
    %v2955 = vadd.f32 %v2842, %v2954
    %v2956 = vpop.f32.mrb[0].mxu0
    %v2957 = vadd.f32 %v2844, %v2956
    %v2958 = vpop.f32.mrb[0].mxu0
    %v2959 = vadd.f32 %v2846, %v2958
    %2960 = vmatprep.mubr.bf16.mxu0 %v1035
    %2961 = vmatmul.mubr.bf16.gmra.mrb[0].mxu0 %v1034
    %v2962 = vpop.f32.mrb[0].mxu0
    %v2963 = vadd.f32 %v2850, %v2962
    %v2964 = vpop.f32.mrb[0].mxu0
    %v2965 = vadd.f32 %v2852, %v2964
    %v2966 = vpop.f32.mrb[0].mxu0
    %v2967 = vadd.f32 %v2854, %v2966
    %v2968 = vpop.f32.mrb[0].mxu0
    %v2969 = vadd.f32 %v2856, %v2968
    %2970 = vdwg.mxu0
    %2971 = vmatprep.subr.bf16.mxu0 %v2153
    %2972 = vmatpush1.bf16.msra.mxu0 %v2152
    %2973 = vmatprep.subr.bf16.mxu0 %v2155
    %2974 = vmatpush1.bf16.msra.mxu0 %v2154
    %2975 = vmatprep.subr.bf16.mxu0 %v2157
    %2976 = vmatpush1.bf16.msra.mxu0 %v2156
    %2977 = vmatprep.subr.bf16.mxu0 %v2159
    %2978 = vmatpush1.bf16.msra.mxu0 %v2158
    %2979 = vmatprep.subr.bf16.mxu0 %v2161
    %2980 = vmatpush1.bf16.msra.mxu0 %v2160
    %2981 = vmatprep.subr.bf16.mxu0 %v2163
    %2982 = vmatpush1.bf16.msra.mxu0 %v2162
    %2983 = vmatprep.subr.bf16.mxu0 %v2165
    %2984 = vmatpush1.bf16.msra.mxu0 %v2164
    %2985 = vmatprep.subr.bf16.mxu0 %v2167
    %2986 = vmatpush1.bf16.msra.mxu0 %v2166
    %2987 = vmatprep.subr.bf16.mxu0 %v2169
    %2988 = vmatpush1.bf16.msra.mxu0 %v2168
    %2989 = vmatprep.subr.bf16.mxu0 %v2171
    %2990 = vmatpush1.bf16.msra.mxu0 %v2170
    %2991 = vmatprep.subr.bf16.mxu0 %v2173
    %2992 = vmatpush1.bf16.msra.mxu0 %v2172
    %2993 = vmatprep.subr.bf16.mxu0 %v2175
    %2994 = vmatpush1.bf16.msra.mxu0 %v2174
    %2995 = vmatprep.subr.bf16.mxu0 %v2177
    %2996 = vmatpush1.bf16.msra.mxu0 %v2176
    %2997 = vmatprep.subr.bf16.mxu0 %v2179
    %2998 = vmatpush1.bf16.msra.mxu0 %v2178
    %2999 = vmatprep.subr.bf16.mxu0 %v2181
    %3000 = vmatpush1.bf16.msra.mxu0 %v2180
    %3001 = vmatprep.subr.bf16.mxu0 %v2183
    %3002 = vmatpush1.bf16.msra.mxu0 %v2182
    %3003 = vmatprep.mubr.bf16.mxu0 %v911
    %3004 = vmatmul.mubr.bf16.gmra.mrb[0].mxu0 %v910
    %v3005 = vpop.f32.mrb[0].mxu0
    %v3006 = vadd.f32 %v2893, %v3005
    %v3007 = vpop.f32.mrb[0].mxu0
    %v3008 = vadd.f32 %v2895, %v3007
    %v3009 = vpop.f32.mrb[0].mxu0
    %v3010 = vadd.f32 %v2897, %v3009
    %v3011 = vpop.f32.mrb[0].mxu0
    %v3012 = vadd.f32 %v2899, %v3011
    %3013 = vmatprep.mubr.bf16.mxu0 %v929
    %3014 = vmatmul.mubr.bf16.gmra.mrb[0].mxu0 %v928
    %v3015 = vpop.f32.mrb[0].mxu0
    %v3016 = vadd.f32 %v2903, %v3015
    %v3017 = vpop.f32.mrb[0].mxu0
    %v3018 = vadd.f32 %v2905, %v3017
    %v3019 = vpop.f32.mrb[0].mxu0
    %v3020 = vadd.f32 %v2907, %v3019
    %v3021 = vpop.f32.mrb[0].mxu0
    %v3022 = vadd.f32 %v2909, %v3021
    %3023 = vmatprep.mubr.bf16.mxu0 %v947
    %3024 = vmatmul.mubr.bf16.gmra.mrb[0].mxu0 %v946
    %v3025 = vpop.f32.mrb[0].mxu0
    %v3026 = vadd.f32 %v2913, %v3025
    %v3027 = vpop.f32.mrb[0].mxu0
    %v3028 = vadd.f32 %v2915, %v3027
    %v3029 = vpop.f32.mrb[0].mxu0
    %v3030 = vadd.f32 %v2917, %v3029
    %v3031 = vpop.f32.mrb[0].mxu0
    %v3032 = vadd.f32 %v2919, %v3031
    %3033 = vmatprep.mubr.bf16.mxu0 %v965
    %3034 = vmatmul.mubr.bf16.gmra.mrb[0].mxu0 %v964
    %v3035 = vpop.f32.mrb[0].mxu0
    %v3036 = vadd.f32 %v2923, %v3035
    %v3037 = vpop.f32.mrb[0].mxu0
    %v3038 = vadd.f32 %v2925, %v3037
    %v3039 = vpop.f32.mrb[0].mxu0
    %v3040 = vadd.f32 %v2927, %v3039
    %v3041 = vpop.f32.mrb[0].mxu0
    %v3042 = vadd.f32 %v2929, %v3041
    %3043 = vmatprep.mubr.bf16.mxu0 %v983
    %3044 = vmatmul.mubr.bf16.gmra.mrb[0].mxu0 %v982
    %v3045 = vpop.f32.mrb[0].mxu0
    %v3046 = vadd.f32 %v2933, %v3045
    %v3047 = vpop.f32.mrb[0].mxu0
    %v3048 = vadd.f32 %v2935, %v3047
    %v3049 = vpop.f32.mrb[0].mxu0
    %v3050 = vadd.f32 %v2937, %v3049
    %v3051 = vpop.f32.mrb[0].mxu0
    %v3052 = vadd.f32 %v2939, %v3051
    %3053 = vmatprep.mubr.bf16.mxu0 %v1001
    %3054 = vmatmul.mubr.bf16.gmra.mrb[0].mxu0 %v1000
    %v3055 = vpop.f32.mrb[0].mxu0
    %v3056 = vadd.f32 %v2943, %v3055
    %v3057 = vpop.f32.mrb[0].mxu0
    %v3058 = vadd.f32 %v2945, %v3057
    %v3059 = vpop.f32.mrb[0].mxu0
    %v3060 = vadd.f32 %v2947, %v3059
    %v3061 = vpop.f32.mrb[0].mxu0
    %v3062 = vadd.f32 %v2949, %v3061
    %3063 = vmatprep.mubr.bf16.mxu0 %v1019
    %3064 = vmatmul.mubr.bf16.gmra.mrb[0].mxu0 %v1018
    %v3065 = vpop.f32.mrb[0].mxu0
    %v3066 = vadd.f32 %v2953, %v3065
    %v3067 = vpop.f32.mrb[0].mxu0
    %v3068 = vadd.f32 %v2955, %v3067
    %v3069 = vpop.f32.mrb[0].mxu0
    %v3070 = vadd.f32 %v2957, %v3069
    %v3071 = vpop.f32.mrb[0].mxu0
    %v3072 = vadd.f32 %v2959, %v3071
    %3073 = vmatprep.mubr.bf16.mxu0 %v1037
    %3074 = vmatmul.mubr.bf16.gmra.mrb[0].mxu0 %v1036
    %v3075 = vpop.f32.mrb[0].mxu0
    %v3076 = vadd.f32 %v2963, %v3075
    %v3077 = vpop.f32.mrb[0].mxu0
    %v3078 = vadd.f32 %v2965, %v3077
    %v3079 = vpop.f32.mrb[0].mxu0
    %v3080 = vadd.f32 %v2967, %v3079
    %v3081 = vpop.f32.mrb[0].mxu0
    %v3082 = vadd.f32 %v2969, %v3081
    %3083 = vdwg.mxu0
    %3084 = vmatprep.subr.bf16.mxu0 %v2185
    %3085 = vmatpush1.bf16.msra.mxu0 %v2184
    %3086 = vmatprep.subr.bf16.mxu0 %v2187
    %3087 = vmatpush1.bf16.msra.mxu0 %v2186
    %3088 = vmatprep.subr.bf16.mxu0 %v2189
    %3089 = vmatpush1.bf16.msra.mxu0 %v2188
    %3090 = vmatprep.subr.bf16.mxu0 %v2191
    %3091 = vmatpush1.bf16.msra.mxu0 %v2190
    %3092 = vmatprep.subr.bf16.mxu0 %v2193
    %3093 = vmatpush1.bf16.msra.mxu0 %v2192
    %3094 = vmatprep.subr.bf16.mxu0 %v2195
    %3095 = vmatpush1.bf16.msra.mxu0 %v2194
    %3096 = vmatprep.subr.bf16.mxu0 %v2197
    %3097 = vmatpush1.bf16.msra.mxu0 %v2196
    %3098 = vmatprep.subr.bf16.mxu0 %v2199
    %3099 = vmatpush1.bf16.msra.mxu0 %v2198
    %3100 = vmatprep.subr.bf16.mxu0 %v2201
    %3101 = vmatpush1.bf16.msra.mxu0 %v2200
    %3102 = vmatprep.subr.bf16.mxu0 %v2203
    %3103 = vmatpush1.bf16.msra.mxu0 %v2202
    %3104 = vmatprep.subr.bf16.mxu0 %v2205
    %3105 = vmatpush1.bf16.msra.mxu0 %v2204
    %3106 = vmatprep.subr.bf16.mxu0 %v2207
    %3107 = vmatpush1.bf16.msra.mxu0 %v2206
    %3108 = vmatprep.subr.bf16.mxu0 %v2209
    %3109 = vmatpush1.bf16.msra.mxu0 %v2208
    %3110 = vmatprep.subr.bf16.mxu0 %v2211
    %3111 = vmatpush1.bf16.msra.mxu0 %v2210
    %3112 = vmatprep.subr.bf16.mxu0 %v2213
    %3113 = vmatpush1.bf16.msra.mxu0 %v2212
    %3114 = vmatprep.subr.bf16.mxu0 %v2215
    %3115 = vmatpush1.bf16.msra.mxu0 %v2214
    %3116 = vmatprep.mubr.bf16.mxu0 %v913
    %3117 = vmatmul.mubr.bf16.gmra.mrb[0].mxu0 %v912
    %v3118 = vpop.f32.mrb[0].mxu0
    %v3119 = vadd.f32 %v3006, %v3118
    %v3120 = vpop.f32.mrb[0].mxu0
    %v3121 = vadd.f32 %v3008, %v3120
    %v3122 = vpop.f32.mrb[0].mxu0
    %v3123 = vadd.f32 %v3010, %v3122
    %v3124 = vpop.f32.mrb[0].mxu0
    %v3125 = vadd.f32 %v3012, %v3124
    %3126 = vmatprep.mubr.bf16.mxu0 %v931
    %3127 = vmatmul.mubr.bf16.gmra.mrb[0].mxu0 %v930
    %v3128 = vpop.f32.mrb[0].mxu0
    %v3129 = vadd.f32 %v3016, %v3128
    %v3130 = vpop.f32.mrb[0].mxu0
    %v3131 = vadd.f32 %v3018, %v3130
    %v3132 = vpop.f32.mrb[0].mxu0
    %v3133 = vadd.f32 %v3020, %v3132
    %v3134 = vpop.f32.mrb[0].mxu0
    %v3135 = vadd.f32 %v3022, %v3134
    %3136 = vmatprep.mubr.bf16.mxu0 %v949
    %3137 = vmatmul.mubr.bf16.gmra.mrb[0].mxu0 %v948
    %v3138 = vpop.f32.mrb[0].mxu0
    %v3139 = vadd.f32 %v3026, %v3138
    %v3140 = vpop.f32.mrb[0].mxu0
    %v3141 = vadd.f32 %v3028, %v3140
    %v3142 = vpop.f32.mrb[0].mxu0
    %v3143 = vadd.f32 %v3030, %v3142
    %v3144 = vpop.f32.mrb[0].mxu0
    %v3145 = vadd.f32 %v3032, %v3144
    %3146 = vmatprep.mubr.bf16.mxu0 %v967
    %3147 = vmatmul.mubr.bf16.gmra.mrb[0].mxu0 %v966
    %v3148 = vpop.f32.mrb[0].mxu0
    %v3149 = vadd.f32 %v3036, %v3148
    %v3150 = vpop.f32.mrb[0].mxu0
    %v3151 = vadd.f32 %v3038, %v3150
    %v3152 = vpop.f32.mrb[0].mxu0
    %v3153 = vadd.f32 %v3040, %v3152
    %v3154 = vpop.f32.mrb[0].mxu0
    %v3155 = vadd.f32 %v3042, %v3154
    %3156 = vmatprep.mubr.bf16.mxu0 %v985
    %3157 = vmatmul.mubr.bf16.gmra.mrb[0].mxu0 %v984
    %v3158 = vpop.f32.mrb[0].mxu0
    %v3159 = vadd.f32 %v3046, %v3158
    %v3160 = vpop.f32.mrb[0].mxu0
    %v3161 = vadd.f32 %v3048, %v3160
    %v3162 = vpop.f32.mrb[0].mxu0
    %v3163 = vadd.f32 %v3050, %v3162
    %v3164 = vpop.f32.mrb[0].mxu0
    %v3165 = vadd.f32 %v3052, %v3164
    %3166 = vmatprep.mubr.bf16.mxu0 %v1003
    %3167 = vmatmul.mubr.bf16.gmra.mrb[0].mxu0 %v1002
    %v3168 = vpop.f32.mrb[0].mxu0
    %v3169 = vadd.f32 %v3056, %v3168
    %v3170 = vpop.f32.mrb[0].mxu0
    %v3171 = vadd.f32 %v3058, %v3170
    %v3172 = vpop.f32.mrb[0].mxu0
    %v3173 = vadd.f32 %v3060, %v3172
    %v3174 = vpop.f32.mrb[0].mxu0
    %v3175 = vadd.f32 %v3062, %v3174
    %3176 = vmatprep.mubr.bf16.mxu0 %v1021
    %3177 = vmatmul.mubr.bf16.gmra.mrb[0].mxu0 %v1020
    %v3178 = vpop.f32.mrb[0].mxu0
    %v3179 = vadd.f32 %v3066, %v3178
    %v3180 = vpop.f32.mrb[0].mxu0
    %v3181 = vadd.f32 %v3068, %v3180
    %v3182 = vpop.f32.mrb[0].mxu0
    %v3183 = vadd.f32 %v3070, %v3182
    %v3184 = vpop.f32.mrb[0].mxu0
    %v3185 = vadd.f32 %v3072, %v3184
    %3186 = vmatprep.mubr.bf16.mxu0 %v1039
    %3187 = vmatmul.mubr.bf16.gmra.mrb[0].mxu0 %v1038
    %v3188 = vpop.f32.mrb[0].mxu0
    %v3189 = vadd.f32 %v3076, %v3188
    %v3190 = vpop.f32.mrb[0].mxu0
    %v3191 = vadd.f32 %v3078, %v3190
    %v3192 = vpop.f32.mrb[0].mxu0
    %v3193 = vadd.f32 %v3080, %v3192
    %v3194 = vpop.f32.mrb[0].mxu0
    %v3195 = vadd.f32 %v3082, %v3194
    %3196 = vdwg.mxu0
    %3197 = vmatprep.subr.bf16.mxu0 %v2217
    %3198 = vmatpush1.bf16.msra.mxu0 %v2216
    %3199 = vmatprep.subr.bf16.mxu0 %v2219
    %3200 = vmatpush1.bf16.msra.mxu0 %v2218
    %3201 = vmatprep.subr.bf16.mxu0 %v2221
    %3202 = vmatpush1.bf16.msra.mxu0 %v2220
    %3203 = vmatprep.subr.bf16.mxu0 %v2223
    %3204 = vmatpush1.bf16.msra.mxu0 %v2222
    %3205 = vmatprep.subr.bf16.mxu0 %v2225
    %3206 = vmatpush1.bf16.msra.mxu0 %v2224
    %3207 = vmatprep.subr.bf16.mxu0 %v2227
    %3208 = vmatpush1.bf16.msra.mxu0 %v2226
    %3209 = vmatprep.subr.bf16.mxu0 %v2229
    %3210 = vmatpush1.bf16.msra.mxu0 %v2228
    %3211 = vmatprep.subr.bf16.mxu0 %v2231
    %3212 = vmatpush1.bf16.msra.mxu0 %v2230
    %3213 = vmatprep.subr.bf16.mxu0 %v2233
    %3214 = vmatpush1.bf16.msra.mxu0 %v2232
    %3215 = vmatprep.subr.bf16.mxu0 %v2235
    %3216 = vmatpush1.bf16.msra.mxu0 %v2234
    %3217 = vmatprep.subr.bf16.mxu0 %v2237
    %3218 = vmatpush1.bf16.msra.mxu0 %v2236
    %3219 = vmatprep.subr.bf16.mxu0 %v2239
    %3220 = vmatpush1.bf16.msra.mxu0 %v2238
    %3221 = vmatprep.subr.bf16.mxu0 %v2241
    %3222 = vmatpush1.bf16.msra.mxu0 %v2240
    %3223 = vmatprep.subr.bf16.mxu0 %v2243
    %3224 = vmatpush1.bf16.msra.mxu0 %v2242
    %3225 = vmatprep.subr.bf16.mxu0 %v2245
    %3226 = vmatpush1.bf16.msra.mxu0 %v2244
    %3227 = vmatprep.subr.bf16.mxu0 %v2247
    %3228 = vmatpush1.bf16.msra.mxu0 %v2246
    %3229 = vmatprep.mubr.bf16.mxu0 %v915
    %3230 = vmatmul.mubr.bf16.gmra.mrb[0].mxu0 %v914
    %v3231 = vpop.f32.mrb[0].mxu0
    %v3232 = vadd.f32 %v3119, %v3231
    %v3233 = vpop.f32.mrb[0].mxu0
    %v3234 = vadd.f32 %v3121, %v3233
    %v3235 = vpop.f32.mrb[0].mxu0
    %v3236 = vadd.f32 %v3123, %v3235
    %v3237 = vpop.f32.mrb[0].mxu0
    %v3238 = vadd.f32 %v3125, %v3237
    %3239 = vmatprep.mubr.bf16.mxu0 %v933
    %3240 = vmatmul.mubr.bf16.gmra.mrb[0].mxu0 %v932
    %v3241 = vpop.f32.mrb[0].mxu0
    %v3242 = vadd.f32 %v3129, %v3241
    %v3243 = vpop.f32.mrb[0].mxu0
    %v3244 = vadd.f32 %v3131, %v3243
    %v3245 = vpop.f32.mrb[0].mxu0
    %v3246 = vadd.f32 %v3133, %v3245
    %v3247 = vpop.f32.mrb[0].mxu0
    %v3248 = vadd.f32 %v3135, %v3247
    %3249 = vmatprep.mubr.bf16.mxu0 %v951
    %3250 = vmatmul.mubr.bf16.gmra.mrb[0].mxu0 %v950
    %v3251 = vpop.f32.mrb[0].mxu0
    %v3252 = vadd.f32 %v3139, %v3251
    %v3253 = vpop.f32.mrb[0].mxu0
    %v3254 = vadd.f32 %v3141, %v3253
    %v3255 = vpop.f32.mrb[0].mxu0
    %v3256 = vadd.f32 %v3143, %v3255
    %v3257 = vpop.f32.mrb[0].mxu0
    %v3258 = vadd.f32 %v3145, %v3257
    %3259 = vmatprep.mubr.bf16.mxu0 %v969
    %3260 = vmatmul.mubr.bf16.gmra.mrb[0].mxu0 %v968
    %v3261 = vpop.f32.mrb[0].mxu0
    %v3262 = vadd.f32 %v3149, %v3261
    %v3263 = vpop.f32.mrb[0].mxu0
    %v3264 = vadd.f32 %v3151, %v3263
    %v3265 = vpop.f32.mrb[0].mxu0
    %v3266 = vadd.f32 %v3153, %v3265
    %v3267 = vpop.f32.mrb[0].mxu0
    %v3268 = vadd.f32 %v3155, %v3267
    %3269 = vmatprep.mubr.bf16.mxu0 %v987
    %3270 = vmatmul.mubr.bf16.gmra.mrb[0].mxu0 %v986
    %v3271 = vpop.f32.mrb[0].mxu0
    %v3272 = vadd.f32 %v3159, %v3271
    %v3273 = vpop.f32.mrb[0].mxu0
    %v3274 = vadd.f32 %v3161, %v3273
    %v3275 = vpop.f32.mrb[0].mxu0
    %v3276 = vadd.f32 %v3163, %v3275
    %v3277 = vpop.f32.mrb[0].mxu0
    %v3278 = vadd.f32 %v3165, %v3277
    %3279 = vmatprep.mubr.bf16.mxu0 %v1005
    %3280 = vmatmul.mubr.bf16.gmra.mrb[0].mxu0 %v1004
    %v3281 = vpop.f32.mrb[0].mxu0
    %v3282 = vadd.f32 %v3169, %v3281
    %v3283 = vpop.f32.mrb[0].mxu0
    %v3284 = vadd.f32 %v3171, %v3283
    %v3285 = vpop.f32.mrb[0].mxu0
    %v3286 = vadd.f32 %v3173, %v3285
    %v3287 = vpop.f32.mrb[0].mxu0
    %v3288 = vadd.f32 %v3175, %v3287
    %3289 = vmatprep.mubr.bf16.mxu0 %v1023
    %3290 = vmatmul.mubr.bf16.gmra.mrb[0].mxu0 %v1022
    %v3291 = vpop.f32.mrb[0].mxu0
    %v3292 = vadd.f32 %v3179, %v3291
    %v3293 = vpop.f32.mrb[0].mxu0
    %v3294 = vadd.f32 %v3181, %v3293
    %v3295 = vpop.f32.mrb[0].mxu0
    %v3296 = vadd.f32 %v3183, %v3295
    %v3297 = vpop.f32.mrb[0].mxu0
    %v3298 = vadd.f32 %v3185, %v3297
    %3299 = vmatprep.mubr.bf16.mxu0 %v1041
    %3300 = vmatmul.mubr.bf16.gmra.mrb[0].mxu0 %v1040
    %v3301 = vpop.f32.mrb[0].mxu0
    %v3302 = vadd.f32 %v3189, %v3301
    %v3303 = vpop.f32.mrb[0].mxu0
    %v3304 = vadd.f32 %v3191, %v3303
    %v3305 = vpop.f32.mrb[0].mxu0
    %v3306 = vadd.f32 %v3193, %v3305
    %v3307 = vpop.f32.mrb[0].mxu0
    %v3308 = vadd.f32 %v3195, %v3307
    %3309 = vdwg.mxu0
    %3310 = vmatprep.subr.bf16.mxu0 %v2249
    %3311 = vmatpush1.bf16.msra.mxu0 %v2248
    %3312 = vmatprep.subr.bf16.mxu0 %v2251
    %3313 = vmatpush1.bf16.msra.mxu0 %v2250
    %3314 = vmatprep.subr.bf16.mxu0 %v2253
    %3315 = vmatpush1.bf16.msra.mxu0 %v2252
    %3316 = vmatprep.subr.bf16.mxu0 %v2255
    %3317 = vmatpush1.bf16.msra.mxu0 %v2254
    %3318 = vmatprep.subr.bf16.mxu0 %v2257
    %3319 = vmatpush1.bf16.msra.mxu0 %v2256
    %3320 = vmatprep.subr.bf16.mxu0 %v2259
    %3321 = vmatpush1.bf16.msra.mxu0 %v2258
    %3322 = vmatprep.subr.bf16.mxu0 %v2261
    %3323 = vmatpush1.bf16.msra.mxu0 %v2260
    %3324 = vmatprep.subr.bf16.mxu0 %v2263
    %3325 = vmatpush1.bf16.msra.mxu0 %v2262
    %3326 = vmatprep.subr.bf16.mxu0 %v2265
    %3327 = vmatpush1.bf16.msra.mxu0 %v2264
    %3328 = vmatprep.subr.bf16.mxu0 %v2267
    %3329 = vmatpush1.bf16.msra.mxu0 %v2266
    %3330 = vmatprep.subr.bf16.mxu0 %v2269
    %3331 = vmatpush1.bf16.msra.mxu0 %v2268
    %3332 = vmatprep.subr.bf16.mxu0 %v2271
    %3333 = vmatpush1.bf16.msra.mxu0 %v2270
    %3334 = vmatprep.subr.bf16.mxu0 %v2273
    %3335 = vmatpush1.bf16.msra.mxu0 %v2272
    %3336 = vmatprep.subr.bf16.mxu0 %v2275
    %3337 = vmatpush1.bf16.msra.mxu0 %v2274
    %3338 = vmatprep.subr.bf16.mxu0 %v2277
    %3339 = vmatpush1.bf16.msra.mxu0 %v2276
    %3340 = vmatprep.subr.bf16.mxu0 %v2279
    %3341 = vmatpush1.bf16.msra.mxu0 %v2278
    %3342 = vmatprep.mubr.bf16.mxu0 %v917
    %3343 = vmatmul.mubr.bf16.gmra.mrb[0].mxu0 %v916
    %v3344 = vpop.f32.mrb[0].mxu0
    %v3345 = vadd.f32 %v3232, %v3344
    %v3346 = vpop.f32.mrb[0].mxu0
    %v3347 = vadd.f32 %v3234, %v3346
    %v3348 = vpop.f32.mrb[0].mxu0
    %v3349 = vadd.f32 %v3236, %v3348
    %v3350 = vpop.f32.mrb[0].mxu0
    %v3351 = vadd.f32 %v3238, %v3350
    %3352 = vmatprep.mubr.bf16.mxu0 %v935
    %3353 = vmatmul.mubr.bf16.gmra.mrb[0].mxu0 %v934
    %v3354 = vpop.f32.mrb[0].mxu0
    %v3355 = vadd.f32 %v3242, %v3354
    %v3356 = vpop.f32.mrb[0].mxu0
    %v3357 = vadd.f32 %v3244, %v3356
    %v3358 = vpop.f32.mrb[0].mxu0
    %v3359 = vadd.f32 %v3246, %v3358
    %v3360 = vpop.f32.mrb[0].mxu0
    %v3361 = vadd.f32 %v3248, %v3360
    %3362 = vmatprep.mubr.bf16.mxu0 %v953
    %3363 = vmatmul.mubr.bf16.gmra.mrb[0].mxu0 %v952
    %v3364 = vpop.f32.mrb[0].mxu0
    %v3365 = vadd.f32 %v3252, %v3364
    %v3366 = vpop.f32.mrb[0].mxu0
    %v3367 = vadd.f32 %v3254, %v3366
    %v3368 = vpop.f32.mrb[0].mxu0
    %v3369 = vadd.f32 %v3256, %v3368
    %v3370 = vpop.f32.mrb[0].mxu0
    %v3371 = vadd.f32 %v3258, %v3370
    %3372 = vmatprep.mubr.bf16.mxu0 %v971
    %3373 = vmatmul.mubr.bf16.gmra.mrb[0].mxu0 %v970
    %v3374 = vpop.f32.mrb[0].mxu0
    %v3375 = vadd.f32 %v3262, %v3374
    %v3376 = vpop.f32.mrb[0].mxu0
    %v3377 = vadd.f32 %v3264, %v3376
    %v3378 = vpop.f32.mrb[0].mxu0
    %v3379 = vadd.f32 %v3266, %v3378
    %v3380 = vpop.f32.mrb[0].mxu0
    %v3381 = vadd.f32 %v3268, %v3380
    %3382 = vmatprep.mubr.bf16.mxu0 %v989
    %3383 = vmatmul.mubr.bf16.gmra.mrb[0].mxu0 %v988
    %v3384 = vpop.f32.mrb[0].mxu0
    %v3385 = vadd.f32 %v3272, %v3384
    %v3386 = vpop.f32.mrb[0].mxu0
    %v3387 = vadd.f32 %v3274, %v3386
    %v3388 = vpop.f32.mrb[0].mxu0
    %v3389 = vadd.f32 %v3276, %v3388
    %v3390 = vpop.f32.mrb[0].mxu0
    %v3391 = vadd.f32 %v3278, %v3390
    %3392 = vmatprep.mubr.bf16.mxu0 %v1007
    %3393 = vmatmul.mubr.bf16.gmra.mrb[0].mxu0 %v1006
    %v3394 = vpop.f32.mrb[0].mxu0
    %v3395 = vadd.f32 %v3282, %v3394
    %v3396 = vpop.f32.mrb[0].mxu0
    %v3397 = vadd.f32 %v3284, %v3396
    %v3398 = vpop.f32.mrb[0].mxu0
    %v3399 = vadd.f32 %v3286, %v3398
    %v3400 = vpop.f32.mrb[0].mxu0
    %v3401 = vadd.f32 %v3288, %v3400
    %3402 = vmatprep.mubr.bf16.mxu0 %v1025
    %3403 = vmatmul.mubr.bf16.gmra.mrb[0].mxu0 %v1024
    %v3404 = vpop.f32.mrb[0].mxu0
    %v3405 = vadd.f32 %v3292, %v3404
    %v3406 = vpop.f32.mrb[0].mxu0
    %v3407 = vadd.f32 %v3294, %v3406
    %v3408 = vpop.f32.mrb[0].mxu0
    %v3409 = vadd.f32 %v3296, %v3408
    %v3410 = vpop.f32.mrb[0].mxu0
    %v3411 = vadd.f32 %v3298, %v3410
    %3412 = vmatprep.mubr.bf16.mxu0 %v1043
    %3413 = vmatmul.mubr.bf16.gmra.mrb[0].mxu0 %v1042
    %v3414 = vpop.f32.mrb[0].mxu0
    %v3415 = vadd.f32 %v3302, %v3414
    %v3416 = vpop.f32.mrb[0].mxu0
    %v3417 = vadd.f32 %v3304, %v3416
    %v3418 = vpop.f32.mrb[0].mxu0
    %v3419 = vadd.f32 %v3306, %v3418
    %v3420 = vpop.f32.mrb[0].mxu0
    %v3421 = vadd.f32 %v3308, %v3420
    %3422 = vdwg.mxu0
    %3423 = vmatprep.subr.bf16.mxu0 %v2281
    %3424 = vmatpush1.bf16.msra.mxu0 %v2280
    %3425 = vmatprep.subr.bf16.mxu0 %v2283
    %3426 = vmatpush1.bf16.msra.mxu0 %v2282
    %3427 = vmatprep.subr.bf16.mxu0 %v2285
    %3428 = vmatpush1.bf16.msra.mxu0 %v2284
    %3429 = vmatprep.subr.bf16.mxu0 %v2287
    %3430 = vmatpush1.bf16.msra.mxu0 %v2286
    %3431 = vmatprep.subr.bf16.mxu0 %v2289
    %3432 = vmatpush1.bf16.msra.mxu0 %v2288
    %3433 = vmatprep.subr.bf16.mxu0 %v2291
    %3434 = vmatpush1.bf16.msra.mxu0 %v2290
    %3435 = vmatprep.subr.bf16.mxu0 %v2293
    %3436 = vmatpush1.bf16.msra.mxu0 %v2292
    %3437 = vmatprep.subr.bf16.mxu0 %v2295
    %3438 = vmatpush1.bf16.msra.mxu0 %v2294
    %3439 = vmatprep.subr.bf16.mxu0 %v2297
    %3440 = vmatpush1.bf16.msra.mxu0 %v2296
    %3441 = vmatprep.subr.bf16.mxu0 %v2299
    %3442 = vmatpush1.bf16.msra.mxu0 %v2298
    %3443 = vmatprep.subr.bf16.mxu0 %v2301
    %3444 = vmatpush1.bf16.msra.mxu0 %v2300
    %3445 = vmatprep.subr.bf16.mxu0 %v2303
    %3446 = vmatpush1.bf16.msra.mxu0 %v2302
    %3447 = vmatprep.subr.bf16.mxu0 %v2305
    %3448 = vmatpush1.bf16.msra.mxu0 %v2304
    %3449 = vmatprep.subr.bf16.mxu0 %v2307
    %3450 = vmatpush1.bf16.msra.mxu0 %v2306
    %3451 = vmatprep.subr.bf16.mxu0 %v2309
    %3452 = vmatpush1.bf16.msra.mxu0 %v2308
    %3453 = vmatprep.subr.bf16.mxu0 %v2311
    %3454 = vmatpush1.bf16.msra.mxu0 %v2310
    %3455 = vmatprep.mubr.bf16.mxu0 %v919
    %3456 = vmatmul.mubr.bf16.gmra.mrb[0].mxu0 %v918
    %v3457 = vpop.f32.mrb[0].mxu0
    %v3458 = vadd.f32 %v3345, %v3457
    %v3459 = vpop.f32.mrb[0].mxu0
    %v3460 = vadd.f32 %v3347, %v3459
    %v3461 = vpop.f32.mrb[0].mxu0
    %v3462 = vadd.f32 %v3349, %v3461
    %v3463 = vpop.f32.mrb[0].mxu0
    %v3464 = vadd.f32 %v3351, %v3463
    %3465 = vmatprep.mubr.bf16.mxu0 %v937
    %3466 = vmatmul.mubr.bf16.gmra.mrb[0].mxu0 %v936
    %v3467 = vpop.f32.mrb[0].mxu0
    %v3468 = vadd.f32 %v3355, %v3467
    %v3469 = vpop.f32.mrb[0].mxu0
    %v3470 = vadd.f32 %v3357, %v3469
    %v3471 = vpop.f32.mrb[0].mxu0
    %v3472 = vadd.f32 %v3359, %v3471
    %v3473 = vpop.f32.mrb[0].mxu0
    %v3474 = vadd.f32 %v3361, %v3473
    %3475 = vmatprep.mubr.bf16.mxu0 %v955
    %3476 = vmatmul.mubr.bf16.gmra.mrb[0].mxu0 %v954
    %v3477 = vpop.f32.mrb[0].mxu0
    %v3478 = vadd.f32 %v3365, %v3477
    %v3479 = vpop.f32.mrb[0].mxu0
    %v3480 = vadd.f32 %v3367, %v3479
    %v3481 = vpop.f32.mrb[0].mxu0
    %v3482 = vadd.f32 %v3369, %v3481
    %v3483 = vpop.f32.mrb[0].mxu0
    %v3484 = vadd.f32 %v3371, %v3483
    %3485 = vmatprep.mubr.bf16.mxu0 %v973
    %3486 = vmatmul.mubr.bf16.gmra.mrb[0].mxu0 %v972
    %v3487 = vpop.f32.mrb[0].mxu0
    %v3488 = vadd.f32 %v3375, %v3487
    %v3489 = vpop.f32.mrb[0].mxu0
    %v3490 = vadd.f32 %v3377, %v3489
    %v3491 = vpop.f32.mrb[0].mxu0
    %v3492 = vadd.f32 %v3379, %v3491
    %v3493 = vpop.f32.mrb[0].mxu0
    %v3494 = vadd.f32 %v3381, %v3493
    %3495 = vmatprep.mubr.bf16.mxu0 %v991
    %3496 = vmatmul.mubr.bf16.gmra.mrb[0].mxu0 %v990
    %v3497 = vpop.f32.mrb[0].mxu0
    %v3498 = vadd.f32 %v3385, %v3497
    %v3499 = vpop.f32.mrb[0].mxu0
    %v3500 = vadd.f32 %v3387, %v3499
    %v3501 = vpop.f32.mrb[0].mxu0
    %v3502 = vadd.f32 %v3389, %v3501
    %v3503 = vpop.f32.mrb[0].mxu0
    %v3504 = vadd.f32 %v3391, %v3503
    %3505 = vmatprep.mubr.bf16.mxu0 %v1009
    %3506 = vmatmul.mubr.bf16.gmra.mrb[0].mxu0 %v1008
    %v3507 = vpop.f32.mrb[0].mxu0
    %v3508 = vadd.f32 %v3395, %v3507
    %v3509 = vpop.f32.mrb[0].mxu0
    %v3510 = vadd.f32 %v3397, %v3509
    %v3511 = vpop.f32.mrb[0].mxu0
    %v3512 = vadd.f32 %v3399, %v3511
    %v3513 = vpop.f32.mrb[0].mxu0
    %v3514 = vadd.f32 %v3401, %v3513
    %3515 = vmatprep.mubr.bf16.mxu0 %v1027
    %3516 = vmatmul.mubr.bf16.gmra.mrb[0].mxu0 %v1026
    %v3517 = vpop.f32.mrb[0].mxu0
    %v3518 = vadd.f32 %v3405, %v3517
    %v3519 = vpop.f32.mrb[0].mxu0
    %v3520 = vadd.f32 %v3407, %v3519
    %v3521 = vpop.f32.mrb[0].mxu0
    %v3522 = vadd.f32 %v3409, %v3521
    %v3523 = vpop.f32.mrb[0].mxu0
    %v3524 = vadd.f32 %v3411, %v3523
    %3525 = vmatprep.mubr.bf16.mxu0 %v1045
    %3526 = vmatmul.mubr.bf16.gmra.mrb[0].mxu0 %v1044
    %v3527 = vpop.f32.mrb[0].mxu0
    %v3528 = vadd.f32 %v3415, %v3527
    %v3529 = vpop.f32.mrb[0].mxu0
    %v3530 = vadd.f32 %v3417, %v3529
    %v3531 = vpop.f32.mrb[0].mxu0
    %v3532 = vadd.f32 %v3419, %v3531
    %v3533 = vpop.f32.mrb[0].mxu0
    %v3534 = vadd.f32 %v3421, %v3533
    %3535 = vdwg.mxu0
    %3536 = vmatprep.subr.bf16.mxu0 %v2313
    %3537 = vmatpush1.bf16.msra.mxu0 %v2312
    %3538 = vmatprep.subr.bf16.mxu0 %v2315
    %3539 = vmatpush1.bf16.msra.mxu0 %v2314
    %3540 = vmatprep.subr.bf16.mxu0 %v2317
    %3541 = vmatpush1.bf16.msra.mxu0 %v2316
    %3542 = vmatprep.subr.bf16.mxu0 %v2319
    %3543 = vmatpush1.bf16.msra.mxu0 %v2318
    %3544 = vmatprep.subr.bf16.mxu0 %v2321
    %3545 = vmatpush1.bf16.msra.mxu0 %v2320
    %3546 = vmatprep.subr.bf16.mxu0 %v2323
    %3547 = vmatpush1.bf16.msra.mxu0 %v2322
    %3548 = vmatprep.subr.bf16.mxu0 %v2325
    %3549 = vmatpush1.bf16.msra.mxu0 %v2324
    %3550 = vmatprep.subr.bf16.mxu0 %v2327
    %3551 = vmatpush1.bf16.msra.mxu0 %v2326
    %3552 = vmatprep.subr.bf16.mxu0 %v2329
    %3553 = vmatpush1.bf16.msra.mxu0 %v2328
    %3554 = vmatprep.subr.bf16.mxu0 %v2331
    %3555 = vmatpush1.bf16.msra.mxu0 %v2330
    %3556 = vmatprep.subr.bf16.mxu0 %v2333
    %3557 = vmatpush1.bf16.msra.mxu0 %v2332
    %3558 = vmatprep.subr.bf16.mxu0 %v2335
    %3559 = vmatpush1.bf16.msra.mxu0 %v2334
    %3560 = vmatprep.subr.bf16.mxu0 %v2337
    %3561 = vmatpush1.bf16.msra.mxu0 %v2336
    %3562 = vmatprep.subr.bf16.mxu0 %v2339
    %3563 = vmatpush1.bf16.msra.mxu0 %v2338
    %3564 = vmatprep.subr.bf16.mxu0 %v2341
    %3565 = vmatpush1.bf16.msra.mxu0 %v2340
    %3566 = vmatprep.subr.bf16.mxu0 %v2343
    %3567 = vmatpush1.bf16.msra.mxu0 %v2342
    %3568 = vmatprep.mubr.bf16.mxu0 %v921
    %3569 = vmatmul.mubr.bf16.gmra.mrb[0].mxu0 %v920
    %v3570 = vpop.f32.mrb[0].mxu0
    %v3571 = vadd.f32 %v3458, %v3570
    %v3572 = vpop.f32.mrb[0].mxu0
    %v3573 = vadd.f32 %v3460, %v3572
    %v3574 = vpop.f32.mrb[0].mxu0
    %v3575 = vadd.f32 %v3462, %v3574
    %v3576 = vpop.f32.mrb[0].mxu0
    %v3577 = vadd.f32 %v3464, %v3576
    %3578 = vmatprep.mubr.bf16.mxu0 %v939
    %3579 = vmatmul.mubr.bf16.gmra.mrb[0].mxu0 %v938
    %v3580 = vpop.f32.mrb[0].mxu0
    %v3581 = vadd.f32 %v3468, %v3580
    %v3582 = vpop.f32.mrb[0].mxu0
    %v3583 = vadd.f32 %v3470, %v3582
    %v3584 = vpop.f32.mrb[0].mxu0
    %v3585 = vadd.f32 %v3472, %v3584
    %v3586 = vpop.f32.mrb[0].mxu0
    %v3587 = vadd.f32 %v3474, %v3586
    %3588 = vmatprep.mubr.bf16.mxu0 %v957
    %3589 = vmatmul.mubr.bf16.gmra.mrb[0].mxu0 %v956
    %v3590 = vpop.f32.mrb[0].mxu0
    %v3591 = vadd.f32 %v3478, %v3590
    %v3592 = vpop.f32.mrb[0].mxu0
    %v3593 = vadd.f32 %v3480, %v3592
    %v3594 = vpop.f32.mrb[0].mxu0
    %v3595 = vadd.f32 %v3482, %v3594
    %v3596 = vpop.f32.mrb[0].mxu0
    %v3597 = vadd.f32 %v3484, %v3596
    %3598 = vmatprep.mubr.bf16.mxu0 %v975
    %3599 = vmatmul.mubr.bf16.gmra.mrb[0].mxu0 %v974
    %v3600 = vpop.f32.mrb[0].mxu0
    %v3601 = vadd.f32 %v3488, %v3600
    %v3602 = vpop.f32.mrb[0].mxu0
    %v3603 = vadd.f32 %v3490, %v3602
    %v3604 = vpop.f32.mrb[0].mxu0
    %v3605 = vadd.f32 %v3492, %v3604
    %v3606 = vpop.f32.mrb[0].mxu0
    %v3607 = vadd.f32 %v3494, %v3606
    %3608 = vmatprep.mubr.bf16.mxu0 %v993
    %3609 = vmatmul.mubr.bf16.gmra.mrb[0].mxu0 %v992
    %v3610 = vpop.f32.mrb[0].mxu0
    %v3611 = vadd.f32 %v3498, %v3610
    %v3612 = vpop.f32.mrb[0].mxu0
    %v3613 = vadd.f32 %v3500, %v3612
    %v3614 = vpop.f32.mrb[0].mxu0
    %v3615 = vadd.f32 %v3502, %v3614
    %v3616 = vpop.f32.mrb[0].mxu0
    %v3617 = vadd.f32 %v3504, %v3616
    %3618 = vmatprep.mubr.bf16.mxu0 %v1011
    %3619 = vmatmul.mubr.bf16.gmra.mrb[0].mxu0 %v1010
    %v3620 = vpop.f32.mrb[0].mxu0
    %v3621 = vadd.f32 %v3508, %v3620
    %v3622 = vpop.f32.mrb[0].mxu0
    %v3623 = vadd.f32 %v3510, %v3622
    %v3624 = vpop.f32.mrb[0].mxu0
    %v3625 = vadd.f32 %v3512, %v3624
    %v3626 = vpop.f32.mrb[0].mxu0
    %v3627 = vadd.f32 %v3514, %v3626
    %3628 = vmatprep.mubr.bf16.mxu0 %v1029
    %3629 = vmatmul.mubr.bf16.gmra.mrb[0].mxu0 %v1028
    %v3630 = vpop.f32.mrb[0].mxu0
    %v3631 = vadd.f32 %v3518, %v3630
    %v3632 = vpop.f32.mrb[0].mxu0
    %v3633 = vadd.f32 %v3520, %v3632
    %v3634 = vpop.f32.mrb[0].mxu0
    %v3635 = vadd.f32 %v3522, %v3634
    %v3636 = vpop.f32.mrb[0].mxu0
    %v3637 = vadd.f32 %v3524, %v3636
    %3638 = vmatprep.mubr.bf16.mxu0 %v1047
    %3639 = vmatmul.mubr.bf16.gmra.mrb[0].mxu0 %v1046
    %v3640 = vpop.f32.mrb[0].mxu0
    %v3641 = vadd.f32 %v3528, %v3640
    %v3642 = vpop.f32.mrb[0].mxu0
    %v3643 = vadd.f32 %v3530, %v3642
    %v3644 = vpop.f32.mrb[0].mxu0
    %v3645 = vadd.f32 %v3532, %v3644
    %v3646 = vpop.f32.mrb[0].mxu0
    %v3647 = vadd.f32 %v3534, %v3646
    %3648 = vdwg.mxu0
    %v3649 = vld [vmem:[%s2] sm:$0x3]
    %v3650 = vld [vmem:[%s3] sm:$0x3]
    %v3651 = vadd.f32 %v3571, %v3575
    %v3652 = vadd.f32 %v3651, %v3581
    %v3653 = vadd.f32 %v3652, %v3585
    %v3654 = vadd.f32 %v3653, %v3591
    %v3655 = vadd.f32 %v3654, %v3595
    %v3656 = vadd.f32 %v3655, %v3601
    %v3657 = vadd.f32 %v3656, %v3605
    %v3658 = vadd.f32 %v3657, %v3611
    %v3659 = vadd.f32 %v3658, %v3615
    %v3660 = vadd.f32 %v3659, %v3621
    %v3661 = vadd.f32 %v3660, %v3625
    %v3662 = vadd.f32 %v3661, %v3631
    %v3663 = vadd.f32 %v3662, %v3635
    %v3664 = vadd.f32 %v3663, %v3641
    %v3665 = vadd.f32 %v3664, %v3645
    %v3666 = vrot.slane %v3665, 4
    %v3667 = vadd.f32 %v3665, %v3666
    %v3668 = vrot.slane %v3667, 2
    %v3669 = vadd.f32 %v3667, %v3668
    %v3670 = vrot.slane %v3669, 1
    %v3671 = vadd.f32 %v3669, %v3670
    %v3672 = vadd.f32 %v3573, %v3577
    %v3673 = vadd.f32 %v3672, %v3583
    %v3674 = vadd.f32 %v3673, %v3587
    %v3675 = vadd.f32 %v3674, %v3593
    %v3676 = vadd.f32 %v3675, %v3597
    %v3677 = vadd.f32 %v3676, %v3603
    %v3678 = vadd.f32 %v3677, %v3607
    %v3679 = vadd.f32 %v3678, %v3613
    %v3680 = vadd.f32 %v3679, %v3617
    %v3681 = vadd.f32 %v3680, %v3623
    %v3682 = vadd.f32 %v3681, %v3627
    %v3683 = vadd.f32 %v3682, %v3633
    %v3684 = vadd.f32 %v3683, %v3637
    %v3685 = vadd.f32 %v3684, %v3643
    %v3686 = vadd.f32 %v3685, %v3647
    %v3687 = vrot.slane %v3686, 4
    %v3688 = vadd.f32 %v3686, %v3687
    %v3689 = vrot.slane %v3688, 2
    %v3690 = vadd.f32 %v3688, %v3689
    %v3691 = vrot.slane %v3690, 1
    %v3692 = vadd.f32 %v3690, %v3691
    %v3693 = vrcp.pop 128.0
    %v3694 = vmul.f32 %v3671, %v3693
    %v3695 = vmul.f32 %v3692, %v3693
    %v3696 = vsub.f32 %v3571, %v3694
    %v3697 = vsub.f32 %v3573, %v3695
    %v3698 = vsub.f32 %v3575, %v3694
    %v3699 = vsub.f32 %v3577, %v3695
    %v3700 = vsub.f32 %v3581, %v3694
    %v3701 = vsub.f32 %v3583, %v3695
    %v3702 = vsub.f32 %v3585, %v3694
    %v3703 = vsub.f32 %v3587, %v3695
    %v3704 = vsub.f32 %v3591, %v3694
    %v3705 = vsub.f32 %v3593, %v3695
    %v3706 = vsub.f32 %v3595, %v3694
    %v3707 = vsub.f32 %v3597, %v3695
    %v3708 = vsub.f32 %v3601, %v3694
    %v3709 = vsub.f32 %v3603, %v3695
    %v3710 = vsub.f32 %v3605, %v3694
    %v3711 = vsub.f32 %v3607, %v3695
    %v3712 = vsub.f32 %v3611, %v3694
    %v3713 = vsub.f32 %v3613, %v3695
    %v3714 = vsub.f32 %v3615, %v3694
    %v3715 = vsub.f32 %v3617, %v3695
    %v3716 = vsub.f32 %v3621, %v3694
    %v3717 = vsub.f32 %v3623, %v3695
    %v3718 = vsub.f32 %v3625, %v3694
    %v3719 = vsub.f32 %v3627, %v3695
    %v3720 = vsub.f32 %v3631, %v3694
    %v3721 = vsub.f32 %v3633, %v3695
    %v3722 = vsub.f32 %v3635, %v3694
    %v3723 = vsub.f32 %v3637, %v3695
    %v3724 = vsub.f32 %v3641, %v3694
    %v3725 = vsub.f32 %v3643, %v3695
    %v3726 = vsub.f32 %v3645, %v3694
    %v3727 = vsub.f32 %v3647, %v3695
    %v3728 = vmul.f32 %v3696, %v3696
    %v3729 = vmul.f32 %v3697, %v3697
    %v3730 = vmul.f32 %v3698, %v3698
    %v3731 = vmul.f32 %v3699, %v3699
    %v3732 = vmul.f32 %v3700, %v3700
    %v3733 = vmul.f32 %v3701, %v3701
    %v3734 = vmul.f32 %v3702, %v3702
    %v3735 = vmul.f32 %v3703, %v3703
    %v3736 = vmul.f32 %v3704, %v3704
    %v3737 = vmul.f32 %v3705, %v3705
    %v3738 = vmul.f32 %v3706, %v3706
    %v3739 = vmul.f32 %v3707, %v3707
    %v3740 = vmul.f32 %v3708, %v3708
    %v3741 = vmul.f32 %v3709, %v3709
    %v3742 = vmul.f32 %v3710, %v3710
    %v3743 = vmul.f32 %v3711, %v3711
    %v3744 = vmul.f32 %v3712, %v3712
    %v3745 = vmul.f32 %v3713, %v3713
    %v3746 = vmul.f32 %v3714, %v3714
    %v3747 = vmul.f32 %v3715, %v3715
    %v3748 = vmul.f32 %v3716, %v3716
    %v3749 = vmul.f32 %v3717, %v3717
    %v3750 = vmul.f32 %v3718, %v3718
    %v3751 = vmul.f32 %v3719, %v3719
    %v3752 = vmul.f32 %v3720, %v3720
    %v3753 = vmul.f32 %v3721, %v3721
    %v3754 = vmul.f32 %v3722, %v3722
    %v3755 = vmul.f32 %v3723, %v3723
    %v3756 = vmul.f32 %v3724, %v3724
    %v3757 = vmul.f32 %v3725, %v3725
    %v3758 = vmul.f32 %v3726, %v3726
    %v3759 = vmul.f32 %v3727, %v3727
    %v3760 = vadd.f32 %v3728, %v3730
    %v3761 = vadd.f32 %v3760, %v3732
    %v3762 = vadd.f32 %v3761, %v3734
    %v3763 = vadd.f32 %v3762, %v3736
    %v3764 = vadd.f32 %v3763, %v3738
    %v3765 = vadd.f32 %v3764, %v3740
    %v3766 = vadd.f32 %v3765, %v3742
    %v3767 = vadd.f32 %v3766, %v3744
    %v3768 = vadd.f32 %v3767, %v3746
    %v3769 = vadd.f32 %v3768, %v3748
    %v3770 = vadd.f32 %v3769, %v3750
    %v3771 = vadd.f32 %v3770, %v3752
    %v3772 = vadd.f32 %v3771, %v3754
    %v3773 = vadd.f32 %v3772, %v3756
    %v3774 = vadd.f32 %v3773, %v3758
    %v3775 = vrot.slane %v3774, 4
    %v3776 = vadd.f32 %v3774, %v3775
    %v3777 = vrot.slane %v3776, 2
    %v3778 = vadd.f32 %v3776, %v3777
    %v3779 = vrot.slane %v3778, 1
    %v3780 = vadd.f32 %v3778, %v3779
    %v3781 = vadd.f32 %v3729, %v3731
    %v3782 = vadd.f32 %v3781, %v3733
    %v3783 = vadd.f32 %v3782, %v3735
    %v3784 = vadd.f32 %v3783, %v3737
    %v3785 = vadd.f32 %v3784, %v3739
    %v3786 = vadd.f32 %v3785, %v3741
    %v3787 = vadd.f32 %v3786, %v3743
    %v3788 = vadd.f32 %v3787, %v3745
    %v3789 = vadd.f32 %v3788, %v3747
    %v3790 = vadd.f32 %v3789, %v3749
    %v3791 = vadd.f32 %v3790, %v3751
    %v3792 = vadd.f32 %v3791, %v3753
    %v3793 = vadd.f32 %v3792, %v3755
    %v3794 = vadd.f32 %v3793, %v3757
    %v3795 = vadd.f32 %v3794, %v3759
    %v3796 = vrot.slane %v3795, 4
    %v3797 = vadd.f32 %v3795, %v3796
    %v3798 = vrot.slane %v3797, 2
    %v3799 = vadd.f32 %v3797, %v3798
    %v3800 = vrot.slane %v3799, 1
    %v3801 = vadd.f32 %v3799, %v3800
    %v3802 = vmul.f32 %v3780, %v3693
    %v3803 = vmul.f32 %v3801, %v3693
    %v3804 = vadd.f32 %v3802, 1e-05
    %v3805 = vadd.f32 %v3803, 1e-05
    %v3806 = vrsqrt.pop %v3804
    %v3807 = vrsqrt.pop %v3805
    %v3808 = vmul.f32 %v3696, %v3806
    %v3809 = vmul.f32 %v3697, %v3807
    %v3810 = vmul.f32 %v3698, %v3806
    %v3811 = vmul.f32 %v3699, %v3807
    %v3812 = vmul.f32 %v3700, %v3806
    %v3813 = vmul.f32 %v3701, %v3807
    %v3814 = vmul.f32 %v3702, %v3806
    %v3815 = vmul.f32 %v3703, %v3807
    %v3816 = vmul.f32 %v3704, %v3806
    %v3817 = vmul.f32 %v3705, %v3807
    %v3818 = vmul.f32 %v3706, %v3806
    %v3819 = vmul.f32 %v3707, %v3807
    %v3820 = vmul.f32 %v3708, %v3806
    %v3821 = vmul.f32 %v3709, %v3807
    %v3822 = vmul.f32 %v3710, %v3806
    %v3823 = vmul.f32 %v3711, %v3807
    %v3824 = vmul.f32 %v3712, %v3806
    %v3825 = vmul.f32 %v3713, %v3807
    %v3826 = vmul.f32 %v3714, %v3806
    %v3827 = vmul.f32 %v3715, %v3807
    %v3828 = vmul.f32 %v3716, %v3806
    %v3829 = vmul.f32 %v3717, %v3807
    %v3830 = vmul.f32 %v3718, %v3806
    %v3831 = vmul.f32 %v3719, %v3807
    %v3832 = vmul.f32 %v3720, %v3806
    %v3833 = vmul.f32 %v3721, %v3807
    %v3834 = vmul.f32 %v3722, %v3806
    %v3835 = vmul.f32 %v3723, %v3807
    %v3836 = vmul.f32 %v3724, %v3806
    %v3837 = vmul.f32 %v3725, %v3807
    %v3838 = vmul.f32 %v3726, %v3806
    %v3839 = vmul.f32 %v3727, %v3807
    %v3841 = vlaneseq
    %v3842 = vshrl.u32 %v3841, 7
    %v3843 = vsub.s32 0, %v3842
    %v3844 = vrot.slane %v3649, %v3843
    %v3845 = vlaneseq
    %v3846 = vshrl.u32 %v3845, 7
    %v3847 = vsub.s32 1, %v3846
    %v3848 = vrot.slane %v3649, %v3847
    %v3851 = vmul.f32 %v3808, %v3844
    %v3852 = vmul.f32 %v3809, %v3848
    %v3853 = vmul.f32 %v3810, %v3844
    %v3854 = vmul.f32 %v3811, %v3848
    %v3855 = vmul.f32 %v3812, %v3844
    %v3856 = vmul.f32 %v3813, %v3848
    %v3857 = vmul.f32 %v3814, %v3844
    %v3858 = vmul.f32 %v3815, %v3848
    %v3859 = vmul.f32 %v3816, %v3844
    %v3860 = vmul.f32 %v3817, %v3848
    %v3861 = vmul.f32 %v3818, %v3844
    %v3862 = vmul.f32 %v3819, %v3848
    %v3863 = vmul.f32 %v3820, %v3844
    %v3864 = vmul.f32 %v3821, %v3848
    %v3865 = vmul.f32 %v3822, %v3844
    %v3866 = vmul.f32 %v3823, %v3848
    %v3867 = vmul.f32 %v3824, %v3844
    %v3868 = vmul.f32 %v3825, %v3848
    %v3869 = vmul.f32 %v3826, %v3844
    %v3870 = vmul.f32 %v3827, %v3848
    %v3871 = vmul.f32 %v3828, %v3844
    %v3872 = vmul.f32 %v3829, %v3848
    %v3873 = vmul.f32 %v3830, %v3844
    %v3874 = vmul.f32 %v3831, %v3848
    %v3875 = vmul.f32 %v3832, %v3844
    %v3876 = vmul.f32 %v3833, %v3848
    %v3877 = vmul.f32 %v3834, %v3844
    %v3878 = vmul.f32 %v3835, %v3848
    %v3879 = vmul.f32 %v3836, %v3844
    %v3880 = vmul.f32 %v3837, %v3848
    %v3881 = vmul.f32 %v3838, %v3844
    %v3882 = vmul.f32 %v3839, %v3848
    %v3884 = vlaneseq
    %v3885 = vshrl.u32 %v3884, 7
    %v3886 = vsub.s32 0, %v3885
    %v3887 = vrot.slane %v3650, %v3886
    %v3888 = vlaneseq
    %v3889 = vshrl.u32 %v3888, 7
    %v3890 = vsub.s32 1, %v3889
    %v3891 = vrot.slane %v3650, %v3890
    %v3894 = vadd.f32 %v3851, %v3887
    %v3895 = vadd.f32 %v3852, %v3891
    %v3896 = vadd.f32 %v3853, %v3887
    %v3897 = vadd.f32 %v3854, %v3891
    %v3898 = vadd.f32 %v3855, %v3887
    %v3899 = vadd.f32 %v3856, %v3891
    %v3900 = vadd.f32 %v3857, %v3887
    %v3901 = vadd.f32 %v3858, %v3891
    %v3902 = vadd.f32 %v3859, %v3887
    %v3903 = vadd.f32 %v3860, %v3891
    %v3904 = vadd.f32 %v3861, %v3887
    %v3905 = vadd.f32 %v3862, %v3891
    %v3906 = vadd.f32 %v3863, %v3887
    %v3907 = vadd.f32 %v3864, %v3891
    %v3908 = vadd.f32 %v3865, %v3887
    %v3909 = vadd.f32 %v3866, %v3891
    %v3910 = vadd.f32 %v3867, %v3887
    %v3911 = vadd.f32 %v3868, %v3891
    %v3912 = vadd.f32 %v3869, %v3887
    %v3913 = vadd.f32 %v3870, %v3891
    %v3914 = vadd.f32 %v3871, %v3887
    %v3915 = vadd.f32 %v3872, %v3891
    %v3916 = vadd.f32 %v3873, %v3887
    %v3917 = vadd.f32 %v3874, %v3891
    %v3918 = vadd.f32 %v3875, %v3887
    %v3919 = vadd.f32 %v3876, %v3891
    %v3920 = vadd.f32 %v3877, %v3887
    %v3921 = vadd.f32 %v3878, %v3891
    %v3922 = vadd.f32 %v3879, %v3887
    %v3923 = vadd.f32 %v3880, %v3891
    %v3924 = vadd.f32 %v3881, %v3887
    %v3925 = vadd.f32 %v3882, %v3891
    %v3926 = vmax.f32 %v3894, 0.0
    %v3927 = vmax.f32 %v3895, 0.0
    %v3928 = vmax.f32 %v3896, 0.0
    %v3929 = vmax.f32 %v3897, 0.0
    %v3930 = vmax.f32 %v3898, 0.0
    %v3931 = vmax.f32 %v3899, 0.0
    %v3932 = vmax.f32 %v3900, 0.0
    %v3933 = vmax.f32 %v3901, 0.0
    %v3934 = vmax.f32 %v3902, 0.0
    %v3935 = vmax.f32 %v3903, 0.0
    %v3936 = vmax.f32 %v3904, 0.0
    %v3937 = vmax.f32 %v3905, 0.0
    %v3938 = vmax.f32 %v3906, 0.0
    %v3939 = vmax.f32 %v3907, 0.0
    %v3940 = vmax.f32 %v3908, 0.0
    %v3941 = vmax.f32 %v3909, 0.0
    %v3942 = vmax.f32 %v3910, 0.0
    %v3943 = vmax.f32 %v3911, 0.0
    %v3944 = vmax.f32 %v3912, 0.0
    %v3945 = vmax.f32 %v3913, 0.0
    %v3946 = vmax.f32 %v3914, 0.0
    %v3947 = vmax.f32 %v3915, 0.0
    %v3948 = vmax.f32 %v3916, 0.0
    %v3949 = vmax.f32 %v3917, 0.0
    %v3950 = vmax.f32 %v3918, 0.0
    %v3951 = vmax.f32 %v3919, 0.0
    %v3952 = vmax.f32 %v3920, 0.0
    %v3953 = vmax.f32 %v3921, 0.0
    %v3954 = vmax.f32 %v3922, 0.0
    %v3955 = vmax.f32 %v3923, 0.0
    %v3956 = vmax.f32 %v3924, 0.0
    %v3957 = vmax.f32 %v3925, 0.0
    %v3958 = vpack.c.bf16 %v3928, %v3926
    %v3959 = vpack.c.bf16 %v3929, %v3927
    %v3960 = vpack.c.bf16 %v3932, %v3930
    %v3961 = vpack.c.bf16 %v3933, %v3931
    %v3962 = vpack.c.bf16 %v3936, %v3934
    %v3963 = vpack.c.bf16 %v3937, %v3935
    %v3964 = vpack.c.bf16 %v3940, %v3938
    %v3965 = vpack.c.bf16 %v3941, %v3939
    %v3966 = vpack.c.bf16 %v3944, %v3942
    %v3967 = vpack.c.bf16 %v3945, %v3943
    %v3968 = vpack.c.bf16 %v3948, %v3946
    %v3969 = vpack.c.bf16 %v3949, %v3947
    %v3970 = vpack.c.bf16 %v3952, %v3950
    %v3971 = vpack.c.bf16 %v3953, %v3951
    %v3972 = vpack.c.bf16 %v3956, %v3954
    %v3973 = vpack.c.bf16 %v3957, %v3955
    %v3974 = vld [vmem:[%s4] sm:$0xf]
    %v3975 = vld [vmem:[%s4 + $0x4] sm:$0xf]
    %v3976 = vld [vmem:[%s4 + $0x8] sm:$0xf]
    %v3977 = vld [vmem:[%s4 + $0xc] sm:$0xf]
    %v3978 = vld [vmem:[%s4 + $0x10] sm:$0xf]
    %v3979 = vld [vmem:[%s4 + $0x14] sm:$0xf]
    %v3980 = vld [vmem:[%s4 + $0x18] sm:$0xf]
    %v3981 = vld [vmem:[%s4 + $0x1c] sm:$0xf]
    %v3982 = vld [vmem:[%s4 + $0x20] sm:$0xf]
    %v3983 = vld [vmem:[%s4 + $0x24] sm:$0xf]
    %v3984 = vld [vmem:[%s4 + $0x28] sm:$0xf]
    %v3985 = vld [vmem:[%s4 + $0x2c] sm:$0xf]
    %v3986 = vld [vmem:[%s4 + $0x30] sm:$0xf]
    %v3987 = vld [vmem:[%s4 + $0x34] sm:$0xf]
    %v3988 = vld [vmem:[%s4 + $0x38] sm:$0xf]
    %v3989 = vld [vmem:[%s4 + $0x3c] sm:$0xf]
    %v3990 = vld [vmem:[%s4 + $0x40] sm:$0xf]
    %v3991 = vld [vmem:[%s4 + $0x44] sm:$0xf]
    %v3992 = vld [vmem:[%s4 + $0x48] sm:$0xf]
    %v3993 = vld [vmem:[%s4 + $0x4c] sm:$0xf]
    %v3994 = vld [vmem:[%s4 + $0x50] sm:$0xf]
    %v3995 = vld [vmem:[%s4 + $0x54] sm:$0xf]
    %v3996 = vld [vmem:[%s4 + $0x58] sm:$0xf]
    %v3997 = vld [vmem:[%s4 + $0x5c] sm:$0xf]
    %v3998 = vld [vmem:[%s4 + $0x60] sm:$0xf]
    %v3999 = vld [vmem:[%s4 + $0x64] sm:$0xf]
    %v4000 = vld [vmem:[%s4 + $0x68] sm:$0xf]
    %v4001 = vld [vmem:[%s4 + $0x6c] sm:$0xf]
    %v4002 = vld [vmem:[%s4 + $0x70] sm:$0xf]
    %v4003 = vld [vmem:[%s4 + $0x74] sm:$0xf]
    %v4004 = vld [vmem:[%s4 + $0x78] sm:$0xf]
    %v4005 = vld [vmem:[%s4 + $0x7c] sm:$0xf]
    %v4038 = vunpack.c.l.b16 %v3974
    %v4039 = vunpack.c.l.b16 %v3975
    %v4040 = vunpack.c.l.b16 %v3976
    %v4041 = vunpack.c.l.b16 %v3977
    %v4042 = vunpack.c.l.b16 %v3978
    %v4043 = vunpack.c.l.b16 %v3979
    %v4044 = vunpack.c.l.b16 %v3980
    %v4045 = vunpack.c.l.b16 %v3981
    %v4046 = vunpack.c.l.b16 %v3982
    %v4047 = vunpack.c.l.b16 %v3983
    %v4048 = vunpack.c.l.b16 %v3984
    %v4049 = vunpack.c.l.b16 %v3985
    %v4050 = vunpack.c.l.b16 %v3986
    %v4051 = vunpack.c.l.b16 %v3987
    %v4052 = vunpack.c.l.b16 %v3988
    %v4053 = vunpack.c.l.b16 %v3989
    %v4054 = vunpack.c.l.b16 %v3990
    %v4055 = vunpack.c.l.b16 %v3991
    %v4056 = vunpack.c.l.b16 %v3992
    %v4057 = vunpack.c.l.b16 %v3993
    %v4058 = vunpack.c.l.b16 %v3994
    %v4059 = vunpack.c.l.b16 %v3995
    %v4060 = vunpack.c.l.b16 %v3996
    %v4061 = vunpack.c.l.b16 %v3997
    %v4062 = vunpack.c.l.b16 %v3998
    %v4063 = vunpack.c.l.b16 %v3999
    %v4064 = vunpack.c.l.b16 %v4000
    %v4065 = vunpack.c.l.b16 %v4001
    %v4066 = vunpack.c.l.b16 %v4002
    %v4067 = vunpack.c.l.b16 %v4003
    %v4068 = vunpack.c.l.b16 %v4004
    %v4069 = vunpack.c.l.b16 %v4005
    %v4070 = vpack.c.b16 %v4039, %v4038
    %v4071 = vpack.c.b16 %v4041, %v4040
    %v4072 = vpack.c.b16 %v4043, %v4042
    %v4073 = vpack.c.b16 %v4045, %v4044
    %v4074 = vpack.c.b16 %v4047, %v4046
    %v4075 = vpack.c.b16 %v4049, %v4048
    %v4076 = vpack.c.b16 %v4051, %v4050
    %v4077 = vpack.c.b16 %v4053, %v4052
    %v4078 = vpack.c.b16 %v4055, %v4054
    %v4079 = vpack.c.b16 %v4057, %v4056
    %v4080 = vpack.c.b16 %v4059, %v4058
    %v4081 = vpack.c.b16 %v4061, %v4060
    %v4082 = vpack.c.b16 %v4063, %v4062
    %v4083 = vpack.c.b16 %v4065, %v4064
    %v4084 = vpack.c.b16 %v4067, %v4066
    %v4085 = vpack.c.b16 %v4069, %v4068
    %4102 = vmatprep.subr.bf16.mxu0 0
    %4103 = vmatpush1.bf16.msra.mxu0 %v4070
    %4104 = vmatprep.subr.bf16.mxu0 0
    %4105 = vmatpush1.bf16.msra.mxu0 %v4071
    %4106 = vmatprep.subr.bf16.mxu0 0
    %4107 = vmatpush1.bf16.msra.mxu0 %v4072
    %4108 = vmatprep.subr.bf16.mxu0 0
    %4109 = vmatpush1.bf16.msra.mxu0 %v4073
    %4110 = vmatprep.subr.bf16.mxu0 0
    %4111 = vmatpush1.bf16.msra.mxu0 %v4074
    %4112 = vmatprep.subr.bf16.mxu0 0
    %4113 = vmatpush1.bf16.msra.mxu0 %v4075
    %4114 = vmatprep.subr.bf16.mxu0 0
    %4115 = vmatpush1.bf16.msra.mxu0 %v4076
    %4116 = vmatprep.subr.bf16.mxu0 0
    %4117 = vmatpush1.bf16.msra.mxu0 %v4077
    %4118 = vmatprep.subr.bf16.mxu0 0
    %4119 = vmatpush1.bf16.msra.mxu0 %v4078
    %4120 = vmatprep.subr.bf16.mxu0 0
    %4121 = vmatpush1.bf16.msra.mxu0 %v4079
    %4122 = vmatprep.subr.bf16.mxu0 0
    %4123 = vmatpush1.bf16.msra.mxu0 %v4080
    %4124 = vmatprep.subr.bf16.mxu0 0
    %4125 = vmatpush1.bf16.msra.mxu0 %v4081
    %4126 = vmatprep.subr.bf16.mxu0 0
    %4127 = vmatpush1.bf16.msra.mxu0 %v4082
    %4128 = vmatprep.subr.bf16.mxu0 0
    %4129 = vmatpush1.bf16.msra.mxu0 %v4083
    %4130 = vmatprep.subr.bf16.mxu0 0
    %4131 = vmatpush1.bf16.msra.mxu0 %v4084
    %4132 = vmatprep.subr.bf16.mxu0 0
    %4133 = vmatpush1.bf16.msra.mxu0 %v4085
    %4134 = vmatprep.mubr.bf16.mxu0 %v3959
    %4135 = vmatmul.mubr.bf16.gmra.mrb[0].mxu0 %v3958
    %v4136 = vpop.f32.mrb[0].mxu0
    %v4137 = vadd.f32 0.0, %v4136
    %v4138 = vpop.f32.mrb[0].mxu0
    %v4139 = vpop.f32.mrb[0].mxu0
    %v4140 = vadd.f32 0.0, %v4139
    %v4141 = vpop.f32.mrb[0].mxu0
    %4142 = vmatprep.mubr.bf16.mxu0 %v3961
    %4143 = vmatmul.mubr.bf16.gmra.mrb[0].mxu0 %v3960
    %v4144 = vpop.f32.mrb[0].mxu0
    %v4145 = vadd.f32 0.0, %v4144
    %v4146 = vpop.f32.mrb[0].mxu0
    %v4147 = vpop.f32.mrb[0].mxu0
    %v4148 = vadd.f32 0.0, %v4147
    %v4149 = vpop.f32.mrb[0].mxu0
    %4150 = vmatprep.mubr.bf16.mxu0 %v3963
    %4151 = vmatmul.mubr.bf16.gmra.mrb[0].mxu0 %v3962
    %v4152 = vpop.f32.mrb[0].mxu0
    %v4153 = vadd.f32 0.0, %v4152
    %v4154 = vpop.f32.mrb[0].mxu0
    %v4155 = vpop.f32.mrb[0].mxu0
    %v4156 = vadd.f32 0.0, %v4155
    %v4157 = vpop.f32.mrb[0].mxu0
    %4158 = vmatprep.mubr.bf16.mxu0 %v3965
    %4159 = vmatmul.mubr.bf16.gmra.mrb[0].mxu0 %v3964
    %v4160 = vpop.f32.mrb[0].mxu0
    %v4161 = vadd.f32 0.0, %v4160
    %v4162 = vpop.f32.mrb[0].mxu0
    %v4163 = vpop.f32.mrb[0].mxu0
    %v4164 = vadd.f32 0.0, %v4163
    %v4165 = vpop.f32.mrb[0].mxu0
    %4166 = vmatprep.mubr.bf16.mxu0 %v3967
    %4167 = vmatmul.mubr.bf16.gmra.mrb[0].mxu0 %v3966
    %v4168 = vpop.f32.mrb[0].mxu0
    %v4169 = vadd.f32 0.0, %v4168
    %v4170 = vpop.f32.mrb[0].mxu0
    %v4171 = vpop.f32.mrb[0].mxu0
    %v4172 = vadd.f32 0.0, %v4171
    %v4173 = vpop.f32.mrb[0].mxu0
    %4174 = vmatprep.mubr.bf16.mxu0 %v3969
    %4175 = vmatmul.mubr.bf16.gmra.mrb[0].mxu0 %v3968
    %v4176 = vpop.f32.mrb[0].mxu0
    %v4177 = vadd.f32 0.0, %v4176
    %v4178 = vpop.f32.mrb[0].mxu0
    %v4179 = vpop.f32.mrb[0].mxu0
    %v4180 = vadd.f32 0.0, %v4179
    %v4181 = vpop.f32.mrb[0].mxu0
    %4182 = vmatprep.mubr.bf16.mxu0 %v3971
    %4183 = vmatmul.mubr.bf16.gmra.mrb[0].mxu0 %v3970
    %v4184 = vpop.f32.mrb[0].mxu0
    %v4185 = vadd.f32 0.0, %v4184
    %v4186 = vpop.f32.mrb[0].mxu0
    %v4187 = vpop.f32.mrb[0].mxu0
    %v4188 = vadd.f32 0.0, %v4187
    %v4189 = vpop.f32.mrb[0].mxu0
    %4190 = vmatprep.mubr.bf16.mxu0 %v3973
    %4191 = vmatmul.mubr.bf16.gmra.mrb[0].mxu0 %v3972
    %v4192 = vpop.f32.mrb[0].mxu0
    %v4193 = vadd.f32 0.0, %v4192
    %v4194 = vpop.f32.mrb[0].mxu0
    %v4195 = vpop.f32.mrb[0].mxu0
    %v4196 = vadd.f32 0.0, %v4195
    %v4197 = vpop.f32.mrb[0].mxu0
    %4198 = vdwg.mxu0
    %v4199 = vld [vmem:[%s5] sm:$0x1]
    %v4200 = vld [vmem:[%s6] sm:$0x1]
    %v4201 = vadd.f32 %v4137, %v4140
    %v4202 = vadd.f32 %v4201, %v4145
    %v4203 = vadd.f32 %v4202, %v4148
    %v4204 = vadd.f32 %v4203, %v4153
    %v4205 = vadd.f32 %v4204, %v4156
    %v4206 = vadd.f32 %v4205, %v4161
    %v4207 = vadd.f32 %v4206, %v4164
    %v4208 = vadd.f32 %v4207, %v4169
    %v4209 = vadd.f32 %v4208, %v4172
    %v4210 = vadd.f32 %v4209, %v4177
    %v4211 = vadd.f32 %v4210, %v4180
    %v4212 = vadd.f32 %v4211, %v4185
    %v4213 = vadd.f32 %v4212, %v4188
    %v4214 = vadd.f32 %v4213, %v4193
    %v4215 = vadd.f32 %v4214, %v4196
    %v4216 = vrot.slane %v4215, 4
    %v4217 = vadd.f32 %v4215, %v4216
    %v4218 = vrot.slane %v4217, 2
    %v4219 = vadd.f32 %v4217, %v4218
    %v4220 = vrot.slane %v4219, 1
    %v4221 = vadd.f32 %v4219, %v4220
    %v4222 = vmul.f32 %v4221, %v3693
    %v4223 = vsub.f32 %v4137, %v4222
    %v4224 = vsub.f32 %v4140, %v4222
    %v4225 = vsub.f32 %v4145, %v4222
    %v4226 = vsub.f32 %v4148, %v4222
    %v4227 = vsub.f32 %v4153, %v4222
    %v4228 = vsub.f32 %v4156, %v4222
    %v4229 = vsub.f32 %v4161, %v4222
    %v4230 = vsub.f32 %v4164, %v4222
    %v4231 = vsub.f32 %v4169, %v4222
    %v4232 = vsub.f32 %v4172, %v4222
    %v4233 = vsub.f32 %v4177, %v4222
    %v4234 = vsub.f32 %v4180, %v4222
    %v4235 = vsub.f32 %v4185, %v4222
    %v4236 = vsub.f32 %v4188, %v4222
    %v4237 = vsub.f32 %v4193, %v4222
    %v4238 = vsub.f32 %v4196, %v4222
    %v4239 = vmul.f32 %v4223, %v4223
    %v4240 = vmul.f32 %v4224, %v4224
    %v4241 = vmul.f32 %v4225, %v4225
    %v4242 = vmul.f32 %v4226, %v4226
    %v4243 = vmul.f32 %v4227, %v4227
    %v4244 = vmul.f32 %v4228, %v4228
    %v4245 = vmul.f32 %v4229, %v4229
    %v4246 = vmul.f32 %v4230, %v4230
    %v4247 = vmul.f32 %v4231, %v4231
    %v4248 = vmul.f32 %v4232, %v4232
    %v4249 = vmul.f32 %v4233, %v4233
    %v4250 = vmul.f32 %v4234, %v4234
    %v4251 = vmul.f32 %v4235, %v4235
    %v4252 = vmul.f32 %v4236, %v4236
    %v4253 = vmul.f32 %v4237, %v4237
    %v4254 = vmul.f32 %v4238, %v4238
    %v4255 = vadd.f32 %v4239, %v4240
    %v4256 = vadd.f32 %v4255, %v4241
    %v4257 = vadd.f32 %v4256, %v4242
    %v4258 = vadd.f32 %v4257, %v4243
    %v4259 = vadd.f32 %v4258, %v4244
    %v4260 = vadd.f32 %v4259, %v4245
    %v4261 = vadd.f32 %v4260, %v4246
    %v4262 = vadd.f32 %v4261, %v4247
    %v4263 = vadd.f32 %v4262, %v4248
    %v4264 = vadd.f32 %v4263, %v4249
    %v4265 = vadd.f32 %v4264, %v4250
    %v4266 = vadd.f32 %v4265, %v4251
    %v4267 = vadd.f32 %v4266, %v4252
    %v4268 = vadd.f32 %v4267, %v4253
    %v4269 = vadd.f32 %v4268, %v4254
    %v4270 = vrot.slane %v4269, 4
    %v4271 = vadd.f32 %v4269, %v4270
    %v4272 = vrot.slane %v4271, 2
    %v4273 = vadd.f32 %v4271, %v4272
    %v4274 = vrot.slane %v4273, 1
    %v4275 = vadd.f32 %v4273, %v4274
    %v4276 = vmul.f32 %v4275, %v3693
    %v4277 = vadd.f32 %v4276, 1e-05
    %v4278 = vrsqrt.pop %v4277
    %v4279 = vmul.f32 %v4223, %v4278
    %v4280 = vmul.f32 %v4224, %v4278
    %v4281 = vmul.f32 %v4225, %v4278
    %v4282 = vmul.f32 %v4226, %v4278
    %v4283 = vmul.f32 %v4227, %v4278
    %v4284 = vmul.f32 %v4228, %v4278
    %v4285 = vmul.f32 %v4229, %v4278
    %v4286 = vmul.f32 %v4230, %v4278
    %v4287 = vmul.f32 %v4231, %v4278
    %v4288 = vmul.f32 %v4232, %v4278
    %v4289 = vmul.f32 %v4233, %v4278
    %v4290 = vmul.f32 %v4234, %v4278
    %v4291 = vmul.f32 %v4235, %v4278
    %v4292 = vmul.f32 %v4236, %v4278
    %v4293 = vmul.f32 %v4237, %v4278
    %v4294 = vmul.f32 %v4238, %v4278
    %v4296 = vlaneseq
    %v4297 = vshrl.u32 %v4296, 7
    %v4298 = vsub.s32 0, %v4297
    %v4299 = vrot.slane %v4199, %v4298
    %v4301 = vmul.f32 %v4279, %v4299
    %v4302 = vmul.f32 %v4280, %v4299
    %v4303 = vmul.f32 %v4281, %v4299
    %v4304 = vmul.f32 %v4282, %v4299
    %v4305 = vmul.f32 %v4283, %v4299
    %v4306 = vmul.f32 %v4284, %v4299
    %v4307 = vmul.f32 %v4285, %v4299
    %v4308 = vmul.f32 %v4286, %v4299
    %v4309 = vmul.f32 %v4287, %v4299
    %v4310 = vmul.f32 %v4288, %v4299
    %v4311 = vmul.f32 %v4289, %v4299
    %v4312 = vmul.f32 %v4290, %v4299
    %v4313 = vmul.f32 %v4291, %v4299
    %v4314 = vmul.f32 %v4292, %v4299
    %v4315 = vmul.f32 %v4293, %v4299
    %v4316 = vmul.f32 %v4294, %v4299
    %v4318 = vlaneseq
    %v4319 = vshrl.u32 %v4318, 7
    %v4320 = vsub.s32 0, %v4319
    %v4321 = vrot.slane %v4200, %v4320
    %v4323 = vadd.f32 %v4301, %v4321
    %v4324 = vadd.f32 %v4302, %v4321
    %v4325 = vadd.f32 %v4303, %v4321
    %v4326 = vadd.f32 %v4304, %v4321
    %v4327 = vadd.f32 %v4305, %v4321
    %v4328 = vadd.f32 %v4306, %v4321
    %v4329 = vadd.f32 %v4307, %v4321
    %v4330 = vadd.f32 %v4308, %v4321
    %v4331 = vadd.f32 %v4309, %v4321
    %v4332 = vadd.f32 %v4310, %v4321
    %v4333 = vadd.f32 %v4311, %v4321
    %v4334 = vadd.f32 %v4312, %v4321
    %v4335 = vadd.f32 %v4313, %v4321
    %v4336 = vadd.f32 %v4314, %v4321
    %v4337 = vadd.f32 %v4315, %v4321
    %v4338 = vadd.f32 %v4316, %v4321
    %v4339 = vld [vmem:[%s7] sm:$0xf]
    %v4340 = vld [vmem:[%s7 + $0x4] sm:$0xf]
    %v4341 = vld [vmem:[%s7 + $0x8] sm:$0xf]
    %v4342 = vld [vmem:[%s7 + $0xc] sm:$0xf]
    %v4343 = vld [vmem:[%s7 + $0x10] sm:$0xf]
    %v4344 = vld [vmem:[%s7 + $0x14] sm:$0xf]
    %v4345 = vld [vmem:[%s7 + $0x18] sm:$0xf]
    %v4346 = vld [vmem:[%s7 + $0x1c] sm:$0xf]
    %v4347 = vld [vmem:[%s7 + $0x20] sm:$0xf]
    %v4348 = vld [vmem:[%s7 + $0x24] sm:$0xf]
    %v4349 = vld [vmem:[%s7 + $0x28] sm:$0xf]
    %v4350 = vld [vmem:[%s7 + $0x2c] sm:$0xf]
    %v4351 = vld [vmem:[%s7 + $0x30] sm:$0xf]
    %v4352 = vld [vmem:[%s7 + $0x34] sm:$0xf]
    %v4353 = vld [vmem:[%s7 + $0x38] sm:$0xf]
    %v4354 = vld [vmem:[%s7 + $0x3c] sm:$0xf]
    %v4355 = vld [vmem:[%s8] sm:$0xf]
    %v4356 = vld [vmem:[%s8 + $0x4] sm:$0xf]
    %v4357 = vld [vmem:[%s8 + $0x8] sm:$0xf]
    %v4358 = vld [vmem:[%s8 + $0xc] sm:$0xf]
    %v4359 = vld [vmem:[%s8 + $0x10] sm:$0xf]
    %v4360 = vld [vmem:[%s8 + $0x14] sm:$0xf]
    %v4361 = vld [vmem:[%s8 + $0x18] sm:$0xf]
    %v4362 = vld [vmem:[%s8 + $0x1c] sm:$0xf]
    %v4379 = vunpack.c.l.b16 %v4339
    %v4380 = vunpack.c.l.b16 %v4340
    %v4381 = vunpack.c.l.b16 %v4341
    %v4382 = vunpack.c.l.b16 %v4342
    %v4383 = vunpack.c.l.b16 %v4343
    %v4384 = vunpack.c.l.b16 %v4344
    %v4385 = vunpack.c.l.b16 %v4345
    %v4386 = vunpack.c.l.b16 %v4346
    %v4387 = vunpack.c.l.b16 %v4347
    %v4388 = vunpack.c.l.b16 %v4348
    %v4389 = vunpack.c.l.b16 %v4349
    %v4390 = vunpack.c.l.b16 %v4350
    %v4391 = vunpack.c.l.b16 %v4351
    %v4392 = vunpack.c.l.b16 %v4352
    %v4393 = vunpack.c.l.b16 %v4353
    %v4394 = vunpack.c.l.b16 %v4354
    %v4395 = vpack.c.b16 %v4380, %v4379
    %v4396 = vpack.c.b16 %v4382, %v4381
    %v4397 = vpack.c.b16 %v4384, %v4383
    %v4398 = vpack.c.b16 %v4386, %v4385
    %v4399 = vpack.c.b16 %v4388, %v4387
    %v4400 = vpack.c.b16 %v4390, %v4389
    %v4401 = vpack.c.b16 %v4392, %v4391
    %v4402 = vpack.c.b16 %v4394, %v4393
    %v4411 = vunpack.c.l.b16 %v4355
    %v4412 = vunpack.c.l.b16 %v4356
    %v4413 = vunpack.c.l.b16 %v4357
    %v4414 = vunpack.c.l.b16 %v4358
    %v4415 = vunpack.c.l.b16 %v4359
    %v4416 = vunpack.c.l.b16 %v4360
    %v4417 = vunpack.c.l.b16 %v4361
    %v4418 = vunpack.c.l.b16 %v4362
    %v4419 = vpack.c.b16 %v4412, %v4411
    %v4420 = vpack.c.b16 %v4414, %v4413
    %v4421 = vpack.c.b16 %v4416, %v4415
    %v4422 = vpack.c.b16 %v4418, %v4417
    %vm4427 = vcmask 523264
    %v4429 = vsel %vm4427, %v4395, 0
    %v4432 = vsel %vm4427, %v4396, 0
    %v4435 = vsel %vm4427, %v4397, 0
    %v4438 = vsel %vm4427, %v4398, 0
    %v4441 = vsel %vm4427, %v4399, 0
    %v4444 = vsel %vm4427, %v4400, 0
    %v4447 = vsel %vm4427, %v4401, 0
    %v4450 = vsel %vm4427, %v4402, 0
    %4452 = vmatprep.subr.bf16.mxu0 0
    %4453 = vmatpush1.bf16.msra.mxu0 %v4419
    %4454 = vmatprep.subr.bf16.mxu0 0
    %4455 = vmatpush1.bf16.msra.mxu0 %v4420
    %4456 = vmatprep.subr.bf16.mxu0 0
    %4457 = vmatpush1.bf16.msra.mxu0 %v4421
    %4458 = vmatprep.subr.bf16.mxu0 0
    %4459 = vmatpush1.bf16.msra.mxu0 %v4422
    %4460 = vmatprep.subr.bf16.mxu0 0
    %4461 = vmatpush1.bf16.msra.mxu0 0
    %4462 = vmatprep.subr.bf16.mxu0 0
    %4463 = vmatpush1.bf16.msra.mxu0 0
    %4464 = vmatprep.subr.bf16.mxu0 0
    %4465 = vmatpush1.bf16.msra.mxu0 0
    %4466 = vmatprep.subr.bf16.mxu0 0
    %4467 = vmatpush1.bf16.msra.mxu0 0
    %4468 = vmatprep.subr.bf16.mxu0 0
    %4469 = vmatpush1.bf16.msra.mxu0 0
    %4470 = vmatprep.subr.bf16.mxu0 0
    %4471 = vmatpush1.bf16.msra.mxu0 0
    %4472 = vmatprep.subr.bf16.mxu0 0
    %4473 = vmatpush1.bf16.msra.mxu0 0
    %4474 = vmatprep.subr.bf16.mxu0 0
    %4475 = vmatpush1.bf16.msra.mxu0 0
    %4476 = vmatprep.subr.bf16.mxu0 0
    %4477 = vmatpush1.bf16.msra.mxu0 0
    %4478 = vmatprep.subr.bf16.mxu0 0
    %4479 = vmatpush1.bf16.msra.mxu0 0
    %4480 = vmatprep.subr.bf16.mxu0 0
    %4481 = vmatpush1.bf16.msra.mxu0 0
    %4482 = vmatprep.subr.bf16.mxu0 0
    %4483 = vmatpush1.bf16.msra.mxu0 0
    %4484 = vmatprep.mubr.bf16.mxu0 0
    %4485 = vmatmul.mubr.bf16.gmra.mrb[0].mxu0 %v4429
    %v4486 = vpop.f32.mrb[0].mxu0
    %v4487 = vadd.f32 0.0, %v4486
    %v4488 = vpop.f32.mrb[0].mxu0
    %v4489 = vpop.f32.mrb[0].mxu0
    %v4490 = vadd.f32 0.0, %v4489
    %v4491 = vpop.f32.mrb[0].mxu0
    %4492 = vmatprep.mubr.bf16.mxu0 0
    %4493 = vmatmul.mubr.bf16.gmra.mrb[0].mxu0 %v4432
    %v4494 = vpop.f32.mrb[0].mxu0
    %v4495 = vadd.f32 0.0, %v4494
    %v4496 = vpop.f32.mrb[0].mxu0
    %v4497 = vpop.f32.mrb[0].mxu0
    %v4498 = vadd.f32 0.0, %v4497
    %v4499 = vpop.f32.mrb[0].mxu0
    %4500 = vmatprep.mubr.bf16.mxu0 0
    %4501 = vmatmul.mubr.bf16.gmra.mrb[0].mxu0 %v4435
    %v4502 = vpop.f32.mrb[0].mxu0
    %v4503 = vadd.f32 0.0, %v4502
    %v4504 = vpop.f32.mrb[0].mxu0
    %v4505 = vpop.f32.mrb[0].mxu0
    %v4506 = vadd.f32 0.0, %v4505
    %v4507 = vpop.f32.mrb[0].mxu0
    %4508 = vmatprep.mubr.bf16.mxu0 0
    %4509 = vmatmul.mubr.bf16.gmra.mrb[0].mxu0 %v4438
    %v4510 = vpop.f32.mrb[0].mxu0
    %v4511 = vadd.f32 0.0, %v4510
    %v4512 = vpop.f32.mrb[0].mxu0
    %v4513 = vpop.f32.mrb[0].mxu0
    %v4514 = vadd.f32 0.0, %v4513
    %v4515 = vpop.f32.mrb[0].mxu0
    %4516 = vmatprep.mubr.bf16.mxu0 0
    %4517 = vmatmul.mubr.bf16.gmra.mrb[0].mxu0 %v4441
    %v4518 = vpop.f32.mrb[0].mxu0
    %v4519 = vadd.f32 0.0, %v4518
    %v4520 = vpop.f32.mrb[0].mxu0
    %v4521 = vpop.f32.mrb[0].mxu0
    %v4522 = vadd.f32 0.0, %v4521
    %v4523 = vpop.f32.mrb[0].mxu0
    %4524 = vmatprep.mubr.bf16.mxu0 0
    %4525 = vmatmul.mubr.bf16.gmra.mrb[0].mxu0 %v4444
    %v4526 = vpop.f32.mrb[0].mxu0
    %v4527 = vadd.f32 0.0, %v4526
    %v4528 = vpop.f32.mrb[0].mxu0
    %v4529 = vpop.f32.mrb[0].mxu0
    %v4530 = vadd.f32 0.0, %v4529
    %v4531 = vpop.f32.mrb[0].mxu0
    %4532 = vmatprep.mubr.bf16.mxu0 0
    %4533 = vmatmul.mubr.bf16.gmra.mrb[0].mxu0 %v4447
    %v4534 = vpop.f32.mrb[0].mxu0
    %v4535 = vadd.f32 0.0, %v4534
    %v4536 = vpop.f32.mrb[0].mxu0
    %v4537 = vpop.f32.mrb[0].mxu0
    %v4538 = vadd.f32 0.0, %v4537
    %v4539 = vpop.f32.mrb[0].mxu0
    %4540 = vmatprep.mubr.bf16.mxu0 0
    %4541 = vmatmul.mubr.bf16.gmra.mrb[0].mxu0 %v4450
    %v4542 = vpop.f32.mrb[0].mxu0
    %v4543 = vadd.f32 0.0, %v4542
    %v4544 = vpop.f32.mrb[0].mxu0
    %v4545 = vpop.f32.mrb[0].mxu0
    %v4546 = vadd.f32 0.0, %v4545
    %v4547 = vpop.f32.mrb[0].mxu0
    %4548 = vdwg.mxu0
    %v4549 = vld [vmem:[%s9] sm:$0x1]
    %v4550 = vld [vmem:[%s10] sm:$0x1]
    %v4551 = vadd.f32 %v4487, %v4490
    %v4552 = vadd.f32 %v4551, %v4495
    %v4553 = vadd.f32 %v4552, %v4498
    %v4554 = vadd.f32 %v4553, %v4503
    %v4555 = vadd.f32 %v4554, %v4506
    %v4556 = vadd.f32 %v4555, %v4511
    %v4557 = vadd.f32 %v4556, %v4514
    %v4558 = vadd.f32 %v4557, %v4519
    %v4559 = vadd.f32 %v4558, %v4522
    %v4560 = vadd.f32 %v4559, %v4527
    %v4561 = vadd.f32 %v4560, %v4530
    %v4562 = vadd.f32 %v4561, %v4535
    %v4563 = vadd.f32 %v4562, %v4538
    %v4564 = vadd.f32 %v4563, %v4543
    %v4565 = vadd.f32 %v4564, %v4546
    %v4566 = vrot.slane %v4565, 4
    %v4567 = vadd.f32 %v4565, %v4566
    %v4568 = vrot.slane %v4567, 2
    %v4569 = vadd.f32 %v4567, %v4568
    %v4570 = vrot.slane %v4569, 1
    %v4571 = vadd.f32 %v4569, %v4570
    %v4572 = vmul.f32 %v4571, %v3693
    %v4573 = vsub.f32 %v4487, %v4572
    %v4574 = vsub.f32 %v4490, %v4572
    %v4575 = vsub.f32 %v4495, %v4572
    %v4576 = vsub.f32 %v4498, %v4572
    %v4577 = vsub.f32 %v4503, %v4572
    %v4578 = vsub.f32 %v4506, %v4572
    %v4579 = vsub.f32 %v4511, %v4572
    %v4580 = vsub.f32 %v4514, %v4572
    %v4581 = vsub.f32 %v4519, %v4572
    %v4582 = vsub.f32 %v4522, %v4572
    %v4583 = vsub.f32 %v4527, %v4572
    %v4584 = vsub.f32 %v4530, %v4572
    %v4585 = vsub.f32 %v4535, %v4572
    %v4586 = vsub.f32 %v4538, %v4572
    %v4587 = vsub.f32 %v4543, %v4572
    %v4588 = vsub.f32 %v4546, %v4572
    %v4589 = vmul.f32 %v4573, %v4573
    %v4590 = vmul.f32 %v4574, %v4574
    %v4591 = vmul.f32 %v4575, %v4575
    %v4592 = vmul.f32 %v4576, %v4576
    %v4593 = vmul.f32 %v4577, %v4577
    %v4594 = vmul.f32 %v4578, %v4578
    %v4595 = vmul.f32 %v4579, %v4579
    %v4596 = vmul.f32 %v4580, %v4580
    %v4597 = vmul.f32 %v4581, %v4581
    %v4598 = vmul.f32 %v4582, %v4582
    %v4599 = vmul.f32 %v4583, %v4583
    %v4600 = vmul.f32 %v4584, %v4584
    %v4601 = vmul.f32 %v4585, %v4585
    %v4602 = vmul.f32 %v4586, %v4586
    %v4603 = vmul.f32 %v4587, %v4587
    %v4604 = vmul.f32 %v4588, %v4588
    %v4605 = vadd.f32 %v4589, %v4590
    %v4606 = vadd.f32 %v4605, %v4591
    %v4607 = vadd.f32 %v4606, %v4592
    %v4608 = vadd.f32 %v4607, %v4593
    %v4609 = vadd.f32 %v4608, %v4594
    %v4610 = vadd.f32 %v4609, %v4595
    %v4611 = vadd.f32 %v4610, %v4596
    %v4612 = vadd.f32 %v4611, %v4597
    %v4613 = vadd.f32 %v4612, %v4598
    %v4614 = vadd.f32 %v4613, %v4599
    %v4615 = vadd.f32 %v4614, %v4600
    %v4616 = vadd.f32 %v4615, %v4601
    %v4617 = vadd.f32 %v4616, %v4602
    %v4618 = vadd.f32 %v4617, %v4603
    %v4619 = vadd.f32 %v4618, %v4604
    %v4620 = vrot.slane %v4619, 4
    %v4621 = vadd.f32 %v4619, %v4620
    %v4622 = vrot.slane %v4621, 2
    %v4623 = vadd.f32 %v4621, %v4622
    %v4624 = vrot.slane %v4623, 1
    %v4625 = vadd.f32 %v4623, %v4624
    %v4626 = vmul.f32 %v4625, %v3693
    %v4627 = vadd.f32 %v4626, 1e-05
    %v4628 = vrsqrt.pop %v4627
    %v4629 = vmul.f32 %v4573, %v4628
    %v4630 = vmul.f32 %v4574, %v4628
    %v4631 = vmul.f32 %v4575, %v4628
    %v4632 = vmul.f32 %v4576, %v4628
    %v4633 = vmul.f32 %v4577, %v4628
    %v4634 = vmul.f32 %v4578, %v4628
    %v4635 = vmul.f32 %v4579, %v4628
    %v4636 = vmul.f32 %v4580, %v4628
    %v4637 = vmul.f32 %v4581, %v4628
    %v4638 = vmul.f32 %v4582, %v4628
    %v4639 = vmul.f32 %v4583, %v4628
    %v4640 = vmul.f32 %v4584, %v4628
    %v4641 = vmul.f32 %v4585, %v4628
    %v4642 = vmul.f32 %v4586, %v4628
    %v4643 = vmul.f32 %v4587, %v4628
    %v4644 = vmul.f32 %v4588, %v4628
    %v4646 = vlaneseq
    %v4647 = vshrl.u32 %v4646, 7
    %v4648 = vsub.s32 0, %v4647
    %v4649 = vrot.slane %v4549, %v4648
    %v4651 = vmul.f32 %v4629, %v4649
    %v4652 = vmul.f32 %v4630, %v4649
    %v4653 = vmul.f32 %v4631, %v4649
    %v4654 = vmul.f32 %v4632, %v4649
    %v4655 = vmul.f32 %v4633, %v4649
    %v4656 = vmul.f32 %v4634, %v4649
    %v4657 = vmul.f32 %v4635, %v4649
    %v4658 = vmul.f32 %v4636, %v4649
    %v4659 = vmul.f32 %v4637, %v4649
    %v4660 = vmul.f32 %v4638, %v4649
    %v4661 = vmul.f32 %v4639, %v4649
    %v4662 = vmul.f32 %v4640, %v4649
    %v4663 = vmul.f32 %v4641, %v4649
    %v4664 = vmul.f32 %v4642, %v4649
    %v4665 = vmul.f32 %v4643, %v4649
    %v4666 = vmul.f32 %v4644, %v4649
    %v4668 = vlaneseq
    %v4669 = vshrl.u32 %v4668, 7
    %v4670 = vsub.s32 0, %v4669
    %v4671 = vrot.slane %v4550, %v4670
    %v4673 = vadd.f32 %v4651, %v4671
    %v4674 = vadd.f32 %v4652, %v4671
    %v4675 = vadd.f32 %v4653, %v4671
    %v4676 = vadd.f32 %v4654, %v4671
    %v4677 = vadd.f32 %v4655, %v4671
    %v4678 = vadd.f32 %v4656, %v4671
    %v4679 = vadd.f32 %v4657, %v4671
    %v4680 = vadd.f32 %v4658, %v4671
    %v4681 = vadd.f32 %v4659, %v4671
    %v4682 = vadd.f32 %v4660, %v4671
    %v4683 = vadd.f32 %v4661, %v4671
    %v4684 = vadd.f32 %v4662, %v4671
    %v4685 = vadd.f32 %v4663, %v4671
    %v4686 = vadd.f32 %v4664, %v4671
    %v4687 = vadd.f32 %v4665, %v4671
    %v4688 = vadd.f32 %v4666, %v4671
    %v4689 = vadd.f32 %v4323, %v4673
    %v4690 = vadd.f32 %v4324, %v4674
    %v4691 = vadd.f32 %v4325, %v4675
    %v4692 = vadd.f32 %v4326, %v4676
    %v4693 = vadd.f32 %v4327, %v4677
    %v4694 = vadd.f32 %v4328, %v4678
    %v4695 = vadd.f32 %v4329, %v4679
    %v4696 = vadd.f32 %v4330, %v4680
    %v4697 = vadd.f32 %v4331, %v4681
    %v4698 = vadd.f32 %v4332, %v4682
    %v4699 = vadd.f32 %v4333, %v4683
    %v4700 = vadd.f32 %v4334, %v4684
    %v4701 = vadd.f32 %v4335, %v4685
    %v4702 = vadd.f32 %v4336, %v4686
    %v4703 = vadd.f32 %v4337, %v4687
    %v4704 = vadd.f32 %v4338, %v4688
    %v4705 = vmax.f32 %v4689, 0.0
    %v4706 = vmax.f32 %v4690, 0.0
    %v4707 = vmax.f32 %v4691, 0.0
    %v4708 = vmax.f32 %v4692, 0.0
    %v4709 = vmax.f32 %v4693, 0.0
    %v4710 = vmax.f32 %v4694, 0.0
    %v4711 = vmax.f32 %v4695, 0.0
    %v4712 = vmax.f32 %v4696, 0.0
    %v4713 = vmax.f32 %v4697, 0.0
    %v4714 = vmax.f32 %v4698, 0.0
    %v4715 = vmax.f32 %v4699, 0.0
    %v4716 = vmax.f32 %v4700, 0.0
    %v4717 = vmax.f32 %v4701, 0.0
    %v4718 = vmax.f32 %v4702, 0.0
    %v4719 = vmax.f32 %v4703, 0.0
    %v4720 = vmax.f32 %v4704, 0.0
    %4721 = vst [vmem:[#allocation2] sm:$0xff] %v4705
    %4722 = vst [vmem:[#allocation2 + $0x8] sm:$0xff] %v4706
    %4723 = vst [vmem:[#allocation2 + $0x10] sm:$0xff] %v4707
    %4724 = vst [vmem:[#allocation2 + $0x18] sm:$0xff] %v4708
    %4725 = vst [vmem:[#allocation2 + $0x20] sm:$0xff] %v4709
    %4726 = vst [vmem:[#allocation2 + $0x28] sm:$0xff] %v4710
    %4727 = vst [vmem:[#allocation2 + $0x30] sm:$0xff] %v4711
    %4728 = vst [vmem:[#allocation2 + $0x38] sm:$0xff] %v4712
    %4729 = vst [vmem:[#allocation2 + $0x40] sm:$0xff] %v4713
    %4730 = vst [vmem:[#allocation2 + $0x48] sm:$0xff] %v4714
    %4731 = vst [vmem:[#allocation2 + $0x50] sm:$0xff] %v4715
    %4732 = vst [vmem:[#allocation2 + $0x58] sm:$0xff] %v4716
    %4733 = vst [vmem:[#allocation2 + $0x60] sm:$0xff] %v4717
    %4734 = vst [vmem:[#allocation2 + $0x68] sm:$0xff] %v4718
    %4735 = vst [vmem:[#allocation2 + $0x70] sm:$0xff] %v4719
    %4736 = vst [vmem:[#allocation2 + $0x78] sm:$0xff] %v4720
    // Predicated region
    $region46: #{_lambda_.3} parent=1 // pred_check
      _
    $region47: #{_lambda_.3} parent=1 // pred_check_branch
      %4738 = sbr.rel (0) target = $region49
    $region48: #{_lambda_.3} parent=1 // pred_region
      %s4740 = ssub.s32 2048, 2048
      %4741 = vsyncadd [#allocation3], %s4740
      %s4742 = sshll.u32 [#allocation2], 4
      %s4743 = int_to_ptr.vmem [resolvable:$true] %s4742
      %4748 = dma.vmem_to_hbm [thread:$0]  %s4743, 2048, %s11, [#allocation3], 128, 128, 8
    $region49: #{_lambda_.3} parent=1 // pred_fallthru
      _
    // Predicated region
    $region50: #{_lambda_.3} parent=1 // pred_check
      _
    $region51: #{_lambda_.3} parent=1 // pred_check_branch
      %4750 = sbr.rel (0) target = $region53
    $region52: #{_lambda_.3} parent=1 // pred_region
      %4751 = dma.done [#allocation3], 2048
    $region53: #{_lambda_.3} parent=1 // pred_fallthru
      _
    %4752 = vsyncpa [#allocation3], 1

</llo_original>
